<compile_context>
chip_gen: v7x
topology: tpu7x:2x2x1
jax: 0.10.0
libtpu: 0.0.40
codegen_flags: <defaults>
</compile_context>

<pallas_src>
import jax
import jax.numpy as jnp
from jax.experimental import pallas as pl
from jax.experimental.pallas import tpu as pltpu


_COMPILER_PARAMS = pltpu.CompilerParams(
    dimension_semantics=("parallel",),      # batch blocks are independent
    vmem_limit_bytes=32 * 1024 * 1024,      # explicit scoped-VMEM with headroom
)


def _pick_batch_block(n, c, hw, budget_bytes=2 * 1024 * 1024):
    """Largest batch block Nb dividing n whose (9C, HW) im2col slab fits the budget."""
    per_elem = 9 * c * hw * 4  # f32 bytes of the biggest per-batch-element buffer
    cap = max(1, budget_bytes // per_elem)
    nb = 1
    for d in range(1, min(n, cap) + 1):
        if n % d == 0:
            nb = d
    return nb


# ---------------------------------------------------------------------------
# Kernel 1: DualConvPath #1 (two 3x3 convs + bias, ReLU, sum) + channel mean/max
# ---------------------------------------------------------------------------
def _dual_conv_pool_kernel(xcol_ref, w1_ref, b1_ref, w2_ref, b2_ref,
                           y_ref, pool_ref):
    nb = xcol_ref.shape[0]
    for n in range(nb):  # static unrolled loop over the batch block
        xc = xcol_ref[n]                                            # (9C, HW)
        p1 = jnp.dot(w1_ref[...], xc,
                     preferred_element_type=jnp.float32) + b1_ref[...]
        p2 = jnp.dot(w2_ref[...], xc,
                     preferred_element_type=jnp.float32) + b2_ref[...]
        y_ref[n] = jnp.maximum(p1, 0.0) + jnp.maximum(p2, 0.0)      # (C, HW)
    # Channel-wise mean / max (sublane reductions) feeding the spatial attention.
    y = y_ref[...]                                                  # (nb, C, HW)
    avg = jnp.mean(y, axis=1, keepdims=True)                        # (nb, 1, HW)
    mx = jnp.max(y, axis=1, keepdims=True)                          # (nb, 1, HW)
    row = jax.lax.broadcasted_iota(jnp.int32, pool_ref.shape, 1)
    pool_ref[...] = jnp.where(row == 0, avg, mx)                    # row0=avg, row1=max


# ---------------------------------------------------------------------------
# Kernel 2: SpatialAttention — 7x7 conv over [avg, max] map + sigmoid + modulate
# ---------------------------------------------------------------------------
def _spatial_modulate_kernel(y_ref, pcol_ref, wsa_ref, o_ref):
    # y: (nb, C, HW); pcol: (nb, 2*49, HW) im2col of the pooled map; wsa: (98, 1).
    # The 7x7 conv is a per-pixel dot with the 98 rows: VPU broadcast-multiply +
    # sublane reduce (avoids a 1-row MXU matmul on the critical path).
    pre = jnp.sum(wsa_ref[...] * pcol_ref[...], axis=1, keepdims=True)  # (nb,1,HW)
    o_ref[...] = y_ref[...] * jax.nn.sigmoid(pre)


# ---------------------------------------------------------------------------
# Kernel 3: DualConvPath #2 + ChannelAttention (GAP + 2 tiny FCs) + residual add
# ---------------------------------------------------------------------------
def _dual_conv_ca_res_kernel(xcol_ref, w1_ref, b1_ref, w2_ref, b2_ref,
                             fc1t_ref, fc2_ref, id_ref, o_ref):
    nb = xcol_ref.shape[0]
    for n in range(nb):
        xc = xcol_ref[n]                                            # (9C, HW)
        p1 = jnp.dot(w1_ref[...], xc,
                     preferred_element_type=jnp.float32) + b1_ref[...]
        p2 = jnp.dot(w2_ref[...], xc,
                     preferred_element_type=jnp.float32) + b2_ref[...]
        y = jnp.maximum(p1, 0.0) + jnp.maximum(p2, 0.0)             # (C, HW)
        # Channel attention with C kept on the sublane axis throughout.
        gap = jnp.mean(y, axis=1, keepdims=True)                    # (C, 1) lane-reduce
        h = jnp.maximum(
            jnp.sum(fc1t_ref[...] * gap, axis=0, keepdims=True), 0.0)   # (1, Cr)
        attn = jax.nn.sigmoid(
            jnp.sum(fc2_ref[...] * h, axis=1, keepdims=True))           # (C, 1)
        # Residual fused in; attn broadcast over HW is a pure lane broadcast.
        o_ref[n] = id_ref[n] + y * attn


# ---------------------------------------------------------------------------
# pallas_call wrappers
# ---------------------------------------------------------------------------
def _dual_conv_pool(xcol, w1f, b1, w2f, b2, nb):
    n, k9c, hw = xcol.shape
    c = w1f.shape[0]
    wspec = pl.BlockSpec((c, k9c), lambda i: (0, 0))   # constant index: no re-DMA
    bspec = pl.BlockSpec((c, 1), lambda i: (0, 0))
    return pl.pallas_call(
        _dual_conv_pool_kernel,
        out_shape=(jax.ShapeDtypeStruct((n, c, hw), jnp.float32),
                   jax.ShapeDtypeStruct((n, 2, hw), jnp.float32)),
        grid_spec=pltpu.PrefetchScalarGridSpec(
            num_scalar_prefetch=0,
            grid=(n // nb,),
            in_specs=[
                pl.BlockSpec((nb, k9c, hw), lambda i: (i, 0, 0)),
                wspec, bspec, wspec, bspec,
            ],
            out_specs=(
                pl.BlockSpec((nb, c, hw), lambda i: (i, 0, 0)),
                pl.BlockSpec((nb, 2, hw), lambda i: (i, 0, 0)),
            ),
        ),
        compiler_params=_COMPILER_PARAMS,
    )(xcol, w1f, b1, w2f, b2)


def _spatial_modulate(y, pcol, wsa_col, nb):
    n, c, hw = y.shape
    t = pcol.shape[1]
    return pl.pallas_call(
        _spatial_modulate_kernel,
        out_shape=jax.ShapeDtypeStruct((n, c, hw), jnp.float32),
        grid_spec=pltpu.PrefetchScalarGridSpec(
            num_scalar_prefetch=0,
            grid=(n // nb,),
            in_specs=[
                pl.BlockSpec((nb, c, hw), lambda i: (i, 0, 0)),
                pl.BlockSpec((nb, t, hw), lambda i: (i, 0, 0)),
                pl.BlockSpec((t, 1), lambda i: (0, 0)),
            ],
            out_specs=pl.BlockSpec((nb, c, hw), lambda i: (i, 0, 0)),
        ),
        compiler_params=_COMPILER_PARAMS,
    )(y, pcol, wsa_col)


def _dual_conv_ca_res(xcol, w1f, b1, w2f, b2, fc1t, fc2, identity, nb):
    n, k9c, hw = xcol.shape
    c = w1f.shape[0]
    cr = fc1t.shape[1]
    wspec = pl.BlockSpec((c, k9c), lambda i: (0, 0))
    bspec = pl.BlockSpec((c, 1), lambda i: (0, 0))
    fcspec = pl.BlockSpec((c, cr), lambda i: (0, 0))
    xspec = pl.BlockSpec((nb, c, hw), lambda i: (i, 0, 0))
    return pl.pallas_call(
        _dual_conv_ca_res_kernel,
        out_shape=jax.ShapeDtypeStruct((n, c, hw), jnp.float32),
        grid_spec=pltpu.PrefetchScalarGridSpec(
            num_scalar_prefetch=0,
            grid=(n // nb,),
            in_specs=[
                pl.BlockSpec((nb, k9c, hw), lambda i: (i, 0, 0)),
                wspec, bspec, wspec, bspec, fcspec, fcspec, xspec,
            ],
            out_specs=xspec,
        ),
        compiler_params=_COMPILER_PARAMS,
    )(xcol, w1f, b1, w2f, b2, fc1t, fc2, identity)


# ---------------------------------------------------------------------------
# Wrapper-side layout plumbing + full forward
# ---------------------------------------------------------------------------
def _im2col(x_nchw, k):
    """Zero-pad 'same' and extract k*k patches -> (N, k*k*C, H*W); row = tap*C + ci."""
    n, c, h, w = x_nchw.shape
    pad = k // 2
    xp = jnp.pad(x_nchw, ((0, 0), (0, 0), (pad, pad), (pad, pad)))
    cols = [xp[:, :, ky:ky + h, kx:kx + w] for ky in range(k) for kx in range(k)]
    return jnp.stack(cols, axis=1).reshape(n, k * k * c, h * w)


def _flatten_conv_weight(w):
    """(Co, Ci, k, k) -> (Co, k*k*Ci) matching the im2col row order tap*Ci + ci."""
    co, ci, kh, kw = w.shape
    return jnp.transpose(w, (0, 2, 3, 1)).reshape(co, kh * kw * ci)


@jax.jit
def dual_path_attention_block(x, w_a1, b_a1, w_a2, b_a2, w_sa,
                              w_b1, b_b1, w_b2, b_b2, w_fc1, w_fc2):
    n, c, h, w = x.shape
    hw = h * w
    ksa = w_sa.shape[2]
    nb = _pick_batch_block(n, c, hw)

    wa1f, wa2f, wb1f, wb2f = map(_flatten_conv_weight, (w_a1, w_a2, w_b1, w_b2))
    ba1c, ba2c, bb1c, bb2c = (b.reshape(c, 1) for b in (b_a1, b_a2, b_b1, b_b2))
    # Spatial-attention 7x7 weight flattened to a (2*k*k, 1) column, row = tap*2 + ch.
    wsa_col = jnp.transpose(w_sa, (2, 3, 1, 0)).reshape(ksa * ksa * 2, 1)
    fc1t = w_fc1.T            # (C, Cr): fc1 weight pre-transposed, C on sublanes
    fc2 = w_fc2               # (C, Cr)

    identity = x.reshape(n, c, hw)

    # TODO(synk): the kxk patch extraction (im2col) between stages is plain-JAX
    # pad+slice layout plumbing; an in-kernel gather over shifted VMEM windows
    # would avoid the k*k HBM expansion of the conv inputs.
    xcol1 = _im2col(x, 3)
    y1, pool1 = _dual_conv_pool(xcol1, wa1f, ba1c, wa2f, ba2c, nb)
    pcol = _im2col(pool1.reshape(n, 2, h, w), ksa)
    y2 = _spatial_modulate(y1, pcol, wsa_col, nb)
    xcol2 = _im2col(y2.reshape(n, c, h, w), 3)
    out = _dual_conv_ca_res(xcol2, wb1f, bb1c, wb2f, bb2c, fc1t, fc2, identity, nb)
    return out.reshape(n, c, h, w)


# ---------------------------------------------------------------------------
# Pure-JAX reference (for correctness check)
# ---------------------------------------------------------------------------
def _conv2d_ref(x, w, b, pad):
    out = jax.lax.conv_general_dilated(
        x, w, window_strides=(1, 1), padding=[(pad, pad), (pad, pad)],
        dimension_numbers=("NCHW", "OIHW", "NCHW"),
        precision=jax.lax.Precision.HIGHEST)
    if b is not None:
        out = out + b[None, :, None, None]
    return out


def _reference(x, w_a1, b_a1, w_a2, b_a2, w_sa, w_b1, b_b1, w_b2, b_b2,
               w_fc1, w_fc2):
    def dual(xx, w1, b1, w2, b2):
        return (jax.nn.relu(_conv2d_ref(xx, w1, b1, 1))
                + jax.nn.relu(_conv2d_ref(xx, w2, b2, 1)))

    identity = x
    y = dual(x, w_a1, b_a1, w_a2, b_a2)
    avg = jnp.mean(y, axis=1, keepdims=True)
    mx = jnp.max(y, axis=1, keepdims=True)
    attn_s = jax.nn.sigmoid(_conv2d_ref(jnp.concatenate([avg, mx], axis=1),
                                        w_sa, None, w_sa.shape[2] // 2))
    y = y * attn_s
    y = dual(y, w_b1, b_b1, w_b2, b_b2)
    gap = jnp.mean(y, axis=(2, 3))
    hmid = jax.nn.relu(jnp.dot(gap, w_fc1.T, precision=jax.lax.Precision.HIGHEST))
    attn_c = jax.nn.sigmoid(jnp.dot(hmid, w_fc2.T,
                                    precision=jax.lax.Precision.HIGHEST))
    return identity + y * attn_c[:, :, None, None]


if __name__ == "__main__":
    N, C, H, W = 2, 32, 16, 16
    reduction = 16
    ksize = 7
    Cr = max(1, C // reduction)   # = 2

    key = jax.random.PRNGKey(0)
    ks = jax.random.split(key, 12)

    def _uinit(k, shape, fan_in):
        bound = 1.0 / (fan_in ** 0.5)
        return jax.random.uniform(k, shape, jnp.float32, -bound, bound)

    x = jax.random.normal(ks[0], (N, C, H, W), dtype=jnp.float32)

    w_a1 = _uinit(ks[1], (C, C, 3, 3), 9 * C); b_a1 = _uinit(ks[2], (C,), 9 * C)
    w_a2 = _uinit(ks[3], (C, C, 3, 3), 9 * C); b_a2 = _uinit(ks[4], (C,), 9 * C)
    w_sa = _uinit(ks[5], (1, 2, ksize, ksize), 2 * ksize * ksize)
    w_b1 = _uinit(ks[6], (C, C, 3, 3), 9 * C); b_b1 = _uinit(ks[7], (C,), 9 * C)
    w_b2 = _uinit(ks[8], (C, C, 3, 3), 9 * C); b_b2 = _uinit(ks[9], (C,), 9 * C)
    w_fc1 = _uinit(ks[10], (Cr, C), C)
    w_fc2 = _uinit(ks[11], (C, Cr), Cr)

    out = dual_path_attention_block(x, w_a1, b_a1, w_a2, b_a2, w_sa,
                                    w_b1, b_b1, w_b2, b_b2, w_fc1, w_fc2)
    out = jax.block_until_ready(out)

    ref = _reference(x, w_a1, b_a1, w_a2, b_a2, w_sa,
                     w_b1, b_b1, w_b2, b_b2, w_fc1, w_fc2)
    assert out.shape == (N, C, H, W)
    # Tolerance leaves headroom for MXU f32 rounding vs XLA HIGHEST-precision convs.
    max_err = float(jnp.max(jnp.abs(out - ref)))
    assert jnp.allclose(out, ref, atol=1e-2, rtol=1e-2), (
        f"mismatch vs reference, max abs err = {max_err}")
    print("KERNEL_OK")
</pallas_src>

<mosaic_0001>
module attributes {stable_mosaic.version = 11 : i64} {
  func.func @_dual_conv_pool_kernel(%arg0: i32, %arg1: memref<2x288x256xf32, #tpu.memory_space<vmem>>, %arg2: memref<32x288xf32, #tpu.memory_space<vmem>>, %arg3: memref<32x1xf32, #tpu.memory_space<vmem>>, %arg4: memref<32x288xf32, #tpu.memory_space<vmem>>, %arg5: memref<32x1xf32, #tpu.memory_space<vmem>>, %arg6: memref<2x32x256xf32, #tpu.memory_space<vmem>>, %arg7: memref<2x2x256xf32, #tpu.memory_space<vmem>>) attributes {dimension_semantics = [#tpu.dimension_semantics<parallel>], iteration_bounds = array<i64: 1>, scalar_prefetch = 0 : i64, scratch_operands = 0 : i64, tpu.core_type = #tpu.core_type<tc>, window_params = [{transform_indices = @transform_0, window_bounds = array<i64: 2, 288, 256>}, {pipeline_mode = #tpu.pipeline_mode<synchronous>, transform_indices = @transform_1, window_bounds = array<i64: 32, 288>}, {pipeline_mode = #tpu.pipeline_mode<synchronous>, transform_indices = @transform_2, window_bounds = array<i64: 32, 1>}, {pipeline_mode = #tpu.pipeline_mode<synchronous>, transform_indices = @transform_3, window_bounds = array<i64: 32, 288>}, {pipeline_mode = #tpu.pipeline_mode<synchronous>, transform_indices = @transform_4, window_bounds = array<i64: 32, 1>}, {transform_indices = @transform_5, window_bounds = array<i64: 2, 32, 256>}, {transform_indices = @transform_6, window_bounds = array<i64: 2, 2, 256>}]} {
    %c0 = arith.constant 0 : index
    %c0_0 = arith.constant 0 : index
    %c0_1 = arith.constant 0 : index
    %0 = vector.load %arg1[%c0, %c0_0, %c0_1] : memref<2x288x256xf32, #tpu.memory_space<vmem>>, vector<1x288x256xf32>
    %1 = vector.shape_cast %0 : vector<1x288x256xf32> to vector<288x256xf32>
    %c0_2 = arith.constant 0 : index
    %c0_3 = arith.constant 0 : index
    %2 = vector.load %arg2[%c0_2, %c0_3] : memref<32x288xf32, #tpu.memory_space<vmem>>, vector<32x288xf32>
    %cst = arith.constant dense<0.000000e+00> : vector<32x256xf32>
    %3 = tpu.matmul %2, %1, %cst {dimension_numbers = #tpu.dot_dimension_numbers<[1], [0], [0], [1], [0, 0, 1, 1], [], []>} : vector<32x288xf32>, vector<288x256xf32>, vector<32x256xf32> -> vector<32x256xf32>
    %c0_4 = arith.constant 0 : index
    %c0_5 = arith.constant 0 : index
    %4 = vector.load %arg3[%c0_4, %c0_5] : memref<32x1xf32, #tpu.memory_space<vmem>>, vector<32x1xf32>
    %5 = vector.broadcast %4 : vector<32x1xf32> to vector<32x256xf32>
    %6 = arith.addf %3, %5 : vector<32x256xf32>
    %c0_6 = arith.constant 0 : index
    %c0_7 = arith.constant 0 : index
    %7 = vector.load %arg4[%c0_6, %c0_7] : memref<32x288xf32, #tpu.memory_space<vmem>>, vector<32x288xf32>
    %cst_8 = arith.constant dense<0.000000e+00> : vector<32x256xf32>
    %8 = tpu.matmul %7, %1, %cst_8 {dimension_numbers = #tpu.dot_dimension_numbers<[1], [0], [0], [1], [0, 0, 1, 1], [], []>} : vector<32x288xf32>, vector<288x256xf32>, vector<32x256xf32> -> vector<32x256xf32>
    %c0_9 = arith.constant 0 : index
    %c0_10 = arith.constant 0 : index
    %9 = vector.load %arg5[%c0_9, %c0_10] : memref<32x1xf32, #tpu.memory_space<vmem>>, vector<32x1xf32>
    %10 = vector.broadcast %9 : vector<32x1xf32> to vector<32x256xf32>
    %11 = arith.addf %8, %10 : vector<32x256xf32>
    %cst_11 = arith.constant 0.000000e+00 : f32
    %12 = vector.broadcast %cst_11 : f32 to vector<32x256xf32>
    %13 = arith.maximumf %6, %12 : vector<32x256xf32>
    %cst_12 = arith.constant 0.000000e+00 : f32
    %14 = vector.broadcast %cst_12 : f32 to vector<32x256xf32>
    %15 = arith.maximumf %11, %14 : vector<32x256xf32>
    %16 = arith.addf %13, %15 : vector<32x256xf32>
    %c0_13 = arith.constant 0 : index
    %c0_14 = arith.constant 0 : index
    %c0_15 = arith.constant 0 : index
    %17 = vector.load %arg6[%c0_13, %c0_14, %c0_15] : memref<2x32x256xf32, #tpu.memory_space<vmem>>, vector<1x32x256xf32>
    %18 = vector.shape_cast %17 : vector<1x32x256xf32> to vector<32x256xf32>
    %19 = vector.shape_cast %16 : vector<32x256xf32> to vector<1x32x256xf32>
    tpu.vector_store %arg6[%c0_13, %c0_14, %c0_15], %19 {strides = array<i32>} : memref<2x32x256xf32, #tpu.memory_space<vmem>>, vector<1x32x256xf32>,
    %c1 = arith.constant 1 : index
    %c0_16 = arith.constant 0 : index
    %c0_17 = arith.constant 0 : index
    %20 = vector.load %arg1[%c1, %c0_16, %c0_17] : memref<2x288x256xf32, #tpu.memory_space<vmem>>, vector<1x288x256xf32>
    %21 = vector.shape_cast %20 : vector<1x288x256xf32> to vector<288x256xf32>
    %c0_18 = arith.constant 0 : index
    %c0_19 = arith.constant 0 : index
    %22 = vector.load %arg2[%c0_18, %c0_19] : memref<32x288xf32, #tpu.memory_space<vmem>>, vector<32x288xf32>
    %cst_20 = arith.constant dense<0.000000e+00> : vector<32x256xf32>
    %23 = tpu.matmul %22, %21, %cst_20 {dimension_numbers = #tpu.dot_dimension_numbers<[1], [0], [0], [1], [0, 0, 1, 1], [], []>} : vector<32x288xf32>, vector<288x256xf32>, vector<32x256xf32> -> vector<32x256xf32>
    %c0_21 = arith.constant 0 : index
    %c0_22 = arith.constant 0 : index
    %24 = vector.load %arg3[%c0_21, %c0_22] : memref<32x1xf32, #tpu.memory_space<vmem>>, vector<32x1xf32>
    %25 = vector.broadcast %24 : vector<32x1xf32> to vector<32x256xf32>
    %26 = arith.addf %23, %25 : vector<32x256xf32>
    %c0_23 = arith.constant 0 : index
    %c0_24 = arith.constant 0 : index
    %27 = vector.load %arg4[%c0_23, %c0_24] : memref<32x288xf32, #tpu.memory_space<vmem>>, vector<32x288xf32>
    %cst_25 = arith.constant dense<0.000000e+00> : vector<32x256xf32>
    %28 = tpu.matmul %27, %21, %cst_25 {dimension_numbers = #tpu.dot_dimension_numbers<[1], [0], [0], [1], [0, 0, 1, 1], [], []>} : vector<32x288xf32>, vector<288x256xf32>, vector<32x256xf32> -> vector<32x256xf32>
    %c0_26 = arith.constant 0 : index
    %c0_27 = arith.constant 0 : index
    %29 = vector.load %arg5[%c0_26, %c0_27] : memref<32x1xf32, #tpu.memory_space<vmem>>, vector<32x1xf32>
    %30 = vector.broadcast %29 : vector<32x1xf32> to vector<32x256xf32>
    %31 = arith.addf %28, %30 : vector<32x256xf32>
    %cst_28 = arith.constant 0.000000e+00 : f32
    %32 = vector.broadcast %cst_28 : f32 to vector<32x256xf32>
    %33 = arith.maximumf %26, %32 : vector<32x256xf32>
    %cst_29 = arith.constant 0.000000e+00 : f32
    %34 = vector.broadcast %cst_29 : f32 to vector<32x256xf32>
    %35 = arith.maximumf %31, %34 : vector<32x256xf32>
    %36 = arith.addf %33, %35 : vector<32x256xf32>
    %c1_30 = arith.constant 1 : index
    %c0_31 = arith.constant 0 : index
    %c0_32 = arith.constant 0 : index
    %37 = vector.load %arg6[%c1_30, %c0_31, %c0_32] : memref<2x32x256xf32, #tpu.memory_space<vmem>>, vector<1x32x256xf32>
    %38 = vector.shape_cast %37 : vector<1x32x256xf32> to vector<32x256xf32>
    %39 = vector.shape_cast %36 : vector<32x256xf32> to vector<1x32x256xf32>
    tpu.vector_store %arg6[%c1_30, %c0_31, %c0_32], %39 {strides = array<i32>} : memref<2x32x256xf32, #tpu.memory_space<vmem>>, vector<1x32x256xf32>,
    %c0_33 = arith.constant 0 : index
    %c0_34 = arith.constant 0 : index
    %c0_35 = arith.constant 0 : index
    %40 = vector.load %arg6[%c0_33, %c0_34, %c0_35] : memref<2x32x256xf32, #tpu.memory_space<vmem>>, vector<2x32x256xf32>
    %cst_36 = arith.constant dense<0.000000e+00> : vector<2x256xf32>
    %41 = vector.multi_reduction <add>, %40, %cst_36 [1] : vector<2x32x256xf32> to vector<2x256xf32>
    %42 = vector.shape_cast %41 : vector<2x256xf32> to vector<2x1x256xf32>
    %cst_37 = arith.constant 3.200000e+01 : f32
    %43 = vector.broadcast %cst_37 : f32 to vector<2x1x256xf32>
    %44 = arith.divf %42, %43 : vector<2x1x256xf32>
    %cst_38 = arith.constant dense<0xFF800000> : vector<2x256xf32>
    %45 = vector.multi_reduction <maximumf>, %40, %cst_38 [1] : vector<2x32x256xf32> to vector<2x256xf32>
    %46 = vector.shape_cast %45 : vector<2x256xf32> to vector<2x1x256xf32>
    %47 = tpu.iota {dimensions = array<i32: 1>} : vector<2x2x256xi32>
    %c0_i32 = arith.constant 0 : i32
    %48 = vector.broadcast %c0_i32 : i32 to vector<2x2x256xi32>
    %49 = arith.cmpi eq, %47, %48 : vector<2x2x256xi32>
    %50 = vector.shape_cast %44 : vector<2x1x256xf32> to vector<2x1x256xf32>
    %51 = vector.broadcast %50 : vector<2x1x256xf32> to vector<2x2x256xf32>
    %52 = vector.shape_cast %46 : vector<2x1x256xf32> to vector<2x1x256xf32>
    %53 = vector.broadcast %52 : vector<2x1x256xf32> to vector<2x2x256xf32>
    %54 = arith.select %49, %51, %53 : vector<2x2x256xi1>, vector<2x2x256xf32>
    %c0_39 = arith.constant 0 : index
    %c0_40 = arith.constant 0 : index
    %c0_41 = arith.constant 0 : index
    %55 = vector.load %arg7[%c0_39, %c0_40, %c0_41] : memref<2x2x256xf32, #tpu.memory_space<vmem>>, vector<2x2x256xf32>
    tpu.vector_store %arg7[%c0_39, %c0_40, %c0_41], %54 {strides = array<i32>} : memref<2x2x256xf32, #tpu.memory_space<vmem>>, vector<2x2x256xf32>,
    return
  }
  func.func @transform_0(%arg0: i32) -> (i32, i32, i32) {
    %c0_i32 = arith.constant 0 : i32
    %c0_i32_0 = arith.constant 0 : i32
    %c0_i32_1 = arith.constant 0 : i32
    return %arg0, %c0_i32, %c0_i32_0 : i32, i32, i32
  }
  func.func @transform_1(%arg0: i32) -> (i32, i32) {
    %c0_i32 = arith.constant 0 : i32
    %c0_i32_0 = arith.constant 0 : i32
    %c0_i32_1 = arith.constant 0 : i32
    return %c0_i32, %c0_i32_0 : i32, i32
  }
  func.func @transform_2(%arg0: i32) -> (i32, i32) {
    %c0_i32 = arith.constant 0 : i32
    %c0_i32_0 = arith.constant 0 : i32
    %c0_i32_1 = arith.constant 0 : i32
    return %c0_i32, %c0_i32_0 : i32, i32
  }
  func.func @transform_3(%arg0: i32) -> (i32, i32) {
    %c0_i32 = arith.constant 0 : i32
    %c0_i32_0 = arith.constant 0 : i32
    %c0_i32_1 = arith.constant 0 : i32
    return %c0_i32, %c0_i32_0 : i32, i32
  }
  func.func @transform_4(%arg0: i32) -> (i32, i32) {
    %c0_i32 = arith.constant 0 : i32
    %c0_i32_0 = arith.constant 0 : i32
    %c0_i32_1 = arith.constant 0 : i32
    return %c0_i32, %c0_i32_0 : i32, i32
  }
  func.func @transform_5(%arg0: i32) -> (i32, i32, i32) {
    %c0_i32 = arith.constant 0 : i32
    %c0_i32_0 = arith.constant 0 : i32
    %c0_i32_1 = arith.constant 0 : i32
    return %arg0, %c0_i32, %c0_i32_0 : i32, i32, i32
  }
  func.func @transform_6(%arg0: i32) -> (i32, i32, i32) {
    %c0_i32 = arith.constant 0 : i32
    %c0_i32_0 = arith.constant 0 : i32
    %c0_i32_1 = arith.constant 0 : i32
    return %arg0, %c0_i32, %c0_i32_0 : i32, i32, i32
  }
}

module attributes {stable_mosaic.version = 11 : i64} {
  func.func @_spatial_modulate_kernel(%arg0: i32, %arg1: memref<2x32x256xf32, #tpu.memory_space<vmem>>, %arg2: memref<2x98x256xf32, #tpu.memory_space<vmem>>, %arg3: memref<98x1xf32, #tpu.memory_space<vmem>>, %arg4: memref<2x32x256xf32, #tpu.memory_space<vmem>>) attributes {dimension_semantics = [#tpu.dimension_semantics<parallel>], iteration_bounds = array<i64: 1>, scalar_prefetch = 0 : i64, scratch_operands = 0 : i64, tpu.core_type = #tpu.core_type<tc>, window_params = [{transform_indices = @transform_0, window_bounds = array<i64: 2, 32, 256>}, {transform_indices = @transform_1, window_bounds = array<i64: 2, 98, 256>}, {pipeline_mode = #tpu.pipeline_mode<synchronous>, transform_indices = @transform_2, window_bounds = array<i64: 98, 1>}, {transform_indices = @transform_3, window_bounds = array<i64: 2, 32, 256>}]} {
    %c0 = arith.constant 0 : index
    %c0_0 = arith.constant 0 : index
    %0 = vector.load %arg3[%c0, %c0_0] : memref<98x1xf32, #tpu.memory_space<vmem>>, vector<98x1xf32>
    %c0_1 = arith.constant 0 : index
    %c0_2 = arith.constant 0 : index
    %c0_3 = arith.constant 0 : index
    %1 = vector.load %arg2[%c0_1, %c0_2, %c0_3] : memref<2x98x256xf32, #tpu.memory_space<vmem>>, vector<2x98x256xf32>
    %2 = vector.shape_cast %0 : vector<98x1xf32> to vector<1x98x1xf32>
    %3 = vector.broadcast %2 : vector<1x98x1xf32> to vector<2x98x256xf32>
    %4 = arith.mulf %3, %1 : vector<2x98x256xf32>
    %cst = arith.constant dense<0.000000e+00> : vector<2x256xf32>
    %5 = vector.multi_reduction <add>, %4, %cst [1] : vector<2x98x256xf32> to vector<2x256xf32>
    %6 = vector.shape_cast %5 : vector<2x256xf32> to vector<2x1x256xf32>
    %c0_4 = arith.constant 0 : index
    %c0_5 = arith.constant 0 : index
    %c0_6 = arith.constant 0 : index
    %7 = vector.load %arg1[%c0_4, %c0_5, %c0_6] : memref<2x32x256xf32, #tpu.memory_space<vmem>>, vector<2x32x256xf32>
    %8 = arith.negf %6 : vector<2x1x256xf32>
    %9 = math.exp %8 : vector<2x1x256xf32>
    %cst_7 = arith.constant 1.000000e+00 : f32
    %10 = vector.broadcast %cst_7 : f32 to vector<2x1x256xf32>
    %11 = arith.addf %10, %9 : vector<2x1x256xf32>
    %12 = arith.divf %10, %11 : vector<2x1x256xf32>
    %13 = vector.broadcast %12 : vector<2x1x256xf32> to vector<2x32x256xf32>
    %14 = arith.mulf %7, %13 : vector<2x32x256xf32>
    %c0_8 = arith.constant 0 : index
    %c0_9 = arith.constant 0 : index
    %c0_10 = arith.constant 0 : index
    %15 = vector.load %arg4[%c0_8, %c0_9, %c0_10] : memref<2x32x256xf32, #tpu.memory_space<vmem>>, vector<2x32x256xf32>
    tpu.vector_store %arg4[%c0_8, %c0_9, %c0_10], %14 {strides = array<i32>} : memref<2x32x256xf32, #tpu.memory_space<vmem>>, vector<2x32x256xf32>,
    return
  }
  func.func @transform_0(%arg0: i32) -> (i32, i32, i32) {
    %c0_i32 = arith.constant 0 : i32
    %c0_i32_0 = arith.constant 0 : i32
    %c0_i32_1 = arith.constant 0 : i32
    return %arg0, %c0_i32, %c0_i32_0 : i32, i32, i32
  }
  func.func @transform_1(%arg0: i32) -> (i32, i32, i32) {
    %c0_i32 = arith.constant 0 : i32
    %c0_i32_0 = arith.constant 0 : i32
    %c0_i32_1 = arith.constant 0 : i32
    return %arg0, %c0_i32, %c0_i32_0 : i32, i32, i32
  }
  func.func @transform_2(%arg0: i32) -> (i32, i32) {
    %c0_i32 = arith.constant 0 : i32
    %c0_i32_0 = arith.constant 0 : i32
    %c0_i32_1 = arith.constant 0 : i32
    return %c0_i32, %c0_i32_0 : i32, i32
  }
  func.func @transform_3(%arg0: i32) -> (i32, i32, i32) {
    %c0_i32 = arith.constant 0 : i32
    %c0_i32_0 = arith.constant 0 : i32
    %c0_i32_1 = arith.constant 0 : i32
    return %arg0, %c0_i32, %c0_i32_0 : i32, i32, i32
  }
}

module attributes {stable_mosaic.version = 11 : i64} {
  func.func @_dual_conv_ca_res_kernel(%arg0: i32, %arg1: memref<2x288x256xf32, #tpu.memory_space<vmem>>, %arg2: memref<32x288xf32, #tpu.memory_space<vmem>>, %arg3: memref<32x1xf32, #tpu.memory_space<vmem>>, %arg4: memref<32x288xf32, #tpu.memory_space<vmem>>, %arg5: memref<32x1xf32, #tpu.memory_space<vmem>>, %arg6: memref<32x2xf32, #tpu.memory_space<vmem>>, %arg7: memref<32x2xf32, #tpu.memory_space<vmem>>, %arg8: memref<2x32x256xf32, #tpu.memory_space<vmem>>, %arg9: memref<2x32x256xf32, #tpu.memory_space<vmem>>) attributes {dimension_semantics = [#tpu.dimension_semantics<parallel>], iteration_bounds = array<i64: 1>, scalar_prefetch = 0 : i64, scratch_operands = 0 : i64, tpu.core_type = #tpu.core_type<tc>, window_params = [{transform_indices = @transform_0, window_bounds = array<i64: 2, 288, 256>}, {pipeline_mode = #tpu.pipeline_mode<synchronous>, transform_indices = @transform_1, window_bounds = array<i64: 32, 288>}, {pipeline_mode = #tpu.pipeline_mode<synchronous>, transform_indices = @transform_2, window_bounds = array<i64: 32, 1>}, {pipeline_mode = #tpu.pipeline_mode<synchronous>, transform_indices = @transform_3, window_bounds = array<i64: 32, 288>}, {pipeline_mode = #tpu.pipeline_mode<synchronous>, transform_indices = @transform_4, window_bounds = array<i64: 32, 1>}, {pipeline_mode = #tpu.pipeline_mode<synchronous>, transform_indices = @transform_5, window_bounds = array<i64: 32, 2>}, {pipeline_mode = #tpu.pipeline_mode<synchronous>, transform_indices = @transform_6, window_bounds = array<i64: 32, 2>}, {transform_indices = @transform_7, window_bounds = array<i64: 2, 32, 256>}, {transform_indices = @transform_8, window_bounds = array<i64: 2, 32, 256>}]} {
    %c0 = arith.constant 0 : index
    %c0_0 = arith.constant 0 : index
    %c0_1 = arith.constant 0 : index
    %0 = vector.load %arg1[%c0, %c0_0, %c0_1] : memref<2x288x256xf32, #tpu.memory_space<vmem>>, vector<1x288x256xf32>
    %1 = vector.shape_cast %0 : vector<1x288x256xf32> to vector<288x256xf32>
    %c0_2 = arith.constant 0 : index
    %c0_3 = arith.constant 0 : index
    %2 = vector.load %arg2[%c0_2, %c0_3] : memref<32x288xf32, #tpu.memory_space<vmem>>, vector<32x288xf32>
    %cst = arith.constant dense<0.000000e+00> : vector<32x256xf32>
    %3 = tpu.matmul %2, %1, %cst {dimension_numbers = #tpu.dot_dimension_numbers<[1], [0], [0], [1], [0, 0, 1, 1], [], []>} : vector<32x288xf32>, vector<288x256xf32>, vector<32x256xf32> -> vector<32x256xf32>
    %c0_4 = arith.constant 0 : index
    %c0_5 = arith.constant 0 : index
    %4 = vector.load %arg3[%c0_4, %c0_5] : memref<32x1xf32, #tpu.memory_space<vmem>>, vector<32x1xf32>
    %5 = vector.broadcast %4 : vector<32x1xf32> to vector<32x256xf32>
    %6 = arith.addf %3, %5 : vector<32x256xf32>
    %c0_6 = arith.constant 0 : index
    %c0_7 = arith.constant 0 : index
    %7 = vector.load %arg4[%c0_6, %c0_7] : memref<32x288xf32, #tpu.memory_space<vmem>>, vector<32x288xf32>
    %cst_8 = arith.constant dense<0.000000e+00> : vector<32x256xf32>
    %8 = tpu.matmul %7, %1, %cst_8 {dimension_numbers = #tpu.dot_dimension_numbers<[1], [0], [0], [1], [0, 0, 1, 1], [], []>} : vector<32x288xf32>, vector<288x256xf32>, vector<32x256xf32> -> vector<32x256xf32>
    %c0_9 = arith.constant 0 : index
    %c0_10 = arith.constant 0 : index
    %9 = vector.load %arg5[%c0_9, %c0_10] : memref<32x1xf32, #tpu.memory_space<vmem>>, vector<32x1xf32>
    %10 = vector.broadcast %9 : vector<32x1xf32> to vector<32x256xf32>
    %11 = arith.addf %8, %10 : vector<32x256xf32>
    %cst_11 = arith.constant 0.000000e+00 : f32
    %12 = vector.broadcast %cst_11 : f32 to vector<32x256xf32>
    %13 = arith.maximumf %6, %12 : vector<32x256xf32>
    %cst_12 = arith.constant 0.000000e+00 : f32
    %14 = vector.broadcast %cst_12 : f32 to vector<32x256xf32>
    %15 = arith.maximumf %11, %14 : vector<32x256xf32>
    %16 = arith.addf %13, %15 : vector<32x256xf32>
    %cst_13 = arith.constant dense<0.000000e+00> : vector<32xf32>
    %17 = vector.multi_reduction <add>, %16, %cst_13 [1] : vector<32x256xf32> to vector<32xf32>
    %18 = vector.shape_cast %17 : vector<32xf32> to vector<32x1xf32>
    %cst_14 = arith.constant 2.560000e+02 : f32
    %19 = vector.broadcast %cst_14 : f32 to vector<32x1xf32>
    %20 = arith.divf %18, %19 : vector<32x1xf32>
    %c0_15 = arith.constant 0 : index
    %c0_16 = arith.constant 0 : index
    %21 = vector.load %arg6[%c0_15, %c0_16] : memref<32x2xf32, #tpu.memory_space<vmem>>, vector<32x2xf32>
    %22 = vector.broadcast %20 : vector<32x1xf32> to vector<32x2xf32>
    %23 = arith.mulf %21, %22 : vector<32x2xf32>
    %cst_17 = arith.constant dense<0.000000e+00> : vector<2xf32>
    %24 = vector.multi_reduction <add>, %23, %cst_17 [0] : vector<32x2xf32> to vector<2xf32>
    %25 = vector.shape_cast %24 : vector<2xf32> to vector<1x2xf32>
    %cst_18 = arith.constant 0.000000e+00 : f32
    %26 = vector.broadcast %cst_18 : f32 to vector<1x2xf32>
    %27 = arith.maximumf %25, %26 : vector<1x2xf32>
    %c0_19 = arith.constant 0 : index
    %c0_20 = arith.constant 0 : index
    %28 = vector.load %arg7[%c0_19, %c0_20] : memref<32x2xf32, #tpu.memory_space<vmem>>, vector<32x2xf32>
    %29 = vector.broadcast %27 : vector<1x2xf32> to vector<32x2xf32>
    %30 = arith.mulf %28, %29 : vector<32x2xf32>
    %cst_21 = arith.constant dense<0.000000e+00> : vector<32xf32>
    %31 = vector.multi_reduction <add>, %30, %cst_21 [1] : vector<32x2xf32> to vector<32xf32>
    %32 = vector.shape_cast %31 : vector<32xf32> to vector<32x1xf32>
    %33 = arith.negf %32 : vector<32x1xf32>
    %34 = math.exp %33 : vector<32x1xf32>
    %cst_22 = arith.constant 1.000000e+00 : f32
    %35 = vector.broadcast %cst_22 : f32 to vector<32x1xf32>
    %36 = arith.addf %35, %34 : vector<32x1xf32>
    %37 = arith.divf %35, %36 : vector<32x1xf32>
    %c0_23 = arith.constant 0 : index
    %c0_24 = arith.constant 0 : index
    %c0_25 = arith.constant 0 : index
    %38 = vector.load %arg8[%c0_23, %c0_24, %c0_25] : memref<2x32x256xf32, #tpu.memory_space<vmem>>, vector<1x32x256xf32>
    %39 = vector.shape_cast %38 : vector<1x32x256xf32> to vector<32x256xf32>
    %40 = vector.broadcast %37 : vector<32x1xf32> to vector<32x256xf32>
    %41 = arith.mulf %16, %40 : vector<32x256xf32>
    %42 = arith.addf %39, %41 : vector<32x256xf32>
    %c0_26 = arith.constant 0 : index
    %c0_27 = arith.constant 0 : index
    %c0_28 = arith.constant 0 : index
    %43 = vector.load %arg9[%c0_26, %c0_27, %c0_28] : memref<2x32x256xf32, #tpu.memory_space<vmem>>, vector<1x32x256xf32>
    %44 = vector.shape_cast %43 : vector<1x32x256xf32> to vector<32x256xf32>
    %45 = vector.shape_cast %42 : vector<32x256xf32> to vector<1x32x256xf32>
    tpu.vector_store %arg9[%c0_26, %c0_27, %c0_28], %45 {strides = array<i32>} : memref<2x32x256xf32, #tpu.memory_space<vmem>>, vector<1x32x256xf32>,
    %c1 = arith.constant 1 : index
    %c0_29 = arith.constant 0 : index
    %c0_30 = arith.constant 0 : index
    %46 = vector.load %arg1[%c1, %c0_29, %c0_30] : memref<2x288x256xf32, #tpu.memory_space<vmem>>, vector<1x288x256xf32>
    %47 = vector.shape_cast %46 : vector<1x288x256xf32> to vector<288x256xf32>
    %c0_31 = arith.constant 0 : index
    %c0_32 = arith.constant 0 : index
    %48 = vector.load %arg2[%c0_31, %c0_32] : memref<32x288xf32, #tpu.memory_space<vmem>>, vector<32x288xf32>
    %cst_33 = arith.constant dense<0.000000e+00> : vector<32x256xf32>
    %49 = tpu.matmul %48, %47, %cst_33 {dimension_numbers = #tpu.dot_dimension_numbers<[1], [0], [0], [1], [0, 0, 1, 1], [], []>} : vector<32x288xf32>, vector<288x256xf32>, vector<32x256xf32> -> vector<32x256xf32>
    %c0_34 = arith.constant 0 : index
    %c0_35 = arith.constant 0 : index
    %50 = vector.load %arg3[%c0_34, %c0_35] : memref<32x1xf32, #tpu.memory_space<vmem>>, vector<32x1xf32>
    %51 = vector.broadcast %50 : vector<32x1xf32> to vector<32x256xf32>
    %52 = arith.addf %49, %51 : vector<32x256xf32>
    %c0_36 = arith.constant 0 : index
    %c0_37 = arith.constant 0 : index
    %53 = vector.load %arg4[%c0_36, %c0_37] : memref<32x288xf32, #tpu.memory_space<vmem>>, vector<32x288xf32>
    %cst_38 = arith.constant dense<0.000000e+00> : vector<32x256xf32>
    %54 = tpu.matmul %53, %47, %cst_38 {dimension_numbers = #tpu.dot_dimension_numbers<[1], [0], [0], [1], [0, 0, 1, 1], [], []>} : vector<32x288xf32>, vector<288x256xf32>, vector<32x256xf32> -> vector<32x256xf32>
    %c0_39 = arith.constant 0 : index
    %c0_40 = arith.constant 0 : index
    %55 = vector.load %arg5[%c0_39, %c0_40] : memref<32x1xf32, #tpu.memory_space<vmem>>, vector<32x1xf32>
    %56 = vector.broadcast %55 : vector<32x1xf32> to vector<32x256xf32>
    %57 = arith.addf %54, %56 : vector<32x256xf32>
    %cst_41 = arith.constant 0.000000e+00 : f32
    %58 = vector.broadcast %cst_41 : f32 to vector<32x256xf32>
    %59 = arith.maximumf %52, %58 : vector<32x256xf32>
    %cst_42 = arith.constant 0.000000e+00 : f32
    %60 = vector.broadcast %cst_42 : f32 to vector<32x256xf32>
    %61 = arith.maximumf %57, %60 : vector<32x256xf32>
    %62 = arith.addf %59, %61 : vector<32x256xf32>
    %cst_43 = arith.constant dense<0.000000e+00> : vector<32xf32>
    %63 = vector.multi_reduction <add>, %62, %cst_43 [1] : vector<32x256xf32> to vector<32xf32>
    %64 = vector.shape_cast %63 : vector<32xf32> to vector<32x1xf32>
    %cst_44 = arith.constant 2.560000e+02 : f32
    %65 = vector.broadcast %cst_44 : f32 to vector<32x1xf32>
    %66 = arith.divf %64, %65 : vector<32x1xf32>
    %c0_45 = arith.constant 0 : index
    %c0_46 = arith.constant 0 : index
    %67 = vector.load %arg6[%c0_45, %c0_46] : memref<32x2xf32, #tpu.memory_space<vmem>>, vector<32x2xf32>
    %68 = vector.broadcast %66 : vector<32x1xf32> to vector<32x2xf32>
    %69 = arith.mulf %67, %68 : vector<32x2xf32>
    %cst_47 = arith.constant dense<0.000000e+00> : vector<2xf32>
    %70 = vector.multi_reduction <add>, %69, %cst_47 [0] : vector<32x2xf32> to vector<2xf32>
    %71 = vector.shape_cast %70 : vector<2xf32> to vector<1x2xf32>
    %cst_48 = arith.constant 0.000000e+00 : f32
    %72 = vector.broadcast %cst_48 : f32 to vector<1x2xf32>
    %73 = arith.maximumf %71, %72 : vector<1x2xf32>
    %c0_49 = arith.constant 0 : index
    %c0_50 = arith.constant 0 : index
    %74 = vector.load %arg7[%c0_49, %c0_50] : memref<32x2xf32, #tpu.memory_space<vmem>>, vector<32x2xf32>
    %75 = vector.broadcast %73 : vector<1x2xf32> to vector<32x2xf32>
    %76 = arith.mulf %74, %75 : vector<32x2xf32>
    %cst_51 = arith.constant dense<0.000000e+00> : vector<32xf32>
    %77 = vector.multi_reduction <add>, %76, %cst_51 [1] : vector<32x2xf32> to vector<32xf32>
    %78 = vector.shape_cast %77 : vector<32xf32> to vector<32x1xf32>
    %79 = arith.negf %78 : vector<32x1xf32>
    %80 = math.exp %79 : vector<32x1xf32>
    %cst_52 = arith.constant 1.000000e+00 : f32
    %81 = vector.broadcast %cst_52 : f32 to vector<32x1xf32>
    %82 = arith.addf %81, %80 : vector<32x1xf32>
    %83 = arith.divf %81, %82 : vector<32x1xf32>
    %c1_53 = arith.constant 1 : index
    %c0_54 = arith.constant 0 : index
    %c0_55 = arith.constant 0 : index
    %84 = vector.load %arg8[%c1_53, %c0_54, %c0_55] : memref<2x32x256xf32, #tpu.memory_space<vmem>>, vector<1x32x256xf32>
    %85 = vector.shape_cast %84 : vector<1x32x256xf32> to vector<32x256xf32>
    %86 = vector.broadcast %83 : vector<32x1xf32> to vector<32x256xf32>
    %87 = arith.mulf %62, %86 : vector<32x256xf32>
    %88 = arith.addf %85, %87 : vector<32x256xf32>
    %c1_56 = arith.constant 1 : index
    %c0_57 = arith.constant 0 : index
    %c0_58 = arith.constant 0 : index
    %89 = vector.load %arg9[%c1_56, %c0_57, %c0_58] : memref<2x32x256xf32, #tpu.memory_space<vmem>>, vector<1x32x256xf32>
    %90 = vector.shape_cast %89 : vector<1x32x256xf32> to vector<32x256xf32>
    %91 = vector.shape_cast %88 : vector<32x256xf32> to vector<1x32x256xf32>
    tpu.vector_store %arg9[%c1_56, %c0_57, %c0_58], %91 {strides = array<i32>} : memref<2x32x256xf32, #tpu.memory_space<vmem>>, vector<1x32x256xf32>,
    return
  }
  func.func @transform_0(%arg0: i32) -> (i32, i32, i32) {
    %c0_i32 = arith.constant 0 : i32
    %c0_i32_0 = arith.constant 0 : i32
    %c0_i32_1 = arith.constant 0 : i32
    return %arg0, %c0_i32, %c0_i32_0 : i32, i32, i32
  }
  func.func @transform_1(%arg0: i32) -> (i32, i32) {
    %c0_i32 = arith.constant 0 : i32
    %c0_i32_0 = arith.constant 0 : i32
    %c0_i32_1 = arith.constant 0 : i32
    return %c0_i32, %c0_i32_0 : i32, i32
  }
  func.func @transform_2(%arg0: i32) -> (i32, i32) {
    %c0_i32 = arith.constant 0 : i32
    %c0_i32_0 = arith.constant 0 : i32
    %c0_i32_1 = arith.constant 0 : i32
    return %c0_i32, %c0_i32_0 : i32, i32
  }
  func.func @transform_3(%arg0: i32) -> (i32, i32) {
    %c0_i32 = arith.constant 0 : i32
    %c0_i32_0 = arith.constant 0 : i32
    %c0_i32_1 = arith.constant 0 : i32
    return %c0_i32, %c0_i32_0 : i32, i32
  }
  func.func @transform_4(%arg0: i32) -> (i32, i32) {
    %c0_i32 = arith.constant 0 : i32
    %c0_i32_0 = arith.constant 0 : i32
    %c0_i32_1 = arith.constant 0 : i32
    return %c0_i32, %c0_i32_0 : i32, i32
  }
  func.func @transform_5(%arg0: i32) -> (i32, i32) {
    %c0_i32 = arith.constant 0 : i32
    %c0_i32_0 = arith.constant 0 : i32
    %c0_i32_1 = arith.constant 0 : i32
    return %c0_i32, %c0_i32_0 : i32, i32
  }
  func.func @transform_6(%arg0: i32) -> (i32, i32) {
    %c0_i32 = arith.constant 0 : i32
    %c0_i32_0 = arith.constant 0 : i32
    %c0_i32_1 = arith.constant 0 : i32
    return %c0_i32, %c0_i32_0 : i32, i32
  }
  func.func @transform_7(%arg0: i32) -> (i32, i32, i32) {
    %c0_i32 = arith.constant 0 : i32
    %c0_i32_0 = arith.constant 0 : i32
    %c0_i32_1 = arith.constant 0 : i32
    return %arg0, %c0_i32, %c0_i32_0 : i32, i32, i32
  }
  func.func @transform_8(%arg0: i32) -> (i32, i32, i32) {
    %c0_i32 = arith.constant 0 : i32
    %c0_i32_0 = arith.constant 0 : i32
    %c0_i32_1 = arith.constant 0 : i32
    return %arg0, %c0_i32, %c0_i32_0 : i32, i32, i32
  }
}

</mosaic_0001>

<llo_original>
// kernel: dual_path_attention_block.3
$region0: #{dual_path_attention_block.3}
  #allocation0 [shape = 'u32[]', space=smem, size = 0x4, offset = 0x4, fixed_abs, tag = 'smem constant byte address 0x4 - core index']
  #allocation1 [shape = 'u32[144,128]{1,0:T(1,128)}', space=vmem, size = 0x12000, scoped, tag = 'internal scratch']
  %s0 = inlined_call_operand.vmem [shape: f32[2,288,256], index: 0, kind: input, shape index: {}]
  %s1 = inlined_call_operand.vmem [shape: f32[32,288], index: 1, kind: input, shape index: {}]
  %s2 = inlined_call_operand.vmem [shape: f32[32,1], index: 2, kind: input, shape index: {}]
  %s3 = inlined_call_operand.vmem [shape: f32[32,288], index: 3, kind: input, shape index: {}]
  %s4 = inlined_call_operand.vmem [shape: f32[32,1], index: 4, kind: input, shape index: {}]
  %s5 = inlined_call_operand.vmem [shape: f32[2,32,256], index: 5, kind: output, shape index: {0}]
  %s6 = inlined_call_operand.vmem [shape: f32[2,2,256], index: 6, kind: output, shape index: {1}]
  %7 = xla_tuple %s5, %s6
  %s8 = sld [smem:[#allocation0]]
  $region38: #{dual_path_attention_block.3} parent=0
    _
  %s10 = ssub.s32 1, %s8
  %s11 = scalar_select 0, %s10, %s8
  // Predicated region
  $region2: #{dual_path_attention_block.3} parent=0 // pred_check
    _
  $region3: #{dual_path_attention_block.3} parent=0 // pred_check_branch
    %13 = sbr.rel (0) target = $region5
  $region4: #{dual_path_attention_block.3} parent=0 // pred_region
    _
  $region5: #{dual_path_attention_block.3} parent=0 // pred_fallthru
    _
  // Predicated region
  $region6: #{dual_path_attention_block.3} parent=0 // pred_check
    _
  $region7: #{dual_path_attention_block.3} parent=0 // pred_check_branch
    %15 = sbr.rel (0) target = $region9
  $region8: #{dual_path_attention_block.3} parent=0 // pred_region
    _
  $region9: #{dual_path_attention_block.3} parent=0 // pred_fallthru
    _
  // Predicated region
  $region10: #{dual_path_attention_block.3} parent=0 // pred_check
    _
  $region11: #{dual_path_attention_block.3} parent=0 // pred_check_branch
    %17 = sbr.rel (0) target = $region13
  $region12: #{dual_path_attention_block.3} parent=0 // pred_region
    _
  $region13: #{dual_path_attention_block.3} parent=0 // pred_fallthru
    _
  // Predicated region
  $region14: #{dual_path_attention_block.3} parent=0 // pred_check
    _
  $region15: #{dual_path_attention_block.3} parent=0 // pred_check_branch
    %19 = sbr.rel (0) target = $region17
  $region16: #{dual_path_attention_block.3} parent=0 // pred_region
    _
  $region17: #{dual_path_attention_block.3} parent=0 // pred_fallthru
    _
  // Predicated region
  $region18: #{dual_path_attention_block.3} parent=0 // pred_check
    _
  $region19: #{dual_path_attention_block.3} parent=0 // pred_check_branch
    %21 = sbr.rel (0) target = $region21
  $region20: #{dual_path_attention_block.3} parent=0 // pred_region
    _
  $region21: #{dual_path_attention_block.3} parent=0 // pred_fallthru
    _
  %v22 = vld [vmem:[%s0] sm:$0xff]
  %v23 = vld [vmem:[%s0 + $0x8] sm:$0xff]
  %v24 = vld [vmem:[%s0 + $0x10] sm:$0xff]
  %v25 = vld [vmem:[%s0 + $0x18] sm:$0xff]
  %v26 = vld [vmem:[%s0 + $0x20] sm:$0xff]
  %v27 = vld [vmem:[%s0 + $0x28] sm:$0xff]
  %v28 = vld [vmem:[%s0 + $0x30] sm:$0xff]
  %v29 = vld [vmem:[%s0 + $0x38] sm:$0xff]
  %v30 = vld [vmem:[%s0 + $0x40] sm:$0xff]
  %v31 = vld [vmem:[%s0 + $0x48] sm:$0xff]
  %v32 = vld [vmem:[%s0 + $0x50] sm:$0xff]
  %v33 = vld [vmem:[%s0 + $0x58] sm:$0xff]
  %v34 = vld [vmem:[%s0 + $0x60] sm:$0xff]
  %v35 = vld [vmem:[%s0 + $0x68] sm:$0xff]
  %v36 = vld [vmem:[%s0 + $0x70] sm:$0xff]
  %v37 = vld [vmem:[%s0 + $0x78] sm:$0xff]
  %v38 = vld [vmem:[%s0 + $0x80] sm:$0xff]
  %v39 = vld [vmem:[%s0 + $0x88] sm:$0xff]
  %v40 = vld [vmem:[%s0 + $0x90] sm:$0xff]
  %v41 = vld [vmem:[%s0 + $0x98] sm:$0xff]
  %v42 = vld [vmem:[%s0 + $0xa0] sm:$0xff]
  %v43 = vld [vmem:[%s0 + $0xa8] sm:$0xff]
  %v44 = vld [vmem:[%s0 + $0xb0] sm:$0xff]
  %v45 = vld [vmem:[%s0 + $0xb8] sm:$0xff]
  %v46 = vld [vmem:[%s0 + $0xc0] sm:$0xff]
  %v47 = vld [vmem:[%s0 + $0xc8] sm:$0xff]
  %v48 = vld [vmem:[%s0 + $0xd0] sm:$0xff]
  %v49 = vld [vmem:[%s0 + $0xd8] sm:$0xff]
  %v50 = vld [vmem:[%s0 + $0xe0] sm:$0xff]
  %v51 = vld [vmem:[%s0 + $0xe8] sm:$0xff]
  %v52 = vld [vmem:[%s0 + $0xf0] sm:$0xff]
  %v53 = vld [vmem:[%s0 + $0xf8] sm:$0xff]
  %v54 = vld [vmem:[%s0 + $0x100] sm:$0xff]
  %v55 = vld [vmem:[%s0 + $0x108] sm:$0xff]
  %v56 = vld [vmem:[%s0 + $0x110] sm:$0xff]
  %v57 = vld [vmem:[%s0 + $0x118] sm:$0xff]
  %v58 = vld [vmem:[%s0 + $0x120] sm:$0xff]
  %v59 = vld [vmem:[%s0 + $0x128] sm:$0xff]
  %v60 = vld [vmem:[%s0 + $0x130] sm:$0xff]
  %v61 = vld [vmem:[%s0 + $0x138] sm:$0xff]
  %v62 = vld [vmem:[%s0 + $0x140] sm:$0xff]
  %v63 = vld [vmem:[%s0 + $0x148] sm:$0xff]
  %v64 = vld [vmem:[%s0 + $0x150] sm:$0xff]
  %v65 = vld [vmem:[%s0 + $0x158] sm:$0xff]
  %v66 = vld [vmem:[%s0 + $0x160] sm:$0xff]
  %v67 = vld [vmem:[%s0 + $0x168] sm:$0xff]
  %v68 = vld [vmem:[%s0 + $0x170] sm:$0xff]
  %v69 = vld [vmem:[%s0 + $0x178] sm:$0xff]
  %v70 = vld [vmem:[%s0 + $0x180] sm:$0xff]
  %v71 = vld [vmem:[%s0 + $0x188] sm:$0xff]
  %v72 = vld [vmem:[%s0 + $0x190] sm:$0xff]
  %v73 = vld [vmem:[%s0 + $0x198] sm:$0xff]
  %v74 = vld [vmem:[%s0 + $0x1a0] sm:$0xff]
  %v75 = vld [vmem:[%s0 + $0x1a8] sm:$0xff]
  %v76 = vld [vmem:[%s0 + $0x1b0] sm:$0xff]
  %v77 = vld [vmem:[%s0 + $0x1b8] sm:$0xff]
  %v78 = vld [vmem:[%s0 + $0x1c0] sm:$0xff]
  %v79 = vld [vmem:[%s0 + $0x1c8] sm:$0xff]
  %v80 = vld [vmem:[%s0 + $0x1d0] sm:$0xff]
  %v81 = vld [vmem:[%s0 + $0x1d8] sm:$0xff]
  %v82 = vld [vmem:[%s0 + $0x1e0] sm:$0xff]
  %v83 = vld [vmem:[%s0 + $0x1e8] sm:$0xff]
  %v84 = vld [vmem:[%s0 + $0x1f0] sm:$0xff]
  %v85 = vld [vmem:[%s0 + $0x1f8] sm:$0xff]
  %v86 = vld [vmem:[%s0 + $0x200] sm:$0xff]
  %v87 = vld [vmem:[%s0 + $0x208] sm:$0xff]
  %v88 = vld [vmem:[%s0 + $0x210] sm:$0xff]
  %v89 = vld [vmem:[%s0 + $0x218] sm:$0xff]
  %v90 = vld [vmem:[%s0 + $0x220] sm:$0xff]
  %v91 = vld [vmem:[%s0 + $0x228] sm:$0xff]
  %v92 = vld [vmem:[%s0 + $0x230] sm:$0xff]
  %v93 = vld [vmem:[%s0 + $0x238] sm:$0xff]
  %v94 = vld [vmem:[%s1] sm:$0xff]
  %v95 = vld [vmem:[%s1 + $0x8] sm:$0xff]
  %v96 = vld [vmem:[%s1 + $0x10] sm:$0xff]
  %v97 = vld [vmem:[%s1 + $0x18] sm:$0xff]
  %v98 = vld [vmem:[%s1 + $0x20] sm:$0xff]
  %v99 = vld [vmem:[%s1 + $0x28] sm:$0xff]
  %v100 = vld [vmem:[%s1 + $0x30] sm:$0xff]
  %v101 = vld [vmem:[%s1 + $0x38] sm:$0xff]
  %v102 = vld [vmem:[%s1 + $0x40] sm:$0xff]
  %v103 = vld [vmem:[%s1 + $0x48] sm:$0xff]
  %v104 = vld [vmem:[%s1 + $0x50] sm:$0xff]
  %v105 = vld [vmem:[%s1 + $0x58] sm:$0xff]
  %v106 = vld [vmem:[%s2] sm:$0xff]
  %v107 = vld [vmem:[%s2 + $0x8] sm:$0xff]
  %v108 = vld [vmem:[%s2 + $0x10] sm:$0xff]
  %v109 = vld [vmem:[%s2 + $0x18] sm:$0xff]
  %111 = vset.pattern.permute.xlu0 0
  %112 = vperm.xlu0 %111, %v106
  %v113 = vpop.permute.xlu0 %112
  %116 = vset.pattern.permute.xlu0 0
  %117 = vperm.xlu0 %116, %v107
  %v118 = vpop.permute.xlu0 %117
  %121 = vset.pattern.permute.xlu0 0
  %122 = vperm.xlu0 %121, %v108
  %v123 = vpop.permute.xlu0 %122
  %126 = vset.pattern.permute.xlu0 0
  %127 = vperm.xlu0 %126, %v109
  %v128 = vpop.permute.xlu0 %127
  %vm130 = vcmask 261120
  %v132 = vsel %vm130, %v96, 0
  %v135 = vsel %vm130, %v99, 0
  %v138 = vsel %vm130, %v102, 0
  %v141 = vsel %vm130, %v105, 0
  %143 = vmatprep.subr.mxu0 %v23
  %144 = vmatpush1.msra.mxu0 %v22
  %145 = vmatprep.subr.mxu0 %v25
  %146 = vmatpush1.msra.mxu0 %v24
  %147 = vmatprep.subr.mxu0 %v27
  %148 = vmatpush1.msra.mxu0 %v26
  %149 = vmatprep.subr.mxu0 %v29
  %150 = vmatpush1.msra.mxu0 %v28
  %151 = vmatprep.subr.mxu0 %v31
  %152 = vmatpush1.msra.mxu0 %v30
  %153 = vmatprep.subr.mxu0 %v33
  %154 = vmatpush1.msra.mxu0 %v32
  %155 = vmatprep.subr.mxu0 %v35
  %156 = vmatpush1.msra.mxu0 %v34
  %157 = vmatprep.subr.mxu0 %v37
  %158 = vmatpush1.msra.mxu0 %v36
  %159 = vmatprep.subr.mxu0 %v39
  %160 = vmatpush1.msra.mxu0 %v38
  %161 = vmatprep.subr.mxu0 %v41
  %162 = vmatpush1.msra.mxu0 %v40
  %163 = vmatprep.subr.mxu0 %v43
  %164 = vmatpush1.msra.mxu0 %v42
  %165 = vmatprep.subr.mxu0 %v45
  %166 = vmatpush1.msra.mxu0 %v44
  %167 = vmatprep.subr.mxu0 %v47
  %168 = vmatpush1.msra.mxu0 %v46
  %169 = vmatprep.subr.mxu0 %v49
  %170 = vmatpush1.msra.mxu0 %v48
  %171 = vmatprep.subr.mxu0 %v51
  %172 = vmatpush1.msra.mxu0 %v50
  %173 = vmatprep.subr.mxu0 %v53
  %174 = vmatpush1.msra.mxu0 %v52
  %175 = vmatprep.subr.mxu0 %v55
  %176 = vmatpush1.msra.mxu0 %v54
  %177 = vmatprep.subr.mxu0 %v57
  %178 = vmatpush1.msra.mxu0 %v56
  %179 = vmatprep.subr.mxu0 %v59
  %180 = vmatpush1.msra.mxu0 %v58
  %181 = vmatprep.subr.mxu0 %v61
  %182 = vmatpush1.msra.mxu0 %v60
  %183 = vmatprep.subr.mxu0 %v63
  %184 = vmatpush1.msra.mxu0 %v62
  %185 = vmatprep.subr.mxu0 %v65
  %186 = vmatpush1.msra.mxu0 %v64
  %187 = vmatprep.subr.mxu0 %v67
  %188 = vmatpush1.msra.mxu0 %v66
  %189 = vmatprep.subr.mxu0 %v69
  %190 = vmatpush1.msra.mxu0 %v68
  %191 = vmatprep.subr.mxu0 %v71
  %192 = vmatpush1.msra.mxu0 %v70
  %193 = vmatprep.subr.mxu0 %v73
  %194 = vmatpush1.msra.mxu0 %v72
  %195 = vmatprep.subr.mxu0 %v75
  %196 = vmatpush1.msra.mxu0 %v74
  %197 = vmatprep.subr.mxu0 %v77
  %198 = vmatpush1.msra.mxu0 %v76
  %199 = vmatprep.subr.mxu0 %v79
  %200 = vmatpush1.msra.mxu0 %v78
  %201 = vmatprep.subr.mxu0 %v81
  %202 = vmatpush1.msra.mxu0 %v80
  %203 = vmatprep.subr.mxu0 %v83
  %204 = vmatpush1.msra.mxu0 %v82
  %205 = vmatprep.subr.mxu0 %v85
  %206 = vmatpush1.msra.mxu0 %v84
  %207 = vmatprep.mubr.f32.mxu0 %v95
  %208 = vmatmul.mubr.f32.gmra.mrb[0].mxu0 %v94
  %v209 = vpop.f32.mrb[0].mxu0
  %v210 = vadd.f32 %v113, %v209
  %v211 = vpop.f32.mrb[0].mxu0
  %v212 = vadd.f32 %v113, %v211
  %213 = vmatprep.mubr.f32.mxu0 %v98
  %214 = vmatmul.mubr.f32.gmra.mrb[0].mxu0 %v97
  %v215 = vpop.f32.mrb[0].mxu0
  %v216 = vadd.f32 %v118, %v215
  %v217 = vpop.f32.mrb[0].mxu0
  %v218 = vadd.f32 %v118, %v217
  %219 = vmatprep.mubr.f32.mxu0 %v101
  %220 = vmatmul.mubr.f32.gmra.mrb[0].mxu0 %v100
  %v221 = vpop.f32.mrb[0].mxu0
  %v222 = vadd.f32 %v123, %v221
  %v223 = vpop.f32.mrb[0].mxu0
  %v224 = vadd.f32 %v123, %v223
  %225 = vmatprep.mubr.f32.mxu0 %v104
  %226 = vmatmul.mubr.f32.gmra.mrb[0].mxu0 %v103
  %v227 = vpop.f32.mrb[0].mxu0
  %v228 = vadd.f32 %v128, %v227
  %v229 = vpop.f32.mrb[0].mxu0
  %v230 = vadd.f32 %v128, %v229
  %231 = vdwg.mxu0
  %232 = vmatprep.subr.mxu0 %v87
  %233 = vmatpush1.msra.mxu0 %v86
  %234 = vmatprep.subr.mxu0 %v89
  %235 = vmatpush1.msra.mxu0 %v88
  %236 = vmatprep.subr.mxu0 %v91
  %237 = vmatpush1.msra.mxu0 %v90
  %238 = vmatprep.subr.mxu0 %v93
  %239 = vmatpush1.msra.mxu0 %v92
  %240 = vmatprep.subr.mxu0 0.0
  %241 = vmatpush1.msra.mxu0 0.0
  %242 = vmatprep.subr.mxu0 0.0
  %243 = vmatpush1.msra.mxu0 0.0
  %244 = vmatprep.subr.mxu0 0.0
  %245 = vmatpush1.msra.mxu0 0.0
  %246 = vmatprep.subr.mxu0 0.0
  %247 = vmatpush1.msra.mxu0 0.0
  %248 = vmatprep.subr.mxu0 0.0
  %249 = vmatpush1.msra.mxu0 0.0
  %250 = vmatprep.subr.mxu0 0.0
  %251 = vmatpush1.msra.mxu0 0.0
  %252 = vmatprep.subr.mxu0 0.0
  %253 = vmatpush1.msra.mxu0 0.0
  %254 = vmatprep.subr.mxu0 0.0
  %255 = vmatpush1.msra.mxu0 0.0
  %256 = vmatprep.subr.mxu0 0.0
  %257 = vmatpush1.msra.mxu0 0.0
  %258 = vmatprep.subr.mxu0 0.0
  %259 = vmatpush1.msra.mxu0 0.0
  %260 = vmatprep.subr.mxu0 0.0
  %261 = vmatpush1.msra.mxu0 0.0
  %262 = vmatprep.subr.mxu0 0.0
  %263 = vmatpush1.msra.mxu0 0.0
  %264 = vmatprep.subr.mxu0 0.0
  %265 = vmatpush1.msra.mxu0 0.0
  %266 = vmatprep.subr.mxu0 0.0
  %267 = vmatpush1.msra.mxu0 0.0
  %268 = vmatprep.subr.mxu0 0.0
  %269 = vmatpush1.msra.mxu0 0.0
  %270 = vmatprep.subr.mxu0 0.0
  %271 = vmatpush1.msra.mxu0 0.0
  %272 = vmatprep.subr.mxu0 0.0
  %273 = vmatpush1.msra.mxu0 0.0
  %274 = vmatprep.subr.mxu0 0.0
  %275 = vmatpush1.msra.mxu0 0.0
  %276 = vmatprep.subr.mxu0 0.0
  %277 = vmatpush1.msra.mxu0 0.0
  %278 = vmatprep.subr.mxu0 0.0
  %279 = vmatpush1.msra.mxu0 0.0
  %280 = vmatprep.subr.mxu0 0.0
  %281 = vmatpush1.msra.mxu0 0.0
  %282 = vmatprep.subr.mxu0 0.0
  %283 = vmatpush1.msra.mxu0 0.0
  %284 = vmatprep.subr.mxu0 0.0
  %285 = vmatpush1.msra.mxu0 0.0
  %286 = vmatprep.subr.mxu0 0.0
  %287 = vmatpush1.msra.mxu0 0.0
  %288 = vmatprep.subr.mxu0 0.0
  %289 = vmatpush1.msra.mxu0 0.0
  %290 = vmatprep.subr.mxu0 0.0
  %291 = vmatpush1.msra.mxu0 0.0
  %292 = vmatprep.subr.mxu0 0.0
  %293 = vmatpush1.msra.mxu0 0.0
  %294 = vmatprep.subr.mxu0 0.0
  %295 = vmatpush1.msra.mxu0 0.0
  %296 = vmatprep.mubr.f32.mxu0 0.0
  %297 = vmatmul.mubr.f32.gmra.mrb[0].mxu0 %v132
  %v298 = vpop.f32.mrb[0].mxu0
  %v299 = vadd.f32 %v210, %v298
  %v300 = vpop.f32.mrb[0].mxu0
  %v301 = vadd.f32 %v212, %v300
  %302 = vmatprep.mubr.f32.mxu0 0.0
  %303 = vmatmul.mubr.f32.gmra.mrb[0].mxu0 %v135
  %v304 = vpop.f32.mrb[0].mxu0
  %v305 = vadd.f32 %v216, %v304
  %v306 = vpop.f32.mrb[0].mxu0
  %v307 = vadd.f32 %v218, %v306
  %308 = vmatprep.mubr.f32.mxu0 0.0
  %309 = vmatmul.mubr.f32.gmra.mrb[0].mxu0 %v138
  %v310 = vpop.f32.mrb[0].mxu0
  %v311 = vadd.f32 %v222, %v310
  %v312 = vpop.f32.mrb[0].mxu0
  %v313 = vadd.f32 %v224, %v312
  %314 = vmatprep.mubr.f32.mxu0 0.0
  %315 = vmatmul.mubr.f32.gmra.mrb[0].mxu0 %v141
  %v316 = vpop.f32.mrb[0].mxu0
  %v317 = vadd.f32 %v228, %v316
  %v318 = vpop.f32.mrb[0].mxu0
  %v319 = vadd.f32 %v230, %v318
  %320 = vdwg.mxu0
  %v321 = vld [vmem:[%s3] sm:$0xff]
  %v322 = vld [vmem:[%s3 + $0x8] sm:$0xff]
  %v323 = vld [vmem:[%s3 + $0x10] sm:$0xff]
  %v324 = vld [vmem:[%s3 + $0x18] sm:$0xff]
  %v325 = vld [vmem:[%s3 + $0x20] sm:$0xff]
  %v326 = vld [vmem:[%s3 + $0x28] sm:$0xff]
  %v327 = vld [vmem:[%s3 + $0x30] sm:$0xff]
  %v328 = vld [vmem:[%s3 + $0x38] sm:$0xff]
  %v329 = vld [vmem:[%s3 + $0x40] sm:$0xff]
  %v330 = vld [vmem:[%s3 + $0x48] sm:$0xff]
  %v331 = vld [vmem:[%s3 + $0x50] sm:$0xff]
  %v332 = vld [vmem:[%s3 + $0x58] sm:$0xff]
  %v333 = vld [vmem:[%s4] sm:$0xff]
  %v334 = vld [vmem:[%s4 + $0x8] sm:$0xff]
  %v335 = vld [vmem:[%s4 + $0x10] sm:$0xff]
  %v336 = vld [vmem:[%s4 + $0x18] sm:$0xff]
  %338 = vset.pattern.permute.xlu0 0
  %339 = vperm.xlu0 %338, %v333
  %v340 = vpop.permute.xlu0 %339
  %343 = vset.pattern.permute.xlu0 0
  %344 = vperm.xlu0 %343, %v334
  %v345 = vpop.permute.xlu0 %344
  %348 = vset.pattern.permute.xlu0 0
  %349 = vperm.xlu0 %348, %v335
  %v350 = vpop.permute.xlu0 %349
  %353 = vset.pattern.permute.xlu0 0
  %354 = vperm.xlu0 %353, %v336
  %v355 = vpop.permute.xlu0 %354
  %v358 = vsel %vm130, %v323, 0
  %v361 = vsel %vm130, %v326, 0
  %v364 = vsel %vm130, %v329, 0
  %v367 = vsel %vm130, %v332, 0
  %369 = vmatprep.subr.mxu0 %v23
  %370 = vmatpush1.msra.mxu0 %v22
  %371 = vmatprep.subr.mxu0 %v25
  %372 = vmatpush1.msra.mxu0 %v24
  %373 = vmatprep.subr.mxu0 %v27
  %374 = vmatpush1.msra.mxu0 %v26
  %375 = vmatprep.subr.mxu0 %v29
  %376 = vmatpush1.msra.mxu0 %v28
  %377 = vmatprep.subr.mxu0 %v31
  %378 = vmatpush1.msra.mxu0 %v30
  %379 = vmatprep.subr.mxu0 %v33
  %380 = vmatpush1.msra.mxu0 %v32
  %381 = vmatprep.subr.mxu0 %v35
  %382 = vmatpush1.msra.mxu0 %v34
  %383 = vmatprep.subr.mxu0 %v37
  %384 = vmatpush1.msra.mxu0 %v36
  %385 = vmatprep.subr.mxu0 %v39
  %386 = vmatpush1.msra.mxu0 %v38
  %387 = vmatprep.subr.mxu0 %v41
  %388 = vmatpush1.msra.mxu0 %v40
  %389 = vmatprep.subr.mxu0 %v43
  %390 = vmatpush1.msra.mxu0 %v42
  %391 = vmatprep.subr.mxu0 %v45
  %392 = vmatpush1.msra.mxu0 %v44
  %393 = vmatprep.subr.mxu0 %v47
  %394 = vmatpush1.msra.mxu0 %v46
  %395 = vmatprep.subr.mxu0 %v49
  %396 = vmatpush1.msra.mxu0 %v48
  %397 = vmatprep.subr.mxu0 %v51
  %398 = vmatpush1.msra.mxu0 %v50
  %399 = vmatprep.subr.mxu0 %v53
  %400 = vmatpush1.msra.mxu0 %v52
  %401 = vmatprep.subr.mxu0 %v55
  %402 = vmatpush1.msra.mxu0 %v54
  %403 = vmatprep.subr.mxu0 %v57
  %404 = vmatpush1.msra.mxu0 %v56
  %405 = vmatprep.subr.mxu0 %v59
  %406 = vmatpush1.msra.mxu0 %v58
  %407 = vmatprep.subr.mxu0 %v61
  %408 = vmatpush1.msra.mxu0 %v60
  %409 = vmatprep.subr.mxu0 %v63
  %410 = vmatpush1.msra.mxu0 %v62
  %411 = vmatprep.subr.mxu0 %v65
  %412 = vmatpush1.msra.mxu0 %v64
  %413 = vmatprep.subr.mxu0 %v67
  %414 = vmatpush1.msra.mxu0 %v66
  %415 = vmatprep.subr.mxu0 %v69
  %416 = vmatpush1.msra.mxu0 %v68
  %417 = vmatprep.subr.mxu0 %v71
  %418 = vmatpush1.msra.mxu0 %v70
  %419 = vmatprep.subr.mxu0 %v73
  %420 = vmatpush1.msra.mxu0 %v72
  %421 = vmatprep.subr.mxu0 %v75
  %422 = vmatpush1.msra.mxu0 %v74
  %423 = vmatprep.subr.mxu0 %v77
  %424 = vmatpush1.msra.mxu0 %v76
  %425 = vmatprep.subr.mxu0 %v79
  %426 = vmatpush1.msra.mxu0 %v78
  %427 = vmatprep.subr.mxu0 %v81
  %428 = vmatpush1.msra.mxu0 %v80
  %429 = vmatprep.subr.mxu0 %v83
  %430 = vmatpush1.msra.mxu0 %v82
  %431 = vmatprep.subr.mxu0 %v85
  %432 = vmatpush1.msra.mxu0 %v84
  %433 = vmatprep.mubr.f32.mxu0 %v322
  %434 = vmatmul.mubr.f32.gmra.mrb[0].mxu0 %v321
  %v435 = vpop.f32.mrb[0].mxu0
  %v436 = vadd.f32 %v340, %v435
  %v437 = vpop.f32.mrb[0].mxu0
  %v438 = vadd.f32 %v340, %v437
  %439 = vmatprep.mubr.f32.mxu0 %v325
  %440 = vmatmul.mubr.f32.gmra.mrb[0].mxu0 %v324
  %v441 = vpop.f32.mrb[0].mxu0
  %v442 = vadd.f32 %v345, %v441
  %v443 = vpop.f32.mrb[0].mxu0
  %v444 = vadd.f32 %v345, %v443
  %445 = vmatprep.mubr.f32.mxu0 %v328
  %446 = vmatmul.mubr.f32.gmra.mrb[0].mxu0 %v327
  %v447 = vpop.f32.mrb[0].mxu0
  %v448 = vadd.f32 %v350, %v447
  %v449 = vpop.f32.mrb[0].mxu0
  %v450 = vadd.f32 %v350, %v449
  %451 = vmatprep.mubr.f32.mxu0 %v331
  %452 = vmatmul.mubr.f32.gmra.mrb[0].mxu0 %v330
  %v453 = vpop.f32.mrb[0].mxu0
  %v454 = vadd.f32 %v355, %v453
  %v455 = vpop.f32.mrb[0].mxu0
  %v456 = vadd.f32 %v355, %v455
  %457 = vdwg.mxu0
  %458 = vmatprep.subr.mxu0 %v87
  %459 = vmatpush1.msra.mxu0 %v86
  %460 = vmatprep.subr.mxu0 %v89
  %461 = vmatpush1.msra.mxu0 %v88
  %462 = vmatprep.subr.mxu0 %v91
  %463 = vmatpush1.msra.mxu0 %v90
  %464 = vmatprep.subr.mxu0 %v93
  %465 = vmatpush1.msra.mxu0 %v92
  %466 = vmatprep.subr.mxu0 0.0
  %467 = vmatpush1.msra.mxu0 0.0
  %468 = vmatprep.subr.mxu0 0.0
  %469 = vmatpush1.msra.mxu0 0.0
  %470 = vmatprep.subr.mxu0 0.0
  %471 = vmatpush1.msra.mxu0 0.0
  %472 = vmatprep.subr.mxu0 0.0
  %473 = vmatpush1.msra.mxu0 0.0
  %474 = vmatprep.subr.mxu0 0.0
  %475 = vmatpush1.msra.mxu0 0.0
  %476 = vmatprep.subr.mxu0 0.0
  %477 = vmatpush1.msra.mxu0 0.0
  %478 = vmatprep.subr.mxu0 0.0
  %479 = vmatpush1.msra.mxu0 0.0
  %480 = vmatprep.subr.mxu0 0.0
  %481 = vmatpush1.msra.mxu0 0.0
  %482 = vmatprep.subr.mxu0 0.0
  %483 = vmatpush1.msra.mxu0 0.0
  %484 = vmatprep.subr.mxu0 0.0
  %485 = vmatpush1.msra.mxu0 0.0
  %486 = vmatprep.subr.mxu0 0.0
  %487 = vmatpush1.msra.mxu0 0.0
  %488 = vmatprep.subr.mxu0 0.0
  %489 = vmatpush1.msra.mxu0 0.0
  %490 = vmatprep.subr.mxu0 0.0
  %491 = vmatpush1.msra.mxu0 0.0
  %492 = vmatprep.subr.mxu0 0.0
  %493 = vmatpush1.msra.mxu0 0.0
  %494 = vmatprep.subr.mxu0 0.0
  %495 = vmatpush1.msra.mxu0 0.0
  %496 = vmatprep.subr.mxu0 0.0
  %497 = vmatpush1.msra.mxu0 0.0
  %498 = vmatprep.subr.mxu0 0.0
  %499 = vmatpush1.msra.mxu0 0.0
  %500 = vmatprep.subr.mxu0 0.0
  %501 = vmatpush1.msra.mxu0 0.0
  %502 = vmatprep.subr.mxu0 0.0
  %503 = vmatpush1.msra.mxu0 0.0
  %504 = vmatprep.subr.mxu0 0.0
  %505 = vmatpush1.msra.mxu0 0.0
  %506 = vmatprep.subr.mxu0 0.0
  %507 = vmatpush1.msra.mxu0 0.0
  %508 = vmatprep.subr.mxu0 0.0
  %509 = vmatpush1.msra.mxu0 0.0
  %510 = vmatprep.subr.mxu0 0.0
  %511 = vmatpush1.msra.mxu0 0.0
  %512 = vmatprep.subr.mxu0 0.0
  %513 = vmatpush1.msra.mxu0 0.0
  %514 = vmatprep.subr.mxu0 0.0
  %515 = vmatpush1.msra.mxu0 0.0
  %516 = vmatprep.subr.mxu0 0.0
  %517 = vmatpush1.msra.mxu0 0.0
  %518 = vmatprep.subr.mxu0 0.0
  %519 = vmatpush1.msra.mxu0 0.0
  %520 = vmatprep.subr.mxu0 0.0
  %521 = vmatpush1.msra.mxu0 0.0
  %522 = vmatprep.mubr.f32.mxu0 0.0
  %523 = vmatmul.mubr.f32.gmra.mrb[0].mxu0 %v358
  %v524 = vpop.f32.mrb[0].mxu0
  %v525 = vadd.f32 %v436, %v524
  %v526 = vpop.f32.mrb[0].mxu0
  %v527 = vadd.f32 %v438, %v526
  %528 = vmatprep.mubr.f32.mxu0 0.0
  %529 = vmatmul.mubr.f32.gmra.mrb[0].mxu0 %v361
  %v530 = vpop.f32.mrb[0].mxu0
  %v531 = vadd.f32 %v442, %v530
  %v532 = vpop.f32.mrb[0].mxu0
  %v533 = vadd.f32 %v444, %v532
  %534 = vmatprep.mubr.f32.mxu0 0.0
  %535 = vmatmul.mubr.f32.gmra.mrb[0].mxu0 %v364
  %v536 = vpop.f32.mrb[0].mxu0
  %v537 = vadd.f32 %v448, %v536
  %v538 = vpop.f32.mrb[0].mxu0
  %v539 = vadd.f32 %v450, %v538
  %540 = vmatprep.mubr.f32.mxu0 0.0
  %541 = vmatmul.mubr.f32.gmra.mrb[0].mxu0 %v367
  %v542 = vpop.f32.mrb[0].mxu0
  %v543 = vadd.f32 %v454, %v542
  %v544 = vpop.f32.mrb[0].mxu0
  %v545 = vadd.f32 %v456, %v544
  %546 = vdwg.mxu0
  %v547 = vmax.f32 %v299, 0.0
  %v548 = vmax.f32 %v301, 0.0
  %v549 = vmax.f32 %v305, 0.0
  %v550 = vmax.f32 %v307, 0.0
  %v551 = vmax.f32 %v311, 0.0
  %v552 = vmax.f32 %v313, 0.0
  %v553 = vmax.f32 %v317, 0.0
  %v554 = vmax.f32 %v319, 0.0
  %v555 = vmax.f32 %v525, 0.0
  %v556 = vmax.f32 %v527, 0.0
  %v557 = vmax.f32 %v531, 0.0
  %v558 = vmax.f32 %v533, 0.0
  %v559 = vmax.f32 %v537, 0.0
  %v560 = vmax.f32 %v539, 0.0
  %v561 = vmax.f32 %v543, 0.0
  %v562 = vmax.f32 %v545, 0.0
  %v563 = vadd.f32 %v547, %v555
  %v564 = vadd.f32 %v548, %v556
  %v565 = vadd.f32 %v549, %v557
  %v566 = vadd.f32 %v550, %v558
  %v567 = vadd.f32 %v551, %v559
  %v568 = vadd.f32 %v552, %v560
  %v569 = vadd.f32 %v553, %v561
  %v570 = vadd.f32 %v554, %v562
  %571 = vst [vmem:[%s5] sm:$0xff] %v563
  %572 = vst [vmem:[%s5 + $0x8] sm:$0xff] %v564
  %573 = vst [vmem:[%s5 + $0x10] sm:$0xff] %v565
  %574 = vst [vmem:[%s5 + $0x18] sm:$0xff] %v566
  %575 = vst [vmem:[%s5 + $0x20] sm:$0xff] %v567
  %576 = vst [vmem:[%s5 + $0x28] sm:$0xff] %v568
  %577 = vst [vmem:[%s5 + $0x30] sm:$0xff] %v569
  %578 = vst [vmem:[%s5 + $0x38] sm:$0xff] %v570
  %s579 = scalar_lea.vmem %s0, 576
  %v580 = vld [vmem:[%s579] sm:$0xff]
  %v581 = vld [vmem:[%s579 + $0x8] sm:$0xff]
  %v582 = vld [vmem:[%s579 + $0x10] sm:$0xff]
  %v583 = vld [vmem:[%s579 + $0x18] sm:$0xff]
  %v584 = vld [vmem:[%s579 + $0x20] sm:$0xff]
  %v585 = vld [vmem:[%s579 + $0x28] sm:$0xff]
  %v586 = vld [vmem:[%s579 + $0x30] sm:$0xff]
  %v587 = vld [vmem:[%s579 + $0x38] sm:$0xff]
  %v588 = vld [vmem:[%s579 + $0x40] sm:$0xff]
  %v589 = vld [vmem:[%s579 + $0x48] sm:$0xff]
  %v590 = vld [vmem:[%s579 + $0x50] sm:$0xff]
  %v591 = vld [vmem:[%s579 + $0x58] sm:$0xff]
  %v592 = vld [vmem:[%s579 + $0x60] sm:$0xff]
  %v593 = vld [vmem:[%s579 + $0x68] sm:$0xff]
  %v594 = vld [vmem:[%s579 + $0x70] sm:$0xff]
  %v595 = vld [vmem:[%s579 + $0x78] sm:$0xff]
  %v596 = vld [vmem:[%s579 + $0x80] sm:$0xff]
  %v597 = vld [vmem:[%s579 + $0x88] sm:$0xff]
  %v598 = vld [vmem:[%s579 + $0x90] sm:$0xff]
  %v599 = vld [vmem:[%s579 + $0x98] sm:$0xff]
  %v600 = vld [vmem:[%s579 + $0xa0] sm:$0xff]
  %v601 = vld [vmem:[%s579 + $0xa8] sm:$0xff]
  %v602 = vld [vmem:[%s579 + $0xb0] sm:$0xff]
  %v603 = vld [vmem:[%s579 + $0xb8] sm:$0xff]
  %v604 = vld [vmem:[%s579 + $0xc0] sm:$0xff]
  %v605 = vld [vmem:[%s579 + $0xc8] sm:$0xff]
  %v606 = vld [vmem:[%s579 + $0xd0] sm:$0xff]
  %v607 = vld [vmem:[%s579 + $0xd8] sm:$0xff]
  %v608 = vld [vmem:[%s579 + $0xe0] sm:$0xff]
  %v609 = vld [vmem:[%s579 + $0xe8] sm:$0xff]
  %v610 = vld [vmem:[%s579 + $0xf0] sm:$0xff]
  %v611 = vld [vmem:[%s579 + $0xf8] sm:$0xff]
  %v612 = vld [vmem:[%s579 + $0x100] sm:$0xff]
  %v613 = vld [vmem:[%s579 + $0x108] sm:$0xff]
  %v614 = vld [vmem:[%s579 + $0x110] sm:$0xff]
  %v615 = vld [vmem:[%s579 + $0x118] sm:$0xff]
  %v616 = vld [vmem:[%s579 + $0x120] sm:$0xff]
  %v617 = vld [vmem:[%s579 + $0x128] sm:$0xff]
  %v618 = vld [vmem:[%s579 + $0x130] sm:$0xff]
  %v619 = vld [vmem:[%s579 + $0x138] sm:$0xff]
  %v620 = vld [vmem:[%s579 + $0x140] sm:$0xff]
  %v621 = vld [vmem:[%s579 + $0x148] sm:$0xff]
  %v622 = vld [vmem:[%s579 + $0x150] sm:$0xff]
  %v623 = vld [vmem:[%s579 + $0x158] sm:$0xff]
  %v624 = vld [vmem:[%s579 + $0x160] sm:$0xff]
  %v625 = vld [vmem:[%s579 + $0x168] sm:$0xff]
  %v626 = vld [vmem:[%s579 + $0x170] sm:$0xff]
  %v627 = vld [vmem:[%s579 + $0x178] sm:$0xff]
  %v628 = vld [vmem:[%s579 + $0x180] sm:$0xff]
  %v629 = vld [vmem:[%s579 + $0x188] sm:$0xff]
  %v630 = vld [vmem:[%s579 + $0x190] sm:$0xff]
  %v631 = vld [vmem:[%s579 + $0x198] sm:$0xff]
  %v632 = vld [vmem:[%s579 + $0x1a0] sm:$0xff]
  %v633 = vld [vmem:[%s579 + $0x1a8] sm:$0xff]
  %v634 = vld [vmem:[%s579 + $0x1b0] sm:$0xff]
  %v635 = vld [vmem:[%s579 + $0x1b8] sm:$0xff]
  %v636 = vld [vmem:[%s579 + $0x1c0] sm:$0xff]
  %v637 = vld [vmem:[%s579 + $0x1c8] sm:$0xff]
  %v638 = vld [vmem:[%s579 + $0x1d0] sm:$0xff]
  %v639 = vld [vmem:[%s579 + $0x1d8] sm:$0xff]
  %v640 = vld [vmem:[%s579 + $0x1e0] sm:$0xff]
  %v641 = vld [vmem:[%s579 + $0x1e8] sm:$0xff]
  %v642 = vld [vmem:[%s579 + $0x1f0] sm:$0xff]
  %v643 = vld [vmem:[%s579 + $0x1f8] sm:$0xff]
  %v644 = vld [vmem:[%s579 + $0x200] sm:$0xff]
  %v645 = vld [vmem:[%s579 + $0x208] sm:$0xff]
  %v646 = vld [vmem:[%s579 + $0x210] sm:$0xff]
  %v647 = vld [vmem:[%s579 + $0x218] sm:$0xff]
  %v648 = vld [vmem:[%s579 + $0x220] sm:$0xff]
  %v649 = vld [vmem:[%s579 + $0x228] sm:$0xff]
  %v650 = vld [vmem:[%s579 + $0x230] sm:$0xff]
  %v651 = vld [vmem:[%s579 + $0x238] sm:$0xff]
  %v652 = vld [vmem:[%s1] sm:$0xff]
  %v653 = vld [vmem:[%s1 + $0x8] sm:$0xff]
  %v654 = vld [vmem:[%s1 + $0x10] sm:$0xff]
  %v655 = vld [vmem:[%s1 + $0x18] sm:$0xff]
  %v656 = vld [vmem:[%s1 + $0x20] sm:$0xff]
  %v657 = vld [vmem:[%s1 + $0x28] sm:$0xff]
  %v658 = vld [vmem:[%s1 + $0x30] sm:$0xff]
  %v659 = vld [vmem:[%s1 + $0x38] sm:$0xff]
  %v660 = vld [vmem:[%s1 + $0x40] sm:$0xff]
  %v661 = vld [vmem:[%s1 + $0x48] sm:$0xff]
  %v662 = vld [vmem:[%s1 + $0x50] sm:$0xff]
  %v663 = vld [vmem:[%s1 + $0x58] sm:$0xff]
  %v664 = vld [vmem:[%s2] sm:$0xff]
  %v665 = vld [vmem:[%s2 + $0x8] sm:$0xff]
  %v666 = vld [vmem:[%s2 + $0x10] sm:$0xff]
  %v667 = vld [vmem:[%s2 + $0x18] sm:$0xff]
  %669 = vset.pattern.permute.xlu0 0
  %670 = vperm.xlu0 %669, %v664
  %v671 = vpop.permute.xlu0 %670
  %674 = vset.pattern.permute.xlu0 0
  %675 = vperm.xlu0 %674, %v665
  %v676 = vpop.permute.xlu0 %675
  %679 = vset.pattern.permute.xlu0 0
  %680 = vperm.xlu0 %679, %v666
  %v681 = vpop.permute.xlu0 %680
  %684 = vset.pattern.permute.xlu0 0
  %685 = vperm.xlu0 %684, %v667
  %v686 = vpop.permute.xlu0 %685
  %v689 = vsel %vm130, %v654, 0
  %v692 = vsel %vm130, %v657, 0
  %v695 = vsel %vm130, %v660, 0
  %v698 = vsel %vm130, %v663, 0
  %700 = vmatprep.subr.mxu0 %v581
  %701 = vmatpush1.msra.mxu0 %v580
  %702 = vmatprep.subr.mxu0 %v583
  %703 = vmatpush1.msra.mxu0 %v582
  %704 = vmatprep.subr.mxu0 %v585
  %705 = vmatpush1.msra.mxu0 %v584
  %706 = vmatprep.subr.mxu0 %v587
  %707 = vmatpush1.msra.mxu0 %v586
  %708 = vmatprep.subr.mxu0 %v589
  %709 = vmatpush1.msra.mxu0 %v588
  %710 = vmatprep.subr.mxu0 %v591
  %711 = vmatpush1.msra.mxu0 %v590
  %712 = vmatprep.subr.mxu0 %v593
  %713 = vmatpush1.msra.mxu0 %v592
  %714 = vmatprep.subr.mxu0 %v595
  %715 = vmatpush1.msra.mxu0 %v594
  %716 = vmatprep.subr.mxu0 %v597
  %717 = vmatpush1.msra.mxu0 %v596
  %718 = vmatprep.subr.mxu0 %v599
  %719 = vmatpush1.msra.mxu0 %v598
  %720 = vmatprep.subr.mxu0 %v601
  %721 = vmatpush1.msra.mxu0 %v600
  %722 = vmatprep.subr.mxu0 %v603
  %723 = vmatpush1.msra.mxu0 %v602
  %724 = vmatprep.subr.mxu0 %v605
  %725 = vmatpush1.msra.mxu0 %v604
  %726 = vmatprep.subr.mxu0 %v607
  %727 = vmatpush1.msra.mxu0 %v606
  %728 = vmatprep.subr.mxu0 %v609
  %729 = vmatpush1.msra.mxu0 %v608
  %730 = vmatprep.subr.mxu0 %v611
  %731 = vmatpush1.msra.mxu0 %v610
  %732 = vmatprep.subr.mxu0 %v613
  %733 = vmatpush1.msra.mxu0 %v612
  %734 = vmatprep.subr.mxu0 %v615
  %735 = vmatpush1.msra.mxu0 %v614
  %736 = vmatprep.subr.mxu0 %v617
  %737 = vmatpush1.msra.mxu0 %v616
  %738 = vmatprep.subr.mxu0 %v619
  %739 = vmatpush1.msra.mxu0 %v618
  %740 = vmatprep.subr.mxu0 %v621
  %741 = vmatpush1.msra.mxu0 %v620
  %742 = vmatprep.subr.mxu0 %v623
  %743 = vmatpush1.msra.mxu0 %v622
  %744 = vmatprep.subr.mxu0 %v625
  %745 = vmatpush1.msra.mxu0 %v624
  %746 = vmatprep.subr.mxu0 %v627
  %747 = vmatpush1.msra.mxu0 %v626
  %748 = vmatprep.subr.mxu0 %v629
  %749 = vmatpush1.msra.mxu0 %v628
  %750 = vmatprep.subr.mxu0 %v631
  %751 = vmatpush1.msra.mxu0 %v630
  %752 = vmatprep.subr.mxu0 %v633
  %753 = vmatpush1.msra.mxu0 %v632
  %754 = vmatprep.subr.mxu0 %v635
  %755 = vmatpush1.msra.mxu0 %v634
  %756 = vmatprep.subr.mxu0 %v637
  %757 = vmatpush1.msra.mxu0 %v636
  %758 = vmatprep.subr.mxu0 %v639
  %759 = vmatpush1.msra.mxu0 %v638
  %760 = vmatprep.subr.mxu0 %v641
  %761 = vmatpush1.msra.mxu0 %v640
  %762 = vmatprep.subr.mxu0 %v643
  %763 = vmatpush1.msra.mxu0 %v642
  %764 = vmatprep.mubr.f32.mxu0 %v653
  %765 = vmatmul.mubr.f32.gmra.mrb[0].mxu0 %v652
  %v766 = vpop.f32.mrb[0].mxu0
  %v767 = vadd.f32 %v671, %v766
  %v768 = vpop.f32.mrb[0].mxu0
  %v769 = vadd.f32 %v671, %v768
  %770 = vmatprep.mubr.f32.mxu0 %v656
  %771 = vmatmul.mubr.f32.gmra.mrb[0].mxu0 %v655
  %v772 = vpop.f32.mrb[0].mxu0
  %v773 = vadd.f32 %v676, %v772
  %v774 = vpop.f32.mrb[0].mxu0
  %v775 = vadd.f32 %v676, %v774
  %776 = vmatprep.mubr.f32.mxu0 %v659
  %777 = vmatmul.mubr.f32.gmra.mrb[0].mxu0 %v658
  %v778 = vpop.f32.mrb[0].mxu0
  %v779 = vadd.f32 %v681, %v778
  %v780 = vpop.f32.mrb[0].mxu0
  %v781 = vadd.f32 %v681, %v780
  %782 = vmatprep.mubr.f32.mxu0 %v662
  %783 = vmatmul.mubr.f32.gmra.mrb[0].mxu0 %v661
  %v784 = vpop.f32.mrb[0].mxu0
  %v785 = vadd.f32 %v686, %v784
  %v786 = vpop.f32.mrb[0].mxu0
  %v787 = vadd.f32 %v686, %v786
  %788 = vdwg.mxu0
  %789 = vmatprep.subr.mxu0 %v645
  %790 = vmatpush1.msra.mxu0 %v644
  %791 = vmatprep.subr.mxu0 %v647
  %792 = vmatpush1.msra.mxu0 %v646
  %793 = vmatprep.subr.mxu0 %v649
  %794 = vmatpush1.msra.mxu0 %v648
  %795 = vmatprep.subr.mxu0 %v651
  %796 = vmatpush1.msra.mxu0 %v650
  %797 = vmatprep.subr.mxu0 0.0
  %798 = vmatpush1.msra.mxu0 0.0
  %799 = vmatprep.subr.mxu0 0.0
  %800 = vmatpush1.msra.mxu0 0.0
  %801 = vmatprep.subr.mxu0 0.0
  %802 = vmatpush1.msra.mxu0 0.0
  %803 = vmatprep.subr.mxu0 0.0
  %804 = vmatpush1.msra.mxu0 0.0
  %805 = vmatprep.subr.mxu0 0.0
  %806 = vmatpush1.msra.mxu0 0.0
  %807 = vmatprep.subr.mxu0 0.0
  %808 = vmatpush1.msra.mxu0 0.0
  %809 = vmatprep.subr.mxu0 0.0
  %810 = vmatpush1.msra.mxu0 0.0
  %811 = vmatprep.subr.mxu0 0.0
  %812 = vmatpush1.msra.mxu0 0.0
  %813 = vmatprep.subr.mxu0 0.0
  %814 = vmatpush1.msra.mxu0 0.0
  %815 = vmatprep.subr.mxu0 0.0
  %816 = vmatpush1.msra.mxu0 0.0
  %817 = vmatprep.subr.mxu0 0.0
  %818 = vmatpush1.msra.mxu0 0.0
  %819 = vmatprep.subr.mxu0 0.0
  %820 = vmatpush1.msra.mxu0 0.0
  %821 = vmatprep.subr.mxu0 0.0
  %822 = vmatpush1.msra.mxu0 0.0
  %823 = vmatprep.subr.mxu0 0.0
  %824 = vmatpush1.msra.mxu0 0.0
  %825 = vmatprep.subr.mxu0 0.0
  %826 = vmatpush1.msra.mxu0 0.0
  %827 = vmatprep.subr.mxu0 0.0
  %828 = vmatpush1.msra.mxu0 0.0
  %829 = vmatprep.subr.mxu0 0.0
  %830 = vmatpush1.msra.mxu0 0.0
  %831 = vmatprep.subr.mxu0 0.0
  %832 = vmatpush1.msra.mxu0 0.0
  %833 = vmatprep.subr.mxu0 0.0
  %834 = vmatpush1.msra.mxu0 0.0
  %835 = vmatprep.subr.mxu0 0.0
  %836 = vmatpush1.msra.mxu0 0.0
  %837 = vmatprep.subr.mxu0 0.0
  %838 = vmatpush1.msra.mxu0 0.0
  %839 = vmatprep.subr.mxu0 0.0
  %840 = vmatpush1.msra.mxu0 0.0
  %841 = vmatprep.subr.mxu0 0.0
  %842 = vmatpush1.msra.mxu0 0.0
  %843 = vmatprep.subr.mxu0 0.0
  %844 = vmatpush1.msra.mxu0 0.0
  %845 = vmatprep.subr.mxu0 0.0
  %846 = vmatpush1.msra.mxu0 0.0
  %847 = vmatprep.subr.mxu0 0.0
  %848 = vmatpush1.msra.mxu0 0.0
  %849 = vmatprep.subr.mxu0 0.0
  %850 = vmatpush1.msra.mxu0 0.0
  %851 = vmatprep.subr.mxu0 0.0
  %852 = vmatpush1.msra.mxu0 0.0
  %853 = vmatprep.mubr.f32.mxu0 0.0
  %854 = vmatmul.mubr.f32.gmra.mrb[0].mxu0 %v689
  %v855 = vpop.f32.mrb[0].mxu0
  %v856 = vadd.f32 %v767, %v855
  %v857 = vpop.f32.mrb[0].mxu0
  %v858 = vadd.f32 %v769, %v857
  %859 = vmatprep.mubr.f32.mxu0 0.0
  %860 = vmatmul.mubr.f32.gmra.mrb[0].mxu0 %v692
  %v861 = vpop.f32.mrb[0].mxu0
  %v862 = vadd.f32 %v773, %v861
  %v863 = vpop.f32.mrb[0].mxu0
  %v864 = vadd.f32 %v775, %v863
  %865 = vmatprep.mubr.f32.mxu0 0.0
  %866 = vmatmul.mubr.f32.gmra.mrb[0].mxu0 %v695
  %v867 = vpop.f32.mrb[0].mxu0
  %v868 = vadd.f32 %v779, %v867
  %v869 = vpop.f32.mrb[0].mxu0
  %v870 = vadd.f32 %v781, %v869
  %871 = vmatprep.mubr.f32.mxu0 0.0
  %872 = vmatmul.mubr.f32.gmra.mrb[0].mxu0 %v698
  %v873 = vpop.f32.mrb[0].mxu0
  %v874 = vadd.f32 %v785, %v873
  %v875 = vpop.f32.mrb[0].mxu0
  %v876 = vadd.f32 %v787, %v875
  %877 = vdwg.mxu0
  %v878 = vld [vmem:[%s3] sm:$0xff]
  %v879 = vld [vmem:[%s3 + $0x8] sm:$0xff]
  %v880 = vld [vmem:[%s3 + $0x10] sm:$0xff]
  %v881 = vld [vmem:[%s3 + $0x18] sm:$0xff]
  %v882 = vld [vmem:[%s3 + $0x20] sm:$0xff]
  %v883 = vld [vmem:[%s3 + $0x28] sm:$0xff]
  %v884 = vld [vmem:[%s3 + $0x30] sm:$0xff]
  %v885 = vld [vmem:[%s3 + $0x38] sm:$0xff]
  %v886 = vld [vmem:[%s3 + $0x40] sm:$0xff]
  %v887 = vld [vmem:[%s3 + $0x48] sm:$0xff]
  %v888 = vld [vmem:[%s3 + $0x50] sm:$0xff]
  %v889 = vld [vmem:[%s3 + $0x58] sm:$0xff]
  %v890 = vld [vmem:[%s4] sm:$0xff]
  %v891 = vld [vmem:[%s4 + $0x8] sm:$0xff]
  %v892 = vld [vmem:[%s4 + $0x10] sm:$0xff]
  %v893 = vld [vmem:[%s4 + $0x18] sm:$0xff]
  %895 = vset.pattern.permute.xlu0 0
  %896 = vperm.xlu0 %895, %v890
  %v897 = vpop.permute.xlu0 %896
  %900 = vset.pattern.permute.xlu0 0
  %901 = vperm.xlu0 %900, %v891
  %v902 = vpop.permute.xlu0 %901
  %905 = vset.pattern.permute.xlu0 0
  %906 = vperm.xlu0 %905, %v892
  %v907 = vpop.permute.xlu0 %906
  %910 = vset.pattern.permute.xlu0 0
  %911 = vperm.xlu0 %910, %v893
  %v912 = vpop.permute.xlu0 %911
  %v915 = vsel %vm130, %v880, 0
  %v918 = vsel %vm130, %v883, 0
  %v921 = vsel %vm130, %v886, 0
  %v924 = vsel %vm130, %v889, 0
  %926 = vmatprep.subr.mxu0 %v581
  %927 = vmatpush1.msra.mxu0 %v580
  %928 = vmatprep.subr.mxu0 %v583
  %929 = vmatpush1.msra.mxu0 %v582
  %930 = vmatprep.subr.mxu0 %v585
  %931 = vmatpush1.msra.mxu0 %v584
  %932 = vmatprep.subr.mxu0 %v587
  %933 = vmatpush1.msra.mxu0 %v586
  %934 = vmatprep.subr.mxu0 %v589
  %935 = vmatpush1.msra.mxu0 %v588
  %936 = vmatprep.subr.mxu0 %v591
  %937 = vmatpush1.msra.mxu0 %v590
  %938 = vmatprep.subr.mxu0 %v593
  %939 = vmatpush1.msra.mxu0 %v592
  %940 = vmatprep.subr.mxu0 %v595
  %941 = vmatpush1.msra.mxu0 %v594
  %942 = vmatprep.subr.mxu0 %v597
  %943 = vmatpush1.msra.mxu0 %v596
  %944 = vmatprep.subr.mxu0 %v599
  %945 = vmatpush1.msra.mxu0 %v598
  %946 = vmatprep.subr.mxu0 %v601
  %947 = vmatpush1.msra.mxu0 %v600
  %948 = vmatprep.subr.mxu0 %v603
  %949 = vmatpush1.msra.mxu0 %v602
  %950 = vmatprep.subr.mxu0 %v605
  %951 = vmatpush1.msra.mxu0 %v604
  %952 = vmatprep.subr.mxu0 %v607
  %953 = vmatpush1.msra.mxu0 %v606
  %954 = vmatprep.subr.mxu0 %v609
  %955 = vmatpush1.msra.mxu0 %v608
  %956 = vmatprep.subr.mxu0 %v611
  %957 = vmatpush1.msra.mxu0 %v610
  %958 = vmatprep.subr.mxu0 %v613
  %959 = vmatpush1.msra.mxu0 %v612
  %960 = vmatprep.subr.mxu0 %v615
  %961 = vmatpush1.msra.mxu0 %v614
  %962 = vmatprep.subr.mxu0 %v617
  %963 = vmatpush1.msra.mxu0 %v616
  %964 = vmatprep.subr.mxu0 %v619
  %965 = vmatpush1.msra.mxu0 %v618
  %966 = vmatprep.subr.mxu0 %v621
  %967 = vmatpush1.msra.mxu0 %v620
  %968 = vmatprep.subr.mxu0 %v623
  %969 = vmatpush1.msra.mxu0 %v622
  %970 = vmatprep.subr.mxu0 %v625
  %971 = vmatpush1.msra.mxu0 %v624
  %972 = vmatprep.subr.mxu0 %v627
  %973 = vmatpush1.msra.mxu0 %v626
  %974 = vmatprep.subr.mxu0 %v629
  %975 = vmatpush1.msra.mxu0 %v628
  %976 = vmatprep.subr.mxu0 %v631
  %977 = vmatpush1.msra.mxu0 %v630
  %978 = vmatprep.subr.mxu0 %v633
  %979 = vmatpush1.msra.mxu0 %v632
  %980 = vmatprep.subr.mxu0 %v635
  %981 = vmatpush1.msra.mxu0 %v634
  %982 = vmatprep.subr.mxu0 %v637
  %983 = vmatpush1.msra.mxu0 %v636
  %984 = vmatprep.subr.mxu0 %v639
  %985 = vmatpush1.msra.mxu0 %v638
  %986 = vmatprep.subr.mxu0 %v641
  %987 = vmatpush1.msra.mxu0 %v640
  %988 = vmatprep.subr.mxu0 %v643
  %989 = vmatpush1.msra.mxu0 %v642
  %990 = vmatprep.mubr.f32.mxu0 %v879
  %991 = vmatmul.mubr.f32.gmra.mrb[0].mxu0 %v878
  %v992 = vpop.f32.mrb[0].mxu0
  %v993 = vadd.f32 %v897, %v992
  %v994 = vpop.f32.mrb[0].mxu0
  %v995 = vadd.f32 %v897, %v994
  %996 = vmatprep.mubr.f32.mxu0 %v882
  %997 = vmatmul.mubr.f32.gmra.mrb[0].mxu0 %v881
  %v998 = vpop.f32.mrb[0].mxu0
  %v999 = vadd.f32 %v902, %v998
  %v1000 = vpop.f32.mrb[0].mxu0
  %v1001 = vadd.f32 %v902, %v1000
  %1002 = vmatprep.mubr.f32.mxu0 %v885
  %1003 = vmatmul.mubr.f32.gmra.mrb[0].mxu0 %v884
  %v1004 = vpop.f32.mrb[0].mxu0
  %v1005 = vadd.f32 %v907, %v1004
  %v1006 = vpop.f32.mrb[0].mxu0
  %v1007 = vadd.f32 %v907, %v1006
  %1008 = vmatprep.mubr.f32.mxu0 %v888
  %1009 = vmatmul.mubr.f32.gmra.mrb[0].mxu0 %v887
  %v1010 = vpop.f32.mrb[0].mxu0
  %v1011 = vadd.f32 %v912, %v1010
  %v1012 = vpop.f32.mrb[0].mxu0
  %v1013 = vadd.f32 %v912, %v1012
  %1014 = vdwg.mxu0
  %1015 = vmatprep.subr.mxu0 %v645
  %1016 = vmatpush1.msra.mxu0 %v644
  %1017 = vmatprep.subr.mxu0 %v647
  %1018 = vmatpush1.msra.mxu0 %v646
  %1019 = vmatprep.subr.mxu0 %v649
  %1020 = vmatpush1.msra.mxu0 %v648
  %1021 = vmatprep.subr.mxu0 %v651
  %1022 = vmatpush1.msra.mxu0 %v650
  %1023 = vmatprep.subr.mxu0 0.0
  %1024 = vmatpush1.msra.mxu0 0.0
  %1025 = vmatprep.subr.mxu0 0.0
  %1026 = vmatpush1.msra.mxu0 0.0
  %1027 = vmatprep.subr.mxu0 0.0
  %1028 = vmatpush1.msra.mxu0 0.0
  %1029 = vmatprep.subr.mxu0 0.0
  %1030 = vmatpush1.msra.mxu0 0.0
  %1031 = vmatprep.subr.mxu0 0.0
  %1032 = vmatpush1.msra.mxu0 0.0
  %1033 = vmatprep.subr.mxu0 0.0
  %1034 = vmatpush1.msra.mxu0 0.0
  %1035 = vmatprep.subr.mxu0 0.0
  %1036 = vmatpush1.msra.mxu0 0.0
  %1037 = vmatprep.subr.mxu0 0.0
  %1038 = vmatpush1.msra.mxu0 0.0
  %1039 = vmatprep.subr.mxu0 0.0
  %1040 = vmatpush1.msra.mxu0 0.0
  %1041 = vmatprep.subr.mxu0 0.0
  %1042 = vmatpush1.msra.mxu0 0.0
  %1043 = vmatprep.subr.mxu0 0.0
  %1044 = vmatpush1.msra.mxu0 0.0
  %1045 = vmatprep.subr.mxu0 0.0
  %1046 = vmatpush1.msra.mxu0 0.0
  %1047 = vmatprep.subr.mxu0 0.0
  %1048 = vmatpush1.msra.mxu0 0.0
  %1049 = vmatprep.subr.mxu0 0.0
  %1050 = vmatpush1.msra.mxu0 0.0
  %1051 = vmatprep.subr.mxu0 0.0
  %1052 = vmatpush1.msra.mxu0 0.0
  %1053 = vmatprep.subr.mxu0 0.0
  %1054 = vmatpush1.msra.mxu0 0.0
  %1055 = vmatprep.subr.mxu0 0.0
  %1056 = vmatpush1.msra.mxu0 0.0
  %1057 = vmatprep.subr.mxu0 0.0
  %1058 = vmatpush1.msra.mxu0 0.0
  %1059 = vmatprep.subr.mxu0 0.0
  %1060 = vmatpush1.msra.mxu0 0.0
  %1061 = vmatprep.subr.mxu0 0.0
  %1062 = vmatpush1.msra.mxu0 0.0
  %1063 = vmatprep.subr.mxu0 0.0
  %1064 = vmatpush1.msra.mxu0 0.0
  %1065 = vmatprep.subr.mxu0 0.0
  %1066 = vmatpush1.msra.mxu0 0.0
  %1067 = vmatprep.subr.mxu0 0.0
  %1068 = vmatpush1.msra.mxu0 0.0
  %1069 = vmatprep.subr.mxu0 0.0
  %1070 = vmatpush1.msra.mxu0 0.0
  %1071 = vmatprep.subr.mxu0 0.0
  %1072 = vmatpush1.msra.mxu0 0.0
  %1073 = vmatprep.subr.mxu0 0.0
  %1074 = vmatpush1.msra.mxu0 0.0
  %1075 = vmatprep.subr.mxu0 0.0
  %1076 = vmatpush1.msra.mxu0 0.0
  %1077 = vmatprep.subr.mxu0 0.0
  %1078 = vmatpush1.msra.mxu0 0.0
  %1079 = vmatprep.mubr.f32.mxu0 0.0
  %1080 = vmatmul.mubr.f32.gmra.mrb[0].mxu0 %v915
  %v1081 = vpop.f32.mrb[0].mxu0
  %v1082 = vadd.f32 %v993, %v1081
  %v1083 = vpop.f32.mrb[0].mxu0
  %v1084 = vadd.f32 %v995, %v1083
  %1085 = vmatprep.mubr.f32.mxu0 0.0
  %1086 = vmatmul.mubr.f32.gmra.mrb[0].mxu0 %v918
  %v1087 = vpop.f32.mrb[0].mxu0
  %v1088 = vadd.f32 %v999, %v1087
  %v1089 = vpop.f32.mrb[0].mxu0
  %v1090 = vadd.f32 %v1001, %v1089
  %1091 = vmatprep.mubr.f32.mxu0 0.0
  %1092 = vmatmul.mubr.f32.gmra.mrb[0].mxu0 %v921
  %v1093 = vpop.f32.mrb[0].mxu0
  %v1094 = vadd.f32 %v1005, %v1093
  %v1095 = vpop.f32.mrb[0].mxu0
  %v1096 = vadd.f32 %v1007, %v1095
  %1097 = vmatprep.mubr.f32.mxu0 0.0
  %1098 = vmatmul.mubr.f32.gmra.mrb[0].mxu0 %v924
  %v1099 = vpop.f32.mrb[0].mxu0
  %v1100 = vadd.f32 %v1011, %v1099
  %v1101 = vpop.f32.mrb[0].mxu0
  %v1102 = vadd.f32 %v1013, %v1101
  %1103 = vdwg.mxu0
  %v1104 = vmax.f32 %v856, 0.0
  %v1105 = vmax.f32 %v858, 0.0
  %v1106 = vmax.f32 %v862, 0.0
  %v1107 = vmax.f32 %v864, 0.0
  %v1108 = vmax.f32 %v868, 0.0
  %v1109 = vmax.f32 %v870, 0.0
  %v1110 = vmax.f32 %v874, 0.0
  %v1111 = vmax.f32 %v876, 0.0
  %v1112 = vmax.f32 %v1082, 0.0
  %v1113 = vmax.f32 %v1084, 0.0
  %v1114 = vmax.f32 %v1088, 0.0
  %v1115 = vmax.f32 %v1090, 0.0
  %v1116 = vmax.f32 %v1094, 0.0
  %v1117 = vmax.f32 %v1096, 0.0
  %v1118 = vmax.f32 %v1100, 0.0
  %v1119 = vmax.f32 %v1102, 0.0
  %v1120 = vadd.f32 %v1104, %v1112
  %v1121 = vadd.f32 %v1105, %v1113
  %v1122 = vadd.f32 %v1106, %v1114
  %v1123 = vadd.f32 %v1107, %v1115
  %v1124 = vadd.f32 %v1108, %v1116
  %v1125 = vadd.f32 %v1109, %v1117
  %v1126 = vadd.f32 %v1110, %v1118
  %v1127 = vadd.f32 %v1111, %v1119
  %s1128 = scalar_lea.vmem %s5, 64
  %1129 = vst [vmem:[%s1128] sm:$0xff] %v1120
  %1130 = vst [vmem:[%s1128 + $0x8] sm:$0xff] %v1121
  %1131 = vst [vmem:[%s1128 + $0x10] sm:$0xff] %v1122
  %1132 = vst [vmem:[%s1128 + $0x18] sm:$0xff] %v1123
  %1133 = vst [vmem:[%s1128 + $0x20] sm:$0xff] %v1124
  %1134 = vst [vmem:[%s1128 + $0x28] sm:$0xff] %v1125
  %1135 = vst [vmem:[%s1128 + $0x30] sm:$0xff] %v1126
  %1136 = vst [vmem:[%s1128 + $0x38] sm:$0xff] %v1127
  %v1137 = vld [vmem:[%s5] sm:$0xff]
  %v1138 = vld [vmem:[%s5 + $0x8] sm:$0xff]
  %v1139 = vld [vmem:[%s5 + $0x10] sm:$0xff]
  %v1140 = vld [vmem:[%s5 + $0x18] sm:$0xff]
  %v1141 = vld [vmem:[%s5 + $0x20] sm:$0xff]
  %v1142 = vld [vmem:[%s5 + $0x28] sm:$0xff]
  %v1143 = vld [vmem:[%s5 + $0x30] sm:$0xff]
  %v1144 = vld [vmem:[%s5 + $0x38] sm:$0xff]
  %v1145 = vld [vmem:[%s5 + $0x40] sm:$0xff]
  %v1146 = vld [vmem:[%s5 + $0x48] sm:$0xff]
  %v1147 = vld [vmem:[%s5 + $0x50] sm:$0xff]
  %v1148 = vld [vmem:[%s5 + $0x58] sm:$0xff]
  %v1149 = vld [vmem:[%s5 + $0x60] sm:$0xff]
  %v1150 = vld [vmem:[%s5 + $0x68] sm:$0xff]
  %v1151 = vld [vmem:[%s5 + $0x70] sm:$0xff]
  %v1152 = vld [vmem:[%s5 + $0x78] sm:$0xff]
  %v1153 = vadd.f32 %v1137, %v1139
  %v1154 = vadd.f32 %v1153, %v1141
  %v1155 = vadd.f32 %v1154, %v1143
  %v1156 = vrot.slane %v1155, 4
  %v1157 = vadd.f32 %v1155, %v1156
  %v1158 = vrot.slane %v1157, 2
  %v1159 = vadd.f32 %v1157, %v1158
  %v1160 = vrot.slane %v1159, 1
  %v1161 = vadd.f32 %v1159, %v1160
  %v1162 = vadd.f32 %v1138, %v1140
  %v1163 = vadd.f32 %v1162, %v1142
  %v1164 = vadd.f32 %v1163, %v1144
  %v1165 = vrot.slane %v1164, 4
  %v1166 = vadd.f32 %v1164, %v1165
  %v1167 = vrot.slane %v1166, 2
  %v1168 = vadd.f32 %v1166, %v1167
  %v1169 = vrot.slane %v1168, 1
  %v1170 = vadd.f32 %v1168, %v1169
  %v1171 = vadd.f32 %v1145, %v1147
  %v1172 = vadd.f32 %v1171, %v1149
  %v1173 = vadd.f32 %v1172, %v1151
  %v1174 = vrot.slane %v1173, 4
  %v1175 = vadd.f32 %v1173, %v1174
  %v1176 = vrot.slane %v1175, 2
  %v1177 = vadd.f32 %v1175, %v1176
  %v1178 = vrot.slane %v1177, 1
  %v1179 = vadd.f32 %v1177, %v1178
  %v1180 = vadd.f32 %v1146, %v1148
  %v1181 = vadd.f32 %v1180, %v1150
  %v1182 = vadd.f32 %v1181, %v1152
  %v1183 = vrot.slane %v1182, 4
  %v1184 = vadd.f32 %v1182, %v1183
  %v1185 = vrot.slane %v1184, 2
  %v1186 = vadd.f32 %v1184, %v1185
  %v1187 = vrot.slane %v1186, 1
  %v1188 = vadd.f32 %v1186, %v1187
  %v1189 = vrcp.pop 32.0
  %v1190 = vmul.f32 %v1161, %v1189
  %v1191 = vmul.f32 %v1170, %v1189
  %v1192 = vmul.f32 %v1179, %v1189
  %v1193 = vmul.f32 %v1188, %v1189
  %v1194 = vmax.f32 %v1137, %v1139
  %v1195 = vmax.f32 %v1194, %v1141
  %v1196 = vmax.f32 %v1195, %v1143
  %v1197 = vrot.slane %v1196, 4
  %v1198 = vmax.f32 %v1196, %v1197
  %v1199 = vrot.slane %v1198, 2
  %v1200 = vmax.f32 %v1198, %v1199
  %v1201 = vrot.slane %v1200, 1
  %v1202 = vmax.f32 %v1200, %v1201
  %v1203 = vmax.f32 %v1138, %v1140
  %v1204 = vmax.f32 %v1203, %v1142
  %v1205 = vmax.f32 %v1204, %v1144
  %v1206 = vrot.slane %v1205, 4
  %v1207 = vmax.f32 %v1205, %v1206
  %v1208 = vrot.slane %v1207, 2
  %v1209 = vmax.f32 %v1207, %v1208
  %v1210 = vrot.slane %v1209, 1
  %v1211 = vmax.f32 %v1209, %v1210
  %v1212 = vmax.f32 %v1145, %v1147
  %v1213 = vmax.f32 %v1212, %v1149
  %v1214 = vmax.f32 %v1213, %v1151
  %v1215 = vrot.slane %v1214, 4
  %v1216 = vmax.f32 %v1214, %v1215
  %v1217 = vrot.slane %v1216, 2
  %v1218 = vmax.f32 %v1216, %v1217
  %v1219 = vrot.slane %v1218, 1
  %v1220 = vmax.f32 %v1218, %v1219
  %v1221 = vmax.f32 %v1146, %v1148
  %v1222 = vmax.f32 %v1221, %v1150
  %v1223 = vmax.f32 %v1222, %v1152
  %v1224 = vrot.slane %v1223, 4
  %v1225 = vmax.f32 %v1223, %v1224
  %v1226 = vrot.slane %v1225, 2
  %v1227 = vmax.f32 %v1225, %v1226
  %v1228 = vrot.slane %v1227, 1
  %v1229 = vmax.f32 %v1227, %v1228
  %v1230 = vlaneseq
  %v1231 = vshrl.u32 %v1230, 7
  %vm1232 = vcmp.eq.s32.totalorder %v1231, 0
  %v1233 = vsel %vm1232, %v1190, %v1202
  %v1234 = vsel %vm1232, %v1191, %v1211
  %v1235 = vsel %vm1232, %v1192, %v1220
  %v1236 = vsel %vm1232, %v1193, %v1229
  %v1241 = vcombine.low %v1233, %v1234
  %v1243 = vunpack.c.l.s4 1983009808
  %v1244 = vunpack.c.0.s8 %v1243
  %v1245 = vlaneseq
  %v1246 = vshrl.u32 %v1245, 7
  %v1247 = vsub.s32 %v1244, %v1246
  %v1248 = vrot.slane %v1241, %v1247
  %v1249 = vcombine.low %v1235, %v1236
  %v1251 = vunpack.c.l.s4 1983009808
  %v1252 = vunpack.c.0.s8 %v1251
  %v1253 = vlaneseq
  %v1254 = vshrl.u32 %v1253, 7
  %v1255 = vsub.s32 %v1252, %v1254
  %v1256 = vrot.slane %v1249, %v1255
  %1259 = vst [vmem:[%s6] sm:$0xf] %v1248
  %1260 = vst [vmem:[%s6 + $0x4] sm:$0xf] %v1256
  // Predicated region
  $region22: #{dual_path_attention_block.3} parent=0 // pred_check
    _
  $region23: #{dual_path_attention_block.3} parent=0 // pred_check_branch
    %1262 = sbr.rel (0) target = $region25
  $region24: #{dual_path_attention_block.3} parent=0 // pred_region
    _
  $region25: #{dual_path_attention_block.3} parent=0 // pred_fallthru
    _
  // Predicated region
  $region26: #{dual_path_attention_block.3} parent=0 // pred_check
    _
  $region27: #{dual_path_attention_block.3} parent=0 // pred_check_branch
    %1264 = sbr.rel (0) target = $region29
  $region28: #{dual_path_attention_block.3} parent=0 // pred_region
    _
  $region29: #{dual_path_attention_block.3} parent=0 // pred_fallthru
    _
  // Predicated region
  $region30: #{dual_path_attention_block.3} parent=0 // pred_check
    _
  $region31: #{dual_path_attention_block.3} parent=0 // pred_check_branch
    %1266 = sbr.rel (0) target = $region33
  $region32: #{dual_path_attention_block.3} parent=0 // pred_region
    _
  $region33: #{dual_path_attention_block.3} parent=0 // pred_fallthru
    _
  // Predicated region
  $region34: #{dual_path_attention_block.3} parent=0 // pred_check
    _
  $region35: #{dual_path_attention_block.3} parent=0 // pred_check_branch
    %1268 = sbr.rel (0) target = $region37
  $region36: #{dual_path_attention_block.3} parent=0 // pred_region
    _
  $region37: #{dual_path_attention_block.3} parent=0 // pred_fallthru
    _

// kernel: dual_path_attention_block.4
$region0: #{dual_path_attention_block.4}
  #allocation0 [shape = 'u32[]', space=smem, size = 0x4, offset = 0x4, fixed_abs, tag = 'smem constant byte address 0x4 - core index']
  #allocation1 [shape = 'u32[144,128]{1,0:T(1,128)}', space=vmem, size = 0x12000, scoped, tag = 'internal scratch']
  %s0 = inlined_call_operand.vmem [shape: f32[2,32,256], index: 0, kind: input, shape index: {}]
  %s1 = inlined_call_operand.vmem [shape: f32[2,98,256], index: 1, kind: input, shape index: {}]
  %s2 = inlined_call_operand.vmem [shape: f32[98,1], index: 2, kind: input, shape index: {}]
  %s3 = inlined_call_operand.vmem [shape: f32[2,32,256], index: 3, kind: output, shape index: {}]
  %s4 = sld [smem:[#allocation0]]
  $region22: #{dual_path_attention_block.4} parent=0
    _
  %s6 = ssub.s32 1, %s4
  %s7 = scalar_select 0, %s6, %s4
  // Predicated region
  $region2: #{dual_path_attention_block.4} parent=0 // pred_check
    _
  $region3: #{dual_path_attention_block.4} parent=0 // pred_check_branch
    %9 = sbr.rel (0) target = $region5
  $region4: #{dual_path_attention_block.4} parent=0 // pred_region
    _
  $region5: #{dual_path_attention_block.4} parent=0 // pred_fallthru
    _
  // Predicated region
  $region6: #{dual_path_attention_block.4} parent=0 // pred_check
    _
  $region7: #{dual_path_attention_block.4} parent=0 // pred_check_branch
    %11 = sbr.rel (0) target = $region9
  $region8: #{dual_path_attention_block.4} parent=0 // pred_region
    _
  $region9: #{dual_path_attention_block.4} parent=0 // pred_fallthru
    _
  // Predicated region
  $region10: #{dual_path_attention_block.4} parent=0 // pred_check
    _
  $region11: #{dual_path_attention_block.4} parent=0 // pred_check_branch
    %13 = sbr.rel (0) target = $region13
  $region12: #{dual_path_attention_block.4} parent=0 // pred_region
    _
  $region13: #{dual_path_attention_block.4} parent=0 // pred_fallthru
    _
  %v14 = vld [vmem:[%s2] sm:$0xff]
  %v15 = vld [vmem:[%s2 + $0x8] sm:$0xff]
  %v16 = vld [vmem:[%s2 + $0x10] sm:$0xff]
  %v17 = vld [vmem:[%s2 + $0x18] sm:$0xff]
  %v18 = vld [vmem:[%s2 + $0x20] sm:$0xff]
  %v19 = vld [vmem:[%s2 + $0x28] sm:$0xff]
  %v20 = vld [vmem:[%s2 + $0x30] sm:$0xff]
  %v21 = vld [vmem:[%s2 + $0x38] sm:$0xff]
  %v22 = vld [vmem:[%s2 + $0x40] sm:$0xff]
  %v23 = vld [vmem:[%s2 + $0x48] sm:$0xff]
  %v24 = vld [vmem:[%s2 + $0x50] sm:$0xff]
  %v25 = vld [vmem:[%s2 + $0x58] sm:$0xff]
  %v26 = vld [vmem:[%s2 + $0x60] sm:$0x3]
  %v27 = vld [vmem:[%s1] sm:$0xff]
  %v28 = vld [vmem:[%s1 + $0x8] sm:$0xff]
  %v29 = vld [vmem:[%s1 + $0x10] sm:$0xff]
  %v30 = vld [vmem:[%s1 + $0x18] sm:$0xff]
  %v31 = vld [vmem:[%s1 + $0x20] sm:$0xff]
  %v32 = vld [vmem:[%s1 + $0x28] sm:$0xff]
  %v33 = vld [vmem:[%s1 + $0x30] sm:$0xff]
  %v34 = vld [vmem:[%s1 + $0x38] sm:$0xff]
  %v35 = vld [vmem:[%s1 + $0x40] sm:$0xff]
  %v36 = vld [vmem:[%s1 + $0x48] sm:$0xff]
  %v37 = vld [vmem:[%s1 + $0x50] sm:$0xff]
  %v38 = vld [vmem:[%s1 + $0x58] sm:$0xff]
  %v39 = vld [vmem:[%s1 + $0x60] sm:$0xff]
  %v40 = vld [vmem:[%s1 + $0x68] sm:$0xff]
  %v41 = vld [vmem:[%s1 + $0x70] sm:$0xff]
  %v42 = vld [vmem:[%s1 + $0x78] sm:$0xff]
  %v43 = vld [vmem:[%s1 + $0x80] sm:$0xff]
  %v44 = vld [vmem:[%s1 + $0x88] sm:$0xff]
  %v45 = vld [vmem:[%s1 + $0x90] sm:$0xff]
  %v46 = vld [vmem:[%s1 + $0x98] sm:$0xff]
  %v47 = vld [vmem:[%s1 + $0xa0] sm:$0xff]
  %v48 = vld [vmem:[%s1 + $0xa8] sm:$0xff]
  %v49 = vld [vmem:[%s1 + $0xb0] sm:$0xff]
  %v50 = vld [vmem:[%s1 + $0xb8] sm:$0xff]
  %v51 = vld [vmem:[%s1 + $0xc0] sm:$0x3]
  %v52 = vld [vmem:[%s1 + $0xc8] sm:$0x3]
  %v53 = vld [vmem:[%s1 + $0xd0] sm:$0xff]
  %v54 = vld [vmem:[%s1 + $0xd8] sm:$0xff]
  %v55 = vld [vmem:[%s1 + $0xe0] sm:$0xff]
  %v56 = vld [vmem:[%s1 + $0xe8] sm:$0xff]
  %v57 = vld [vmem:[%s1 + $0xf0] sm:$0xff]
  %v58 = vld [vmem:[%s1 + $0xf8] sm:$0xff]
  %v59 = vld [vmem:[%s1 + $0x100] sm:$0xff]
  %v60 = vld [vmem:[%s1 + $0x108] sm:$0xff]
  %v61 = vld [vmem:[%s1 + $0x110] sm:$0xff]
  %v62 = vld [vmem:[%s1 + $0x118] sm:$0xff]
  %v63 = vld [vmem:[%s1 + $0x120] sm:$0xff]
  %v64 = vld [vmem:[%s1 + $0x128] sm:$0xff]
  %v65 = vld [vmem:[%s1 + $0x130] sm:$0xff]
  %v66 = vld [vmem:[%s1 + $0x138] sm:$0xff]
  %v67 = vld [vmem:[%s1 + $0x140] sm:$0xff]
  %v68 = vld [vmem:[%s1 + $0x148] sm:$0xff]
  %v69 = vld [vmem:[%s1 + $0x150] sm:$0xff]
  %v70 = vld [vmem:[%s1 + $0x158] sm:$0xff]
  %v71 = vld [vmem:[%s1 + $0x160] sm:$0xff]
  %v72 = vld [vmem:[%s1 + $0x168] sm:$0xff]
  %v73 = vld [vmem:[%s1 + $0x170] sm:$0xff]
  %v74 = vld [vmem:[%s1 + $0x178] sm:$0xff]
  %v75 = vld [vmem:[%s1 + $0x180] sm:$0xff]
  %v76 = vld [vmem:[%s1 + $0x188] sm:$0xff]
  %v77 = vld [vmem:[%s1 + $0x190] sm:$0x3]
  %v78 = vld [vmem:[%s1 + $0x198] sm:$0x3]
  %80 = vset.pattern.permute.xlu0 0
  %81 = vperm.xlu0 %80, %v14
  %v82 = vpop.permute.xlu0 %81
  %85 = vset.pattern.permute.xlu0 0
  %86 = vperm.xlu0 %85, %v15
  %v87 = vpop.permute.xlu0 %86
  %90 = vset.pattern.permute.xlu0 0
  %91 = vperm.xlu0 %90, %v16
  %v92 = vpop.permute.xlu0 %91
  %95 = vset.pattern.permute.xlu0 0
  %96 = vperm.xlu0 %95, %v17
  %v97 = vpop.permute.xlu0 %96
  %100 = vset.pattern.permute.xlu0 0
  %101 = vperm.xlu0 %100, %v18
  %v102 = vpop.permute.xlu0 %101
  %105 = vset.pattern.permute.xlu0 0
  %106 = vperm.xlu0 %105, %v19
  %v107 = vpop.permute.xlu0 %106
  %110 = vset.pattern.permute.xlu0 0
  %111 = vperm.xlu0 %110, %v20
  %v112 = vpop.permute.xlu0 %111
  %115 = vset.pattern.permute.xlu0 0
  %116 = vperm.xlu0 %115, %v21
  %v117 = vpop.permute.xlu0 %116
  %120 = vset.pattern.permute.xlu0 0
  %121 = vperm.xlu0 %120, %v22
  %v122 = vpop.permute.xlu0 %121
  %125 = vset.pattern.permute.xlu0 0
  %126 = vperm.xlu0 %125, %v23
  %v127 = vpop.permute.xlu0 %126
  %130 = vset.pattern.permute.xlu0 0
  %131 = vperm.xlu0 %130, %v24
  %v132 = vpop.permute.xlu0 %131
  %135 = vset.pattern.permute.xlu0 0
  %136 = vperm.xlu0 %135, %v25
  %v137 = vpop.permute.xlu0 %136
  %140 = vset.pattern.permute.xlu0 0
  %141 = vperm.xlu0 %140, %v26
  %v142 = vpop.permute.xlu0 %141
  %v144 = vmul.f32 %v82, %v27
  %v145 = vmul.f32 %v82, %v28
  %v146 = vmul.f32 %v87, %v29
  %v147 = vmul.f32 %v87, %v30
  %v148 = vmul.f32 %v92, %v31
  %v149 = vmul.f32 %v92, %v32
  %v150 = vmul.f32 %v97, %v33
  %v151 = vmul.f32 %v97, %v34
  %v152 = vmul.f32 %v102, %v35
  %v153 = vmul.f32 %v102, %v36
  %v154 = vmul.f32 %v107, %v37
  %v155 = vmul.f32 %v107, %v38
  %v156 = vmul.f32 %v112, %v39
  %v157 = vmul.f32 %v112, %v40
  %v158 = vmul.f32 %v117, %v41
  %v159 = vmul.f32 %v117, %v42
  %v160 = vmul.f32 %v122, %v43
  %v161 = vmul.f32 %v122, %v44
  %v162 = vmul.f32 %v127, %v45
  %v163 = vmul.f32 %v127, %v46
  %v164 = vmul.f32 %v132, %v47
  %v165 = vmul.f32 %v132, %v48
  %v166 = vmul.f32 %v137, %v49
  %v167 = vmul.f32 %v137, %v50
  %v168 = vmul.f32 %v142, %v51
  %v169 = vmul.f32 %v142, %v52
  %v170 = vmul.f32 %v82, %v53
  %v171 = vmul.f32 %v82, %v54
  %v172 = vmul.f32 %v87, %v55
  %v173 = vmul.f32 %v87, %v56
  %v174 = vmul.f32 %v92, %v57
  %v175 = vmul.f32 %v92, %v58
  %v176 = vmul.f32 %v97, %v59
  %v177 = vmul.f32 %v97, %v60
  %v178 = vmul.f32 %v102, %v61
  %v179 = vmul.f32 %v102, %v62
  %v180 = vmul.f32 %v107, %v63
  %v181 = vmul.f32 %v107, %v64
  %v182 = vmul.f32 %v112, %v65
  %v183 = vmul.f32 %v112, %v66
  %v184 = vmul.f32 %v117, %v67
  %v185 = vmul.f32 %v117, %v68
  %v186 = vmul.f32 %v122, %v69
  %v187 = vmul.f32 %v122, %v70
  %v188 = vmul.f32 %v127, %v71
  %v189 = vmul.f32 %v127, %v72
  %v190 = vmul.f32 %v132, %v73
  %v191 = vmul.f32 %v132, %v74
  %v192 = vmul.f32 %v137, %v75
  %v193 = vmul.f32 %v137, %v76
  %v194 = vmul.f32 %v142, %v77
  %v195 = vmul.f32 %v142, %v78
  %v196 = vadd.f32 %v144, %v146
  %v197 = vadd.f32 %v196, %v148
  %v198 = vadd.f32 %v197, %v150
  %v199 = vadd.f32 %v198, %v152
  %v200 = vadd.f32 %v199, %v154
  %v201 = vadd.f32 %v200, %v156
  %v202 = vadd.f32 %v201, %v158
  %v203 = vadd.f32 %v202, %v160
  %v204 = vadd.f32 %v203, %v162
  %v205 = vadd.f32 %v204, %v164
  %v206 = vadd.f32 %v205, %v166
  %vm207 = vcmask 1041408
  %v208 = vsel %vm207, %v168, 0.0
  %v209 = vadd.f32 %v206, %v208
  %v210 = vrot.slane %v209, 4
  %v211 = vadd.f32 %v209, %v210
  %v212 = vrot.slane %v211, 2
  %v213 = vadd.f32 %v211, %v212
  %v214 = vrot.slane %v213, 1
  %v215 = vadd.f32 %v213, %v214
  %v216 = vadd.f32 %v145, %v147
  %v217 = vadd.f32 %v216, %v149
  %v218 = vadd.f32 %v217, %v151
  %v219 = vadd.f32 %v218, %v153
  %v220 = vadd.f32 %v219, %v155
  %v221 = vadd.f32 %v220, %v157
  %v222 = vadd.f32 %v221, %v159
  %v223 = vadd.f32 %v222, %v161
  %v224 = vadd.f32 %v223, %v163
  %v225 = vadd.f32 %v224, %v165
  %v226 = vadd.f32 %v225, %v167
  %v227 = vsel %vm207, %v169, 0.0
  %v228 = vadd.f32 %v226, %v227
  %v229 = vrot.slane %v228, 4
  %v230 = vadd.f32 %v228, %v229
  %v231 = vrot.slane %v230, 2
  %v232 = vadd.f32 %v230, %v231
  %v233 = vrot.slane %v232, 1
  %v234 = vadd.f32 %v232, %v233
  %v235 = vadd.f32 %v170, %v172
  %v236 = vadd.f32 %v235, %v174
  %v237 = vadd.f32 %v236, %v176
  %v238 = vadd.f32 %v237, %v178
  %v239 = vadd.f32 %v238, %v180
  %v240 = vadd.f32 %v239, %v182
  %v241 = vadd.f32 %v240, %v184
  %v242 = vadd.f32 %v241, %v186
  %v243 = vadd.f32 %v242, %v188
  %v244 = vadd.f32 %v243, %v190
  %v245 = vadd.f32 %v244, %v192
  %v246 = vsel %vm207, %v194, 0.0
  %v247 = vadd.f32 %v245, %v246
  %v248 = vrot.slane %v247, 4
  %v249 = vadd.f32 %v247, %v248
  %v250 = vrot.slane %v249, 2
  %v251 = vadd.f32 %v249, %v250
  %v252 = vrot.slane %v251, 1
  %v253 = vadd.f32 %v251, %v252
  %v254 = vadd.f32 %v171, %v173
  %v255 = vadd.f32 %v254, %v175
  %v256 = vadd.f32 %v255, %v177
  %v257 = vadd.f32 %v256, %v179
  %v258 = vadd.f32 %v257, %v181
  %v259 = vadd.f32 %v258, %v183
  %v260 = vadd.f32 %v259, %v185
  %v261 = vadd.f32 %v260, %v187
  %v262 = vadd.f32 %v261, %v189
  %v263 = vadd.f32 %v262, %v191
  %v264 = vadd.f32 %v263, %v193
  %v265 = vsel %vm207, %v195, 0.0
  %v266 = vadd.f32 %v264, %v265
  %v267 = vrot.slane %v266, 4
  %v268 = vadd.f32 %v266, %v267
  %v269 = vrot.slane %v268, 2
  %v270 = vadd.f32 %v268, %v269
  %v271 = vrot.slane %v270, 1
  %v272 = vadd.f32 %v270, %v271
  %v273 = vld [vmem:[%s0] sm:$0xff]
  %v274 = vld [vmem:[%s0 + $0x8] sm:$0xff]
  %v275 = vld [vmem:[%s0 + $0x10] sm:$0xff]
  %v276 = vld [vmem:[%s0 + $0x18] sm:$0xff]
  %v277 = vld [vmem:[%s0 + $0x20] sm:$0xff]
  %v278 = vld [vmem:[%s0 + $0x28] sm:$0xff]
  %v279 = vld [vmem:[%s0 + $0x30] sm:$0xff]
  %v280 = vld [vmem:[%s0 + $0x38] sm:$0xff]
  %v281 = vld [vmem:[%s0 + $0x40] sm:$0xff]
  %v282 = vld [vmem:[%s0 + $0x48] sm:$0xff]
  %v283 = vld [vmem:[%s0 + $0x50] sm:$0xff]
  %v284 = vld [vmem:[%s0 + $0x58] sm:$0xff]
  %v285 = vld [vmem:[%s0 + $0x60] sm:$0xff]
  %v286 = vld [vmem:[%s0 + $0x68] sm:$0xff]
  %v287 = vld [vmem:[%s0 + $0x70] sm:$0xff]
  %v288 = vld [vmem:[%s0 + $0x78] sm:$0xff]
  %v289 = vxor.u32 %v215, 2147483648
  %v290 = vxor.u32 %v234, 2147483648
  %v291 = vxor.u32 %v253, 2147483648
  %v292 = vxor.u32 %v272, 2147483648
  %v293 = vmul.f32 %v289, 1.442695
  %v294 = vpow.pop %v293
  %v295 = vmul.f32 %v290, 1.442695
  %v296 = vpow.pop %v295
  %v297 = vmul.f32 %v291, 1.442695
  %v298 = vpow.pop %v297
  %v299 = vmul.f32 %v292, 1.442695
  %v300 = vpow.pop %v299
  %v301 = vadd.f32 %v294, 1.0
  %v302 = vadd.f32 %v296, 1.0
  %v303 = vadd.f32 %v298, 1.0
  %v304 = vadd.f32 %v300, 1.0
  %v305 = vrcp.pop %v301
  %v306 = vmul.f32 1.0, %v305
  %v307 = vrcp.pop %v302
  %v308 = vmul.f32 1.0, %v307
  %v309 = vrcp.pop %v303
  %v310 = vmul.f32 1.0, %v309
  %v311 = vrcp.pop %v304
  %v312 = vmul.f32 1.0, %v311
  %v313 = vmul.f32 %v273, %v306
  %v314 = vmul.f32 %v274, %v308
  %v315 = vmul.f32 %v275, %v306
  %v316 = vmul.f32 %v276, %v308
  %v317 = vmul.f32 %v277, %v306
  %v318 = vmul.f32 %v278, %v308
  %v319 = vmul.f32 %v279, %v306
  %v320 = vmul.f32 %v280, %v308
  %v321 = vmul.f32 %v281, %v310
  %v322 = vmul.f32 %v282, %v312
  %v323 = vmul.f32 %v283, %v310
  %v324 = vmul.f32 %v284, %v312
  %v325 = vmul.f32 %v285, %v310
  %v326 = vmul.f32 %v286, %v312
  %v327 = vmul.f32 %v287, %v310
  %v328 = vmul.f32 %v288, %v312
  %329 = vst [vmem:[%s3] sm:$0xff] %v313
  %330 = vst [vmem:[%s3 + $0x8] sm:$0xff] %v314
  %331 = vst [vmem:[%s3 + $0x10] sm:$0xff] %v315
  %332 = vst [vmem:[%s3 + $0x18] sm:$0xff] %v316
  %333 = vst [vmem:[%s3 + $0x20] sm:$0xff] %v317
  %334 = vst [vmem:[%s3 + $0x28] sm:$0xff] %v318
  %335 = vst [vmem:[%s3 + $0x30] sm:$0xff] %v319
  %336 = vst [vmem:[%s3 + $0x38] sm:$0xff] %v320
  %337 = vst [vmem:[%s3 + $0x40] sm:$0xff] %v321
  %338 = vst [vmem:[%s3 + $0x48] sm:$0xff] %v322
  %339 = vst [vmem:[%s3 + $0x50] sm:$0xff] %v323
  %340 = vst [vmem:[%s3 + $0x58] sm:$0xff] %v324
  %341 = vst [vmem:[%s3 + $0x60] sm:$0xff] %v325
  %342 = vst [vmem:[%s3 + $0x68] sm:$0xff] %v326
  %343 = vst [vmem:[%s3 + $0x70] sm:$0xff] %v327
  %344 = vst [vmem:[%s3 + $0x78] sm:$0xff] %v328
  // Predicated region
  $region14: #{dual_path_attention_block.4} parent=0 // pred_check
    _
  $region15: #{dual_path_attention_block.4} parent=0 // pred_check_branch
    %346 = sbr.rel (0) target = $region17
  $region16: #{dual_path_attention_block.4} parent=0 // pred_region
    _
  $region17: #{dual_path_attention_block.4} parent=0 // pred_fallthru
    _
  // Predicated region
  $region18: #{dual_path_attention_block.4} parent=0 // pred_check
    _
  $region19: #{dual_path_attention_block.4} parent=0 // pred_check_branch
    %348 = sbr.rel (0) target = $region21
  $region20: #{dual_path_attention_block.4} parent=0 // pred_region
    _
  $region21: #{dual_path_attention_block.4} parent=0 // pred_fallthru
    _

// kernel: dual_path_attention_block.5
$region0: #{dual_path_attention_block.5}
  #allocation0 [shape = 'u32[]', space=smem, size = 0x4, offset = 0x4, fixed_abs, tag = 'smem constant byte address 0x4 - core index']
  #allocation1 [shape = 'u32[144,128]{1,0:T(1,128)}', space=vmem, size = 0x12000, scoped, tag = 'internal scratch']
  %s0 = inlined_call_operand.vmem [shape: f32[2,288,256], index: 0, kind: input, shape index: {}]
  %s1 = inlined_call_operand.vmem [shape: f32[32,288], index: 1, kind: input, shape index: {}]
  %s2 = inlined_call_operand.vmem [shape: f32[32,1], index: 2, kind: input, shape index: {}]
  %s3 = inlined_call_operand.vmem [shape: f32[32,288], index: 3, kind: input, shape index: {}]
  %s4 = inlined_call_operand.vmem [shape: f32[32,1], index: 4, kind: input, shape index: {}]
  %s5 = inlined_call_operand.vmem [shape: f32[32,2], index: 5, kind: input, shape index: {}]
  %s6 = inlined_call_operand.vmem [shape: f32[32,2], index: 6, kind: input, shape index: {}]
  %s7 = inlined_call_operand.vmem [shape: f32[2,32,256], index: 7, kind: input, shape index: {}]
  %s8 = inlined_call_operand.vmem [shape: f32[2,32,256], index: 8, kind: output, shape index: {}]
  %s9 = sld [smem:[#allocation0]]
  $region42: #{dual_path_attention_block.5} parent=0
    _
  %s11 = ssub.s32 1, %s9
  %s12 = scalar_select 0, %s11, %s9
  // Predicated region
  $region2: #{dual_path_attention_block.5} parent=0 // pred_check
    _
  $region3: #{dual_path_attention_block.5} parent=0 // pred_check_branch
    %14 = sbr.rel (0) target = $region5
  $region4: #{dual_path_attention_block.5} parent=0 // pred_region
    _
  $region5: #{dual_path_attention_block.5} parent=0 // pred_fallthru
    _
  // Predicated region
  $region6: #{dual_path_attention_block.5} parent=0 // pred_check
    _
  $region7: #{dual_path_attention_block.5} parent=0 // pred_check_branch
    %16 = sbr.rel (0) target = $region9
  $region8: #{dual_path_attention_block.5} parent=0 // pred_region
    _
  $region9: #{dual_path_attention_block.5} parent=0 // pred_fallthru
    _
  // Predicated region
  $region10: #{dual_path_attention_block.5} parent=0 // pred_check
    _
  $region11: #{dual_path_attention_block.5} parent=0 // pred_check_branch
    %18 = sbr.rel (0) target = $region13
  $region12: #{dual_path_attention_block.5} parent=0 // pred_region
    _
  $region13: #{dual_path_attention_block.5} parent=0 // pred_fallthru
    _
  // Predicated region
  $region14: #{dual_path_attention_block.5} parent=0 // pred_check
    _
  $region15: #{dual_path_attention_block.5} parent=0 // pred_check_branch
    %20 = sbr.rel (0) target = $region17
  $region16: #{dual_path_attention_block.5} parent=0 // pred_region
    _
  $region17: #{dual_path_attention_block.5} parent=0 // pred_fallthru
    _
  // Predicated region
  $region18: #{dual_path_attention_block.5} parent=0 // pred_check
    _
  $region19: #{dual_path_attention_block.5} parent=0 // pred_check_branch
    %22 = sbr.rel (0) target = $region21
  $region20: #{dual_path_attention_block.5} parent=0 // pred_region
    _
  $region21: #{dual_path_attention_block.5} parent=0 // pred_fallthru
    _
  // Predicated region
  $region22: #{dual_path_attention_block.5} parent=0 // pred_check
    _
  $region23: #{dual_path_attention_block.5} parent=0 // pred_check_branch
    %24 = sbr.rel (0) target = $region25
  $region24: #{dual_path_attention_block.5} parent=0 // pred_region
    _
  $region25: #{dual_path_attention_block.5} parent=0 // pred_fallthru
    _
  // Predicated region
  $region26: #{dual_path_attention_block.5} parent=0 // pred_check
    _
  $region27: #{dual_path_attention_block.5} parent=0 // pred_check_branch
    %26 = sbr.rel (0) target = $region29
  $region28: #{dual_path_attention_block.5} parent=0 // pred_region
    _
  $region29: #{dual_path_attention_block.5} parent=0 // pred_fallthru
    _
  // Predicated region
  $region30: #{dual_path_attention_block.5} parent=0 // pred_check
    _
  $region31: #{dual_path_attention_block.5} parent=0 // pred_check_branch
    %28 = sbr.rel (0) target = $region33
  $region32: #{dual_path_attention_block.5} parent=0 // pred_region
    _
  $region33: #{dual_path_attention_block.5} parent=0 // pred_fallthru
    _
  %v29 = vld [vmem:[%s0] sm:$0xff]
  %v30 = vld [vmem:[%s0 + $0x8] sm:$0xff]
  %v31 = vld [vmem:[%s0 + $0x10] sm:$0xff]
  %v32 = vld [vmem:[%s0 + $0x18] sm:$0xff]
  %v33 = vld [vmem:[%s0 + $0x20] sm:$0xff]
  %v34 = vld [vmem:[%s0 + $0x28] sm:$0xff]
  %v35 = vld [vmem:[%s0 + $0x30] sm:$0xff]
  %v36 = vld [vmem:[%s0 + $0x38] sm:$0xff]
  %v37 = vld [vmem:[%s0 + $0x40] sm:$0xff]
  %v38 = vld [vmem:[%s0 + $0x48] sm:$0xff]
  %v39 = vld [vmem:[%s0 + $0x50] sm:$0xff]
  %v40 = vld [vmem:[%s0 + $0x58] sm:$0xff]
  %v41 = vld [vmem:[%s0 + $0x60] sm:$0xff]
  %v42 = vld [vmem:[%s0 + $0x68] sm:$0xff]
  %v43 = vld [vmem:[%s0 + $0x70] sm:$0xff]
  %v44 = vld [vmem:[%s0 + $0x78] sm:$0xff]
  %v45 = vld [vmem:[%s0 + $0x80] sm:$0xff]
  %v46 = vld [vmem:[%s0 + $0x88] sm:$0xff]
  %v47 = vld [vmem:[%s0 + $0x90] sm:$0xff]
  %v48 = vld [vmem:[%s0 + $0x98] sm:$0xff]
  %v49 = vld [vmem:[%s0 + $0xa0] sm:$0xff]
  %v50 = vld [vmem:[%s0 + $0xa8] sm:$0xff]
  %v51 = vld [vmem:[%s0 + $0xb0] sm:$0xff]
  %v52 = vld [vmem:[%s0 + $0xb8] sm:$0xff]
  %v53 = vld [vmem:[%s0 + $0xc0] sm:$0xff]
  %v54 = vld [vmem:[%s0 + $0xc8] sm:$0xff]
  %v55 = vld [vmem:[%s0 + $0xd0] sm:$0xff]
  %v56 = vld [vmem:[%s0 + $0xd8] sm:$0xff]
  %v57 = vld [vmem:[%s0 + $0xe0] sm:$0xff]
  %v58 = vld [vmem:[%s0 + $0xe8] sm:$0xff]
  %v59 = vld [vmem:[%s0 + $0xf0] sm:$0xff]
  %v60 = vld [vmem:[%s0 + $0xf8] sm:$0xff]
  %v61 = vld [vmem:[%s0 + $0x100] sm:$0xff]
  %v62 = vld [vmem:[%s0 + $0x108] sm:$0xff]
  %v63 = vld [vmem:[%s0 + $0x110] sm:$0xff]
  %v64 = vld [vmem:[%s0 + $0x118] sm:$0xff]
  %v65 = vld [vmem:[%s0 + $0x120] sm:$0xff]
  %v66 = vld [vmem:[%s0 + $0x128] sm:$0xff]
  %v67 = vld [vmem:[%s0 + $0x130] sm:$0xff]
  %v68 = vld [vmem:[%s0 + $0x138] sm:$0xff]
  %v69 = vld [vmem:[%s0 + $0x140] sm:$0xff]
  %v70 = vld [vmem:[%s0 + $0x148] sm:$0xff]
  %v71 = vld [vmem:[%s0 + $0x150] sm:$0xff]
  %v72 = vld [vmem:[%s0 + $0x158] sm:$0xff]
  %v73 = vld [vmem:[%s0 + $0x160] sm:$0xff]
  %v74 = vld [vmem:[%s0 + $0x168] sm:$0xff]
  %v75 = vld [vmem:[%s0 + $0x170] sm:$0xff]
  %v76 = vld [vmem:[%s0 + $0x178] sm:$0xff]
  %v77 = vld [vmem:[%s0 + $0x180] sm:$0xff]
  %v78 = vld [vmem:[%s0 + $0x188] sm:$0xff]
  %v79 = vld [vmem:[%s0 + $0x190] sm:$0xff]
  %v80 = vld [vmem:[%s0 + $0x198] sm:$0xff]
  %v81 = vld [vmem:[%s0 + $0x1a0] sm:$0xff]
  %v82 = vld [vmem:[%s0 + $0x1a8] sm:$0xff]
  %v83 = vld [vmem:[%s0 + $0x1b0] sm:$0xff]
  %v84 = vld [vmem:[%s0 + $0x1b8] sm:$0xff]
  %v85 = vld [vmem:[%s0 + $0x1c0] sm:$0xff]
  %v86 = vld [vmem:[%s0 + $0x1c8] sm:$0xff]
  %v87 = vld [vmem:[%s0 + $0x1d0] sm:$0xff]
  %v88 = vld [vmem:[%s0 + $0x1d8] sm:$0xff]
  %v89 = vld [vmem:[%s0 + $0x1e0] sm:$0xff]
  %v90 = vld [vmem:[%s0 + $0x1e8] sm:$0xff]
  %v91 = vld [vmem:[%s0 + $0x1f0] sm:$0xff]
  %v92 = vld [vmem:[%s0 + $0x1f8] sm:$0xff]
  %v93 = vld [vmem:[%s0 + $0x200] sm:$0xff]
  %v94 = vld [vmem:[%s0 + $0x208] sm:$0xff]
  %v95 = vld [vmem:[%s0 + $0x210] sm:$0xff]
  %v96 = vld [vmem:[%s0 + $0x218] sm:$0xff]
  %v97 = vld [vmem:[%s0 + $0x220] sm:$0xff]
  %v98 = vld [vmem:[%s0 + $0x228] sm:$0xff]
  %v99 = vld [vmem:[%s0 + $0x230] sm:$0xff]
  %v100 = vld [vmem:[%s0 + $0x238] sm:$0xff]
  %v101 = vld [vmem:[%s1] sm:$0xff]
  %v102 = vld [vmem:[%s1 + $0x8] sm:$0xff]
  %v103 = vld [vmem:[%s1 + $0x10] sm:$0xff]
  %v104 = vld [vmem:[%s1 + $0x18] sm:$0xff]
  %v105 = vld [vmem:[%s1 + $0x20] sm:$0xff]
  %v106 = vld [vmem:[%s1 + $0x28] sm:$0xff]
  %v107 = vld [vmem:[%s1 + $0x30] sm:$0xff]
  %v108 = vld [vmem:[%s1 + $0x38] sm:$0xff]
  %v109 = vld [vmem:[%s1 + $0x40] sm:$0xff]
  %v110 = vld [vmem:[%s1 + $0x48] sm:$0xff]
  %v111 = vld [vmem:[%s1 + $0x50] sm:$0xff]
  %v112 = vld [vmem:[%s1 + $0x58] sm:$0xff]
  %v113 = vld [vmem:[%s2] sm:$0xff]
  %v114 = vld [vmem:[%s2 + $0x8] sm:$0xff]
  %v115 = vld [vmem:[%s2 + $0x10] sm:$0xff]
  %v116 = vld [vmem:[%s2 + $0x18] sm:$0xff]
  %118 = vset.pattern.permute.xlu0 0
  %119 = vperm.xlu0 %118, %v113
  %v120 = vpop.permute.xlu0 %119
  %123 = vset.pattern.permute.xlu0 0
  %124 = vperm.xlu0 %123, %v114
  %v125 = vpop.permute.xlu0 %124
  %128 = vset.pattern.permute.xlu0 0
  %129 = vperm.xlu0 %128, %v115
  %v130 = vpop.permute.xlu0 %129
  %133 = vset.pattern.permute.xlu0 0
  %134 = vperm.xlu0 %133, %v116
  %v135 = vpop.permute.xlu0 %134
  %vm137 = vcmask 261120
  %v139 = vsel %vm137, %v103, 0
  %v142 = vsel %vm137, %v106, 0
  %v145 = vsel %vm137, %v109, 0
  %v148 = vsel %vm137, %v112, 0
  %150 = vmatprep.subr.mxu0 %v30
  %151 = vmatpush1.msra.mxu0 %v29
  %152 = vmatprep.subr.mxu0 %v32
  %153 = vmatpush1.msra.mxu0 %v31
  %154 = vmatprep.subr.mxu0 %v34
  %155 = vmatpush1.msra.mxu0 %v33
  %156 = vmatprep.subr.mxu0 %v36
  %157 = vmatpush1.msra.mxu0 %v35
  %158 = vmatprep.subr.mxu0 %v38
  %159 = vmatpush1.msra.mxu0 %v37
  %160 = vmatprep.subr.mxu0 %v40
  %161 = vmatpush1.msra.mxu0 %v39
  %162 = vmatprep.subr.mxu0 %v42
  %163 = vmatpush1.msra.mxu0 %v41
  %164 = vmatprep.subr.mxu0 %v44
  %165 = vmatpush1.msra.mxu0 %v43
  %166 = vmatprep.subr.mxu0 %v46
  %167 = vmatpush1.msra.mxu0 %v45
  %168 = vmatprep.subr.mxu0 %v48
  %169 = vmatpush1.msra.mxu0 %v47
  %170 = vmatprep.subr.mxu0 %v50
  %171 = vmatpush1.msra.mxu0 %v49
  %172 = vmatprep.subr.mxu0 %v52
  %173 = vmatpush1.msra.mxu0 %v51
  %174 = vmatprep.subr.mxu0 %v54
  %175 = vmatpush1.msra.mxu0 %v53
  %176 = vmatprep.subr.mxu0 %v56
  %177 = vmatpush1.msra.mxu0 %v55
  %178 = vmatprep.subr.mxu0 %v58
  %179 = vmatpush1.msra.mxu0 %v57
  %180 = vmatprep.subr.mxu0 %v60
  %181 = vmatpush1.msra.mxu0 %v59
  %182 = vmatprep.subr.mxu0 %v62
  %183 = vmatpush1.msra.mxu0 %v61
  %184 = vmatprep.subr.mxu0 %v64
  %185 = vmatpush1.msra.mxu0 %v63
  %186 = vmatprep.subr.mxu0 %v66
  %187 = vmatpush1.msra.mxu0 %v65
  %188 = vmatprep.subr.mxu0 %v68
  %189 = vmatpush1.msra.mxu0 %v67
  %190 = vmatprep.subr.mxu0 %v70
  %191 = vmatpush1.msra.mxu0 %v69
  %192 = vmatprep.subr.mxu0 %v72
  %193 = vmatpush1.msra.mxu0 %v71
  %194 = vmatprep.subr.mxu0 %v74
  %195 = vmatpush1.msra.mxu0 %v73
  %196 = vmatprep.subr.mxu0 %v76
  %197 = vmatpush1.msra.mxu0 %v75
  %198 = vmatprep.subr.mxu0 %v78
  %199 = vmatpush1.msra.mxu0 %v77
  %200 = vmatprep.subr.mxu0 %v80
  %201 = vmatpush1.msra.mxu0 %v79
  %202 = vmatprep.subr.mxu0 %v82
  %203 = vmatpush1.msra.mxu0 %v81
  %204 = vmatprep.subr.mxu0 %v84
  %205 = vmatpush1.msra.mxu0 %v83
  %206 = vmatprep.subr.mxu0 %v86
  %207 = vmatpush1.msra.mxu0 %v85
  %208 = vmatprep.subr.mxu0 %v88
  %209 = vmatpush1.msra.mxu0 %v87
  %210 = vmatprep.subr.mxu0 %v90
  %211 = vmatpush1.msra.mxu0 %v89
  %212 = vmatprep.subr.mxu0 %v92
  %213 = vmatpush1.msra.mxu0 %v91
  %214 = vmatprep.mubr.f32.mxu0 %v102
  %215 = vmatmul.mubr.f32.gmra.mrb[0].mxu0 %v101
  %v216 = vpop.f32.mrb[0].mxu0
  %v217 = vadd.f32 %v120, %v216
  %v218 = vpop.f32.mrb[0].mxu0
  %v219 = vadd.f32 %v120, %v218
  %220 = vmatprep.mubr.f32.mxu0 %v105
  %221 = vmatmul.mubr.f32.gmra.mrb[0].mxu0 %v104
  %v222 = vpop.f32.mrb[0].mxu0
  %v223 = vadd.f32 %v125, %v222
  %v224 = vpop.f32.mrb[0].mxu0
  %v225 = vadd.f32 %v125, %v224
  %226 = vmatprep.mubr.f32.mxu0 %v108
  %227 = vmatmul.mubr.f32.gmra.mrb[0].mxu0 %v107
  %v228 = vpop.f32.mrb[0].mxu0
  %v229 = vadd.f32 %v130, %v228
  %v230 = vpop.f32.mrb[0].mxu0
  %v231 = vadd.f32 %v130, %v230
  %232 = vmatprep.mubr.f32.mxu0 %v111
  %233 = vmatmul.mubr.f32.gmra.mrb[0].mxu0 %v110
  %v234 = vpop.f32.mrb[0].mxu0
  %v235 = vadd.f32 %v135, %v234
  %v236 = vpop.f32.mrb[0].mxu0
  %v237 = vadd.f32 %v135, %v236
  %238 = vdwg.mxu0
  %239 = vmatprep.subr.mxu0 %v94
  %240 = vmatpush1.msra.mxu0 %v93
  %241 = vmatprep.subr.mxu0 %v96
  %242 = vmatpush1.msra.mxu0 %v95
  %243 = vmatprep.subr.mxu0 %v98
  %244 = vmatpush1.msra.mxu0 %v97
  %245 = vmatprep.subr.mxu0 %v100
  %246 = vmatpush1.msra.mxu0 %v99
  %247 = vmatprep.subr.mxu0 0.0
  %248 = vmatpush1.msra.mxu0 0.0
  %249 = vmatprep.subr.mxu0 0.0
  %250 = vmatpush1.msra.mxu0 0.0
  %251 = vmatprep.subr.mxu0 0.0
  %252 = vmatpush1.msra.mxu0 0.0
  %253 = vmatprep.subr.mxu0 0.0
  %254 = vmatpush1.msra.mxu0 0.0
  %255 = vmatprep.subr.mxu0 0.0
  %256 = vmatpush1.msra.mxu0 0.0
  %257 = vmatprep.subr.mxu0 0.0
  %258 = vmatpush1.msra.mxu0 0.0
  %259 = vmatprep.subr.mxu0 0.0
  %260 = vmatpush1.msra.mxu0 0.0
  %261 = vmatprep.subr.mxu0 0.0
  %262 = vmatpush1.msra.mxu0 0.0
  %263 = vmatprep.subr.mxu0 0.0
  %264 = vmatpush1.msra.mxu0 0.0
  %265 = vmatprep.subr.mxu0 0.0
  %266 = vmatpush1.msra.mxu0 0.0
  %267 = vmatprep.subr.mxu0 0.0
  %268 = vmatpush1.msra.mxu0 0.0
  %269 = vmatprep.subr.mxu0 0.0
  %270 = vmatpush1.msra.mxu0 0.0
  %271 = vmatprep.subr.mxu0 0.0
  %272 = vmatpush1.msra.mxu0 0.0
  %273 = vmatprep.subr.mxu0 0.0
  %274 = vmatpush1.msra.mxu0 0.0
  %275 = vmatprep.subr.mxu0 0.0
  %276 = vmatpush1.msra.mxu0 0.0
  %277 = vmatprep.subr.mxu0 0.0
  %278 = vmatpush1.msra.mxu0 0.0
  %279 = vmatprep.subr.mxu0 0.0
  %280 = vmatpush1.msra.mxu0 0.0
  %281 = vmatprep.subr.mxu0 0.0
  %282 = vmatpush1.msra.mxu0 0.0
  %283 = vmatprep.subr.mxu0 0.0
  %284 = vmatpush1.msra.mxu0 0.0
  %285 = vmatprep.subr.mxu0 0.0
  %286 = vmatpush1.msra.mxu0 0.0
  %287 = vmatprep.subr.mxu0 0.0
  %288 = vmatpush1.msra.mxu0 0.0
  %289 = vmatprep.subr.mxu0 0.0
  %290 = vmatpush1.msra.mxu0 0.0
  %291 = vmatprep.subr.mxu0 0.0
  %292 = vmatpush1.msra.mxu0 0.0
  %293 = vmatprep.subr.mxu0 0.0
  %294 = vmatpush1.msra.mxu0 0.0
  %295 = vmatprep.subr.mxu0 0.0
  %296 = vmatpush1.msra.mxu0 0.0
  %297 = vmatprep.subr.mxu0 0.0
  %298 = vmatpush1.msra.mxu0 0.0
  %299 = vmatprep.subr.mxu0 0.0
  %300 = vmatpush1.msra.mxu0 0.0
  %301 = vmatprep.subr.mxu0 0.0
  %302 = vmatpush1.msra.mxu0 0.0
  %303 = vmatprep.mubr.f32.mxu0 0.0
  %304 = vmatmul.mubr.f32.gmra.mrb[0].mxu0 %v139
  %v305 = vpop.f32.mrb[0].mxu0
  %v306 = vadd.f32 %v217, %v305
  %v307 = vpop.f32.mrb[0].mxu0
  %v308 = vadd.f32 %v219, %v307
  %309 = vmatprep.mubr.f32.mxu0 0.0
  %310 = vmatmul.mubr.f32.gmra.mrb[0].mxu0 %v142
  %v311 = vpop.f32.mrb[0].mxu0
  %v312 = vadd.f32 %v223, %v311
  %v313 = vpop.f32.mrb[0].mxu0
  %v314 = vadd.f32 %v225, %v313
  %315 = vmatprep.mubr.f32.mxu0 0.0
  %316 = vmatmul.mubr.f32.gmra.mrb[0].mxu0 %v145
  %v317 = vpop.f32.mrb[0].mxu0
  %v318 = vadd.f32 %v229, %v317
  %v319 = vpop.f32.mrb[0].mxu0
  %v320 = vadd.f32 %v231, %v319
  %321 = vmatprep.mubr.f32.mxu0 0.0
  %322 = vmatmul.mubr.f32.gmra.mrb[0].mxu0 %v148
  %v323 = vpop.f32.mrb[0].mxu0
  %v324 = vadd.f32 %v235, %v323
  %v325 = vpop.f32.mrb[0].mxu0
  %v326 = vadd.f32 %v237, %v325
  %327 = vdwg.mxu0
  %v328 = vld [vmem:[%s3] sm:$0xff]
  %v329 = vld [vmem:[%s3 + $0x8] sm:$0xff]
  %v330 = vld [vmem:[%s3 + $0x10] sm:$0xff]
  %v331 = vld [vmem:[%s3 + $0x18] sm:$0xff]
  %v332 = vld [vmem:[%s3 + $0x20] sm:$0xff]
  %v333 = vld [vmem:[%s3 + $0x28] sm:$0xff]
  %v334 = vld [vmem:[%s3 + $0x30] sm:$0xff]
  %v335 = vld [vmem:[%s3 + $0x38] sm:$0xff]
  %v336 = vld [vmem:[%s3 + $0x40] sm:$0xff]
  %v337 = vld [vmem:[%s3 + $0x48] sm:$0xff]
  %v338 = vld [vmem:[%s3 + $0x50] sm:$0xff]
  %v339 = vld [vmem:[%s3 + $0x58] sm:$0xff]
  %v340 = vld [vmem:[%s4] sm:$0xff]
  %v341 = vld [vmem:[%s4 + $0x8] sm:$0xff]
  %v342 = vld [vmem:[%s4 + $0x10] sm:$0xff]
  %v343 = vld [vmem:[%s4 + $0x18] sm:$0xff]
  %345 = vset.pattern.permute.xlu0 0
  %346 = vperm.xlu0 %345, %v340
  %v347 = vpop.permute.xlu0 %346
  %350 = vset.pattern.permute.xlu0 0
  %351 = vperm.xlu0 %350, %v341
  %v352 = vpop.permute.xlu0 %351
  %355 = vset.pattern.permute.xlu0 0
  %356 = vperm.xlu0 %355, %v342
  %v357 = vpop.permute.xlu0 %356
  %360 = vset.pattern.permute.xlu0 0
  %361 = vperm.xlu0 %360, %v343
  %v362 = vpop.permute.xlu0 %361
  %v365 = vsel %vm137, %v330, 0
  %v368 = vsel %vm137, %v333, 0
  %v371 = vsel %vm137, %v336, 0
  %v374 = vsel %vm137, %v339, 0
  %376 = vmatprep.subr.mxu0 %v30
  %377 = vmatpush1.msra.mxu0 %v29
  %378 = vmatprep.subr.mxu0 %v32
  %379 = vmatpush1.msra.mxu0 %v31
  %380 = vmatprep.subr.mxu0 %v34
  %381 = vmatpush1.msra.mxu0 %v33
  %382 = vmatprep.subr.mxu0 %v36
  %383 = vmatpush1.msra.mxu0 %v35
  %384 = vmatprep.subr.mxu0 %v38
  %385 = vmatpush1.msra.mxu0 %v37
  %386 = vmatprep.subr.mxu0 %v40
  %387 = vmatpush1.msra.mxu0 %v39
  %388 = vmatprep.subr.mxu0 %v42
  %389 = vmatpush1.msra.mxu0 %v41
  %390 = vmatprep.subr.mxu0 %v44
  %391 = vmatpush1.msra.mxu0 %v43
  %392 = vmatprep.subr.mxu0 %v46
  %393 = vmatpush1.msra.mxu0 %v45
  %394 = vmatprep.subr.mxu0 %v48
  %395 = vmatpush1.msra.mxu0 %v47
  %396 = vmatprep.subr.mxu0 %v50
  %397 = vmatpush1.msra.mxu0 %v49
  %398 = vmatprep.subr.mxu0 %v52
  %399 = vmatpush1.msra.mxu0 %v51
  %400 = vmatprep.subr.mxu0 %v54
  %401 = vmatpush1.msra.mxu0 %v53
  %402 = vmatprep.subr.mxu0 %v56
  %403 = vmatpush1.msra.mxu0 %v55
  %404 = vmatprep.subr.mxu0 %v58
  %405 = vmatpush1.msra.mxu0 %v57
  %406 = vmatprep.subr.mxu0 %v60
  %407 = vmatpush1.msra.mxu0 %v59
  %408 = vmatprep.subr.mxu0 %v62
  %409 = vmatpush1.msra.mxu0 %v61
  %410 = vmatprep.subr.mxu0 %v64
  %411 = vmatpush1.msra.mxu0 %v63
  %412 = vmatprep.subr.mxu0 %v66
  %413 = vmatpush1.msra.mxu0 %v65
  %414 = vmatprep.subr.mxu0 %v68
  %415 = vmatpush1.msra.mxu0 %v67
  %416 = vmatprep.subr.mxu0 %v70
  %417 = vmatpush1.msra.mxu0 %v69
  %418 = vmatprep.subr.mxu0 %v72
  %419 = vmatpush1.msra.mxu0 %v71
  %420 = vmatprep.subr.mxu0 %v74
  %421 = vmatpush1.msra.mxu0 %v73
  %422 = vmatprep.subr.mxu0 %v76
  %423 = vmatpush1.msra.mxu0 %v75
  %424 = vmatprep.subr.mxu0 %v78
  %425 = vmatpush1.msra.mxu0 %v77
  %426 = vmatprep.subr.mxu0 %v80
  %427 = vmatpush1.msra.mxu0 %v79
  %428 = vmatprep.subr.mxu0 %v82
  %429 = vmatpush1.msra.mxu0 %v81
  %430 = vmatprep.subr.mxu0 %v84
  %431 = vmatpush1.msra.mxu0 %v83
  %432 = vmatprep.subr.mxu0 %v86
  %433 = vmatpush1.msra.mxu0 %v85
  %434 = vmatprep.subr.mxu0 %v88
  %435 = vmatpush1.msra.mxu0 %v87
  %436 = vmatprep.subr.mxu0 %v90
  %437 = vmatpush1.msra.mxu0 %v89
  %438 = vmatprep.subr.mxu0 %v92
  %439 = vmatpush1.msra.mxu0 %v91
  %440 = vmatprep.mubr.f32.mxu0 %v329
  %441 = vmatmul.mubr.f32.gmra.mrb[0].mxu0 %v328
  %v442 = vpop.f32.mrb[0].mxu0
  %v443 = vadd.f32 %v347, %v442
  %v444 = vpop.f32.mrb[0].mxu0
  %v445 = vadd.f32 %v347, %v444
  %446 = vmatprep.mubr.f32.mxu0 %v332
  %447 = vmatmul.mubr.f32.gmra.mrb[0].mxu0 %v331
  %v448 = vpop.f32.mrb[0].mxu0
  %v449 = vadd.f32 %v352, %v448
  %v450 = vpop.f32.mrb[0].mxu0
  %v451 = vadd.f32 %v352, %v450
  %452 = vmatprep.mubr.f32.mxu0 %v335
  %453 = vmatmul.mubr.f32.gmra.mrb[0].mxu0 %v334
  %v454 = vpop.f32.mrb[0].mxu0
  %v455 = vadd.f32 %v357, %v454
  %v456 = vpop.f32.mrb[0].mxu0
  %v457 = vadd.f32 %v357, %v456
  %458 = vmatprep.mubr.f32.mxu0 %v338
  %459 = vmatmul.mubr.f32.gmra.mrb[0].mxu0 %v337
  %v460 = vpop.f32.mrb[0].mxu0
  %v461 = vadd.f32 %v362, %v460
  %v462 = vpop.f32.mrb[0].mxu0
  %v463 = vadd.f32 %v362, %v462
  %464 = vdwg.mxu0
  %465 = vmatprep.subr.mxu0 %v94
  %466 = vmatpush1.msra.mxu0 %v93
  %467 = vmatprep.subr.mxu0 %v96
  %468 = vmatpush1.msra.mxu0 %v95
  %469 = vmatprep.subr.mxu0 %v98
  %470 = vmatpush1.msra.mxu0 %v97
  %471 = vmatprep.subr.mxu0 %v100
  %472 = vmatpush1.msra.mxu0 %v99
  %473 = vmatprep.subr.mxu0 0.0
  %474 = vmatpush1.msra.mxu0 0.0
  %475 = vmatprep.subr.mxu0 0.0
  %476 = vmatpush1.msra.mxu0 0.0
  %477 = vmatprep.subr.mxu0 0.0
  %478 = vmatpush1.msra.mxu0 0.0
  %479 = vmatprep.subr.mxu0 0.0
  %480 = vmatpush1.msra.mxu0 0.0
  %481 = vmatprep.subr.mxu0 0.0
  %482 = vmatpush1.msra.mxu0 0.0
  %483 = vmatprep.subr.mxu0 0.0
  %484 = vmatpush1.msra.mxu0 0.0
  %485 = vmatprep.subr.mxu0 0.0
  %486 = vmatpush1.msra.mxu0 0.0
  %487 = vmatprep.subr.mxu0 0.0
  %488 = vmatpush1.msra.mxu0 0.0
  %489 = vmatprep.subr.mxu0 0.0
  %490 = vmatpush1.msra.mxu0 0.0
  %491 = vmatprep.subr.mxu0 0.0
  %492 = vmatpush1.msra.mxu0 0.0
  %493 = vmatprep.subr.mxu0 0.0
  %494 = vmatpush1.msra.mxu0 0.0
  %495 = vmatprep.subr.mxu0 0.0
  %496 = vmatpush1.msra.mxu0 0.0
  %497 = vmatprep.subr.mxu0 0.0
  %498 = vmatpush1.msra.mxu0 0.0
  %499 = vmatprep.subr.mxu0 0.0
  %500 = vmatpush1.msra.mxu0 0.0
  %501 = vmatprep.subr.mxu0 0.0
  %502 = vmatpush1.msra.mxu0 0.0
  %503 = vmatprep.subr.mxu0 0.0
  %504 = vmatpush1.msra.mxu0 0.0
  %505 = vmatprep.subr.mxu0 0.0
  %506 = vmatpush1.msra.mxu0 0.0
  %507 = vmatprep.subr.mxu0 0.0
  %508 = vmatpush1.msra.mxu0 0.0
  %509 = vmatprep.subr.mxu0 0.0
  %510 = vmatpush1.msra.mxu0 0.0
  %511 = vmatprep.subr.mxu0 0.0
  %512 = vmatpush1.msra.mxu0 0.0
  %513 = vmatprep.subr.mxu0 0.0
  %514 = vmatpush1.msra.mxu0 0.0
  %515 = vmatprep.subr.mxu0 0.0
  %516 = vmatpush1.msra.mxu0 0.0
  %517 = vmatprep.subr.mxu0 0.0
  %518 = vmatpush1.msra.mxu0 0.0
  %519 = vmatprep.subr.mxu0 0.0
  %520 = vmatpush1.msra.mxu0 0.0
  %521 = vmatprep.subr.mxu0 0.0
  %522 = vmatpush1.msra.mxu0 0.0
  %523 = vmatprep.subr.mxu0 0.0
  %524 = vmatpush1.msra.mxu0 0.0
  %525 = vmatprep.subr.mxu0 0.0
  %526 = vmatpush1.msra.mxu0 0.0
  %527 = vmatprep.subr.mxu0 0.0
  %528 = vmatpush1.msra.mxu0 0.0
  %529 = vmatprep.mubr.f32.mxu0 0.0
  %530 = vmatmul.mubr.f32.gmra.mrb[0].mxu0 %v365
  %v531 = vpop.f32.mrb[0].mxu0
  %v532 = vadd.f32 %v443, %v531
  %v533 = vpop.f32.mrb[0].mxu0
  %v534 = vadd.f32 %v445, %v533
  %535 = vmatprep.mubr.f32.mxu0 0.0
  %536 = vmatmul.mubr.f32.gmra.mrb[0].mxu0 %v368
  %v537 = vpop.f32.mrb[0].mxu0
  %v538 = vadd.f32 %v449, %v537
  %v539 = vpop.f32.mrb[0].mxu0
  %v540 = vadd.f32 %v451, %v539
  %541 = vmatprep.mubr.f32.mxu0 0.0
  %542 = vmatmul.mubr.f32.gmra.mrb[0].mxu0 %v371
  %v543 = vpop.f32.mrb[0].mxu0
  %v544 = vadd.f32 %v455, %v543
  %v545 = vpop.f32.mrb[0].mxu0
  %v546 = vadd.f32 %v457, %v545
  %547 = vmatprep.mubr.f32.mxu0 0.0
  %548 = vmatmul.mubr.f32.gmra.mrb[0].mxu0 %v374
  %v549 = vpop.f32.mrb[0].mxu0
  %v550 = vadd.f32 %v461, %v549
  %v551 = vpop.f32.mrb[0].mxu0
  %v552 = vadd.f32 %v463, %v551
  %553 = vdwg.mxu0
  %v554 = vmax.f32 %v306, 0.0
  %v555 = vmax.f32 %v308, 0.0
  %v556 = vmax.f32 %v312, 0.0
  %v557 = vmax.f32 %v314, 0.0
  %v558 = vmax.f32 %v318, 0.0
  %v559 = vmax.f32 %v320, 0.0
  %v560 = vmax.f32 %v324, 0.0
  %v561 = vmax.f32 %v326, 0.0
  %v562 = vmax.f32 %v532, 0.0
  %v563 = vmax.f32 %v534, 0.0
  %v564 = vmax.f32 %v538, 0.0
  %v565 = vmax.f32 %v540, 0.0
  %v566 = vmax.f32 %v544, 0.0
  %v567 = vmax.f32 %v546, 0.0
  %v568 = vmax.f32 %v550, 0.0
  %v569 = vmax.f32 %v552, 0.0
  %v570 = vadd.f32 %v554, %v562
  %v571 = vadd.f32 %v555, %v563
  %v572 = vadd.f32 %v556, %v564
  %v573 = vadd.f32 %v557, %v565
  %v574 = vadd.f32 %v558, %v566
  %v575 = vadd.f32 %v559, %v567
  %v576 = vadd.f32 %v560, %v568
  %v577 = vadd.f32 %v561, %v569
  %v578 = vadd.f32 %v570, %v571
  %579 = vadd.xlane.f32.xlu0 %v578
  %v580 = vpop.xlane.xlu0 %579
  %v581 = vadd.f32 %v572, %v573
  %582 = vadd.xlane.f32.xlu0 %v581
  %v583 = vpop.xlane.xlu0 %582
  %v584 = vadd.f32 %v574, %v575
  %585 = vadd.xlane.f32.xlu0 %v584
  %v586 = vpop.xlane.xlu0 %585
  %v587 = vadd.f32 %v576, %v577
  %588 = vadd.xlane.f32.xlu0 %v587
  %v589 = vpop.xlane.xlu0 %588
  %v590 = vrcp.pop 256.0
  %v591 = vmul.f32 %v580, %v590
  %v592 = vmul.f32 %v583, %v590
  %v593 = vmul.f32 %v586, %v590
  %v594 = vmul.f32 %v589, %v590
  %v595 = vld [vmem:[%s5] sm:$0xff]
  %v596 = vld [vmem:[%s5 + $0x8] sm:$0xff]
  %v597 = vld [vmem:[%s5 + $0x10] sm:$0xff]
  %v598 = vld [vmem:[%s5 + $0x18] sm:$0xff]
  %v599 = vmul.f32 %v595, %v591
  %v600 = vmul.f32 %v596, %v592
  %v601 = vmul.f32 %v597, %v593
  %v602 = vmul.f32 %v598, %v594
  %vm603 = vcmask 15360
  %v604 = vsel %vm603, %v599, 0.0
  %v605 = vsel %vm603, %v600, 0.0
  %v606 = vadd.f32 %v604, %v605
  %v607 = vsel %vm603, %v601, 0.0
  %v608 = vadd.f32 %v606, %v607
  %v609 = vsel %vm603, %v602, 0.0
  %v610 = vadd.f32 %v608, %v609
  %v611 = vrot.slane %v610, 4
  %v612 = vadd.f32 %v610, %v611
  %v613 = vrot.slane %v612, 2
  %v614 = vadd.f32 %v612, %v613
  %v615 = vrot.slane %v614, 1
  %v616 = vadd.f32 %v614, %v615
  %v617 = vmax.f32 %v616, 0.0
  %v618 = vld [vmem:[%s6] sm:$0xff]
  %v619 = vld [vmem:[%s6 + $0x8] sm:$0xff]
  %v620 = vld [vmem:[%s6 + $0x10] sm:$0xff]
  %v621 = vld [vmem:[%s6 + $0x18] sm:$0xff]
  %v622 = vmul.f32 %v618, %v617
  %v623 = vmul.f32 %v619, %v617
  %v624 = vmul.f32 %v620, %v617
  %v625 = vmul.f32 %v621, %v617
  %v626 = vsel %vm603, %v622, 0.0
  %627 = vadd.xlane.f32.xlu0 %v626
  %v628 = vpop.xlane.xlu0 %627
  %v629 = vsel %vm603, %v623, 0.0
  %630 = vadd.xlane.f32.xlu0 %v629
  %v631 = vpop.xlane.xlu0 %630
  %v632 = vsel %vm603, %v624, 0.0
  %633 = vadd.xlane.f32.xlu0 %v632
  %v634 = vpop.xlane.xlu0 %633
  %v635 = vsel %vm603, %v625, 0.0
  %636 = vadd.xlane.f32.xlu0 %v635
  %v637 = vpop.xlane.xlu0 %636
  %v638 = vxor.u32 %v628, 2147483648
  %v639 = vxor.u32 %v631, 2147483648
  %v640 = vxor.u32 %v634, 2147483648
  %v641 = vxor.u32 %v637, 2147483648
  %v642 = vmul.f32 %v638, 1.442695
  %v643 = vpow.pop %v642
  %v644 = vmul.f32 %v639, 1.442695
  %v645 = vpow.pop %v644
  %v646 = vmul.f32 %v640, 1.442695
  %v647 = vpow.pop %v646
  %v648 = vmul.f32 %v641, 1.442695
  %v649 = vpow.pop %v648
  %v650 = vadd.f32 %v643, 1.0
  %v651 = vadd.f32 %v645, 1.0
  %v652 = vadd.f32 %v647, 1.0
  %v653 = vadd.f32 %v649, 1.0
  %v654 = vrcp.pop %v650
  %v655 = vmul.f32 1.0, %v654
  %v656 = vrcp.pop %v651
  %v657 = vmul.f32 1.0, %v656
  %v658 = vrcp.pop %v652
  %v659 = vmul.f32 1.0, %v658
  %v660 = vrcp.pop %v653
  %v661 = vmul.f32 1.0, %v660
  %v662 = vld [vmem:[%s7] sm:$0xff]
  %v663 = vld [vmem:[%s7 + $0x8] sm:$0xff]
  %v664 = vld [vmem:[%s7 + $0x10] sm:$0xff]
  %v665 = vld [vmem:[%s7 + $0x18] sm:$0xff]
  %v666 = vld [vmem:[%s7 + $0x20] sm:$0xff]
  %v667 = vld [vmem:[%s7 + $0x28] sm:$0xff]
  %v668 = vld [vmem:[%s7 + $0x30] sm:$0xff]
  %v669 = vld [vmem:[%s7 + $0x38] sm:$0xff]
  %v670 = vmul.f32 %v570, %v655
  %v671 = vmul.f32 %v571, %v655
  %v672 = vmul.f32 %v572, %v657
  %v673 = vmul.f32 %v573, %v657
  %v674 = vmul.f32 %v574, %v659
  %v675 = vmul.f32 %v575, %v659
  %v676 = vmul.f32 %v576, %v661
  %v677 = vmul.f32 %v577, %v661
  %v678 = vadd.f32 %v662, %v670
  %v679 = vadd.f32 %v663, %v671
  %v680 = vadd.f32 %v664, %v672
  %v681 = vadd.f32 %v665, %v673
  %v682 = vadd.f32 %v666, %v674
  %v683 = vadd.f32 %v667, %v675
  %v684 = vadd.f32 %v668, %v676
  %v685 = vadd.f32 %v669, %v677
  %686 = vst [vmem:[%s8] sm:$0xff] %v678
  %687 = vst [vmem:[%s8 + $0x8] sm:$0xff] %v679
  %688 = vst [vmem:[%s8 + $0x10] sm:$0xff] %v680
  %689 = vst [vmem:[%s8 + $0x18] sm:$0xff] %v681
  %690 = vst [vmem:[%s8 + $0x20] sm:$0xff] %v682
  %691 = vst [vmem:[%s8 + $0x28] sm:$0xff] %v683
  %692 = vst [vmem:[%s8 + $0x30] sm:$0xff] %v684
  %693 = vst [vmem:[%s8 + $0x38] sm:$0xff] %v685
  %s694 = scalar_lea.vmem %s0, 576
  %v695 = vld [vmem:[%s694] sm:$0xff]
  %v696 = vld [vmem:[%s694 + $0x8] sm:$0xff]
  %v697 = vld [vmem:[%s694 + $0x10] sm:$0xff]
  %v698 = vld [vmem:[%s694 + $0x18] sm:$0xff]
  %v699 = vld [vmem:[%s694 + $0x20] sm:$0xff]
  %v700 = vld [vmem:[%s694 + $0x28] sm:$0xff]
  %v701 = vld [vmem:[%s694 + $0x30] sm:$0xff]
  %v702 = vld [vmem:[%s694 + $0x38] sm:$0xff]
  %v703 = vld [vmem:[%s694 + $0x40] sm:$0xff]
  %v704 = vld [vmem:[%s694 + $0x48] sm:$0xff]
  %v705 = vld [vmem:[%s694 + $0x50] sm:$0xff]
  %v706 = vld [vmem:[%s694 + $0x58] sm:$0xff]
  %v707 = vld [vmem:[%s694 + $0x60] sm:$0xff]
  %v708 = vld [vmem:[%s694 + $0x68] sm:$0xff]
  %v709 = vld [vmem:[%s694 + $0x70] sm:$0xff]
  %v710 = vld [vmem:[%s694 + $0x78] sm:$0xff]
  %v711 = vld [vmem:[%s694 + $0x80] sm:$0xff]
  %v712 = vld [vmem:[%s694 + $0x88] sm:$0xff]
  %v713 = vld [vmem:[%s694 + $0x90] sm:$0xff]
  %v714 = vld [vmem:[%s694 + $0x98] sm:$0xff]
  %v715 = vld [vmem:[%s694 + $0xa0] sm:$0xff]
  %v716 = vld [vmem:[%s694 + $0xa8] sm:$0xff]
  %v717 = vld [vmem:[%s694 + $0xb0] sm:$0xff]
  %v718 = vld [vmem:[%s694 + $0xb8] sm:$0xff]
  %v719 = vld [vmem:[%s694 + $0xc0] sm:$0xff]
  %v720 = vld [vmem:[%s694 + $0xc8] sm:$0xff]
  %v721 = vld [vmem:[%s694 + $0xd0] sm:$0xff]
  %v722 = vld [vmem:[%s694 + $0xd8] sm:$0xff]
  %v723 = vld [vmem:[%s694 + $0xe0] sm:$0xff]
  %v724 = vld [vmem:[%s694 + $0xe8] sm:$0xff]
  %v725 = vld [vmem:[%s694 + $0xf0] sm:$0xff]
  %v726 = vld [vmem:[%s694 + $0xf8] sm:$0xff]
  %v727 = vld [vmem:[%s694 + $0x100] sm:$0xff]
  %v728 = vld [vmem:[%s694 + $0x108] sm:$0xff]
  %v729 = vld [vmem:[%s694 + $0x110] sm:$0xff]
  %v730 = vld [vmem:[%s694 + $0x118] sm:$0xff]
  %v731 = vld [vmem:[%s694 + $0x120] sm:$0xff]
  %v732 = vld [vmem:[%s694 + $0x128] sm:$0xff]
  %v733 = vld [vmem:[%s694 + $0x130] sm:$0xff]
  %v734 = vld [vmem:[%s694 + $0x138] sm:$0xff]
  %v735 = vld [vmem:[%s694 + $0x140] sm:$0xff]
  %v736 = vld [vmem:[%s694 + $0x148] sm:$0xff]
  %v737 = vld [vmem:[%s694 + $0x150] sm:$0xff]
  %v738 = vld [vmem:[%s694 + $0x158] sm:$0xff]
  %v739 = vld [vmem:[%s694 + $0x160] sm:$0xff]
  %v740 = vld [vmem:[%s694 + $0x168] sm:$0xff]
  %v741 = vld [vmem:[%s694 + $0x170] sm:$0xff]
  %v742 = vld [vmem:[%s694 + $0x178] sm:$0xff]
  %v743 = vld [vmem:[%s694 + $0x180] sm:$0xff]
  %v744 = vld [vmem:[%s694 + $0x188] sm:$0xff]
  %v745 = vld [vmem:[%s694 + $0x190] sm:$0xff]
  %v746 = vld [vmem:[%s694 + $0x198] sm:$0xff]
  %v747 = vld [vmem:[%s694 + $0x1a0] sm:$0xff]
  %v748 = vld [vmem:[%s694 + $0x1a8] sm:$0xff]
  %v749 = vld [vmem:[%s694 + $0x1b0] sm:$0xff]
  %v750 = vld [vmem:[%s694 + $0x1b8] sm:$0xff]
  %v751 = vld [vmem:[%s694 + $0x1c0] sm:$0xff]
  %v752 = vld [vmem:[%s694 + $0x1c8] sm:$0xff]
  %v753 = vld [vmem:[%s694 + $0x1d0] sm:$0xff]
  %v754 = vld [vmem:[%s694 + $0x1d8] sm:$0xff]
  %v755 = vld [vmem:[%s694 + $0x1e0] sm:$0xff]
  %v756 = vld [vmem:[%s694 + $0x1e8] sm:$0xff]
  %v757 = vld [vmem:[%s694 + $0x1f0] sm:$0xff]
  %v758 = vld [vmem:[%s694 + $0x1f8] sm:$0xff]
  %v759 = vld [vmem:[%s694 + $0x200] sm:$0xff]
  %v760 = vld [vmem:[%s694 + $0x208] sm:$0xff]
  %v761 = vld [vmem:[%s694 + $0x210] sm:$0xff]
  %v762 = vld [vmem:[%s694 + $0x218] sm:$0xff]
  %v763 = vld [vmem:[%s694 + $0x220] sm:$0xff]
  %v764 = vld [vmem:[%s694 + $0x228] sm:$0xff]
  %v765 = vld [vmem:[%s694 + $0x230] sm:$0xff]
  %v766 = vld [vmem:[%s694 + $0x238] sm:$0xff]
  %v767 = vld [vmem:[%s1] sm:$0xff]
  %v768 = vld [vmem:[%s1 + $0x8] sm:$0xff]
  %v769 = vld [vmem:[%s1 + $0x10] sm:$0xff]
  %v770 = vld [vmem:[%s1 + $0x18] sm:$0xff]
  %v771 = vld [vmem:[%s1 + $0x20] sm:$0xff]
  %v772 = vld [vmem:[%s1 + $0x28] sm:$0xff]
  %v773 = vld [vmem:[%s1 + $0x30] sm:$0xff]
  %v774 = vld [vmem:[%s1 + $0x38] sm:$0xff]
  %v775 = vld [vmem:[%s1 + $0x40] sm:$0xff]
  %v776 = vld [vmem:[%s1 + $0x48] sm:$0xff]
  %v777 = vld [vmem:[%s1 + $0x50] sm:$0xff]
  %v778 = vld [vmem:[%s1 + $0x58] sm:$0xff]
  %v779 = vld [vmem:[%s2] sm:$0xff]
  %v780 = vld [vmem:[%s2 + $0x8] sm:$0xff]
  %v781 = vld [vmem:[%s2 + $0x10] sm:$0xff]
  %v782 = vld [vmem:[%s2 + $0x18] sm:$0xff]
  %784 = vset.pattern.permute.xlu0 0
  %785 = vperm.xlu0 %784, %v779
  %v786 = vpop.permute.xlu0 %785
  %789 = vset.pattern.permute.xlu0 0
  %790 = vperm.xlu0 %789, %v780
  %v791 = vpop.permute.xlu0 %790
  %794 = vset.pattern.permute.xlu0 0
  %795 = vperm.xlu0 %794, %v781
  %v796 = vpop.permute.xlu0 %795
  %799 = vset.pattern.permute.xlu0 0
  %800 = vperm.xlu0 %799, %v782
  %v801 = vpop.permute.xlu0 %800
  %v804 = vsel %vm137, %v769, 0
  %v807 = vsel %vm137, %v772, 0
  %v810 = vsel %vm137, %v775, 0
  %v813 = vsel %vm137, %v778, 0
  %815 = vmatprep.subr.mxu0 %v696
  %816 = vmatpush1.msra.mxu0 %v695
  %817 = vmatprep.subr.mxu0 %v698
  %818 = vmatpush1.msra.mxu0 %v697
  %819 = vmatprep.subr.mxu0 %v700
  %820 = vmatpush1.msra.mxu0 %v699
  %821 = vmatprep.subr.mxu0 %v702
  %822 = vmatpush1.msra.mxu0 %v701
  %823 = vmatprep.subr.mxu0 %v704
  %824 = vmatpush1.msra.mxu0 %v703
  %825 = vmatprep.subr.mxu0 %v706
  %826 = vmatpush1.msra.mxu0 %v705
  %827 = vmatprep.subr.mxu0 %v708
  %828 = vmatpush1.msra.mxu0 %v707
  %829 = vmatprep.subr.mxu0 %v710
  %830 = vmatpush1.msra.mxu0 %v709
  %831 = vmatprep.subr.mxu0 %v712
  %832 = vmatpush1.msra.mxu0 %v711
  %833 = vmatprep.subr.mxu0 %v714
  %834 = vmatpush1.msra.mxu0 %v713
  %835 = vmatprep.subr.mxu0 %v716
  %836 = vmatpush1.msra.mxu0 %v715
  %837 = vmatprep.subr.mxu0 %v718
  %838 = vmatpush1.msra.mxu0 %v717
  %839 = vmatprep.subr.mxu0 %v720
  %840 = vmatpush1.msra.mxu0 %v719
  %841 = vmatprep.subr.mxu0 %v722
  %842 = vmatpush1.msra.mxu0 %v721
  %843 = vmatprep.subr.mxu0 %v724
  %844 = vmatpush1.msra.mxu0 %v723
  %845 = vmatprep.subr.mxu0 %v726
  %846 = vmatpush1.msra.mxu0 %v725
  %847 = vmatprep.subr.mxu0 %v728
  %848 = vmatpush1.msra.mxu0 %v727
  %849 = vmatprep.subr.mxu0 %v730
  %850 = vmatpush1.msra.mxu0 %v729
  %851 = vmatprep.subr.mxu0 %v732
  %852 = vmatpush1.msra.mxu0 %v731
  %853 = vmatprep.subr.mxu0 %v734
  %854 = vmatpush1.msra.mxu0 %v733
  %855 = vmatprep.subr.mxu0 %v736
  %856 = vmatpush1.msra.mxu0 %v735
  %857 = vmatprep.subr.mxu0 %v738
  %858 = vmatpush1.msra.mxu0 %v737
  %859 = vmatprep.subr.mxu0 %v740
  %860 = vmatpush1.msra.mxu0 %v739
  %861 = vmatprep.subr.mxu0 %v742
  %862 = vmatpush1.msra.mxu0 %v741
  %863 = vmatprep.subr.mxu0 %v744
  %864 = vmatpush1.msra.mxu0 %v743
  %865 = vmatprep.subr.mxu0 %v746
  %866 = vmatpush1.msra.mxu0 %v745
  %867 = vmatprep.subr.mxu0 %v748
  %868 = vmatpush1.msra.mxu0 %v747
  %869 = vmatprep.subr.mxu0 %v750
  %870 = vmatpush1.msra.mxu0 %v749
  %871 = vmatprep.subr.mxu0 %v752
  %872 = vmatpush1.msra.mxu0 %v751
  %873 = vmatprep.subr.mxu0 %v754
  %874 = vmatpush1.msra.mxu0 %v753
  %875 = vmatprep.subr.mxu0 %v756
  %876 = vmatpush1.msra.mxu0 %v755
  %877 = vmatprep.subr.mxu0 %v758
  %878 = vmatpush1.msra.mxu0 %v757
  %879 = vmatprep.mubr.f32.mxu0 %v768
  %880 = vmatmul.mubr.f32.gmra.mrb[0].mxu0 %v767
  %v881 = vpop.f32.mrb[0].mxu0
  %v882 = vadd.f32 %v786, %v881
  %v883 = vpop.f32.mrb[0].mxu0
  %v884 = vadd.f32 %v786, %v883
  %885 = vmatprep.mubr.f32.mxu0 %v771
  %886 = vmatmul.mubr.f32.gmra.mrb[0].mxu0 %v770
  %v887 = vpop.f32.mrb[0].mxu0
  %v888 = vadd.f32 %v791, %v887
  %v889 = vpop.f32.mrb[0].mxu0
  %v890 = vadd.f32 %v791, %v889
  %891 = vmatprep.mubr.f32.mxu0 %v774
  %892 = vmatmul.mubr.f32.gmra.mrb[0].mxu0 %v773
  %v893 = vpop.f32.mrb[0].mxu0
  %v894 = vadd.f32 %v796, %v893
  %v895 = vpop.f32.mrb[0].mxu0
  %v896 = vadd.f32 %v796, %v895
  %897 = vmatprep.mubr.f32.mxu0 %v777
  %898 = vmatmul.mubr.f32.gmra.mrb[0].mxu0 %v776
  %v899 = vpop.f32.mrb[0].mxu0
  %v900 = vadd.f32 %v801, %v899
  %v901 = vpop.f32.mrb[0].mxu0
  %v902 = vadd.f32 %v801, %v901
  %903 = vdwg.mxu0
  %904 = vmatprep.subr.mxu0 %v760
  %905 = vmatpush1.msra.mxu0 %v759
  %906 = vmatprep.subr.mxu0 %v762
  %907 = vmatpush1.msra.mxu0 %v761
  %908 = vmatprep.subr.mxu0 %v764
  %909 = vmatpush1.msra.mxu0 %v763
  %910 = vmatprep.subr.mxu0 %v766
  %911 = vmatpush1.msra.mxu0 %v765
  %912 = vmatprep.subr.mxu0 0.0
  %913 = vmatpush1.msra.mxu0 0.0
  %914 = vmatprep.subr.mxu0 0.0
  %915 = vmatpush1.msra.mxu0 0.0
  %916 = vmatprep.subr.mxu0 0.0
  %917 = vmatpush1.msra.mxu0 0.0
  %918 = vmatprep.subr.mxu0 0.0
  %919 = vmatpush1.msra.mxu0 0.0
  %920 = vmatprep.subr.mxu0 0.0
  %921 = vmatpush1.msra.mxu0 0.0
  %922 = vmatprep.subr.mxu0 0.0
  %923 = vmatpush1.msra.mxu0 0.0
  %924 = vmatprep.subr.mxu0 0.0
  %925 = vmatpush1.msra.mxu0 0.0
  %926 = vmatprep.subr.mxu0 0.0
  %927 = vmatpush1.msra.mxu0 0.0
  %928 = vmatprep.subr.mxu0 0.0
  %929 = vmatpush1.msra.mxu0 0.0
  %930 = vmatprep.subr.mxu0 0.0
  %931 = vmatpush1.msra.mxu0 0.0
  %932 = vmatprep.subr.mxu0 0.0
  %933 = vmatpush1.msra.mxu0 0.0
  %934 = vmatprep.subr.mxu0 0.0
  %935 = vmatpush1.msra.mxu0 0.0
  %936 = vmatprep.subr.mxu0 0.0
  %937 = vmatpush1.msra.mxu0 0.0
  %938 = vmatprep.subr.mxu0 0.0
  %939 = vmatpush1.msra.mxu0 0.0
  %940 = vmatprep.subr.mxu0 0.0
  %941 = vmatpush1.msra.mxu0 0.0
  %942 = vmatprep.subr.mxu0 0.0
  %943 = vmatpush1.msra.mxu0 0.0
  %944 = vmatprep.subr.mxu0 0.0
  %945 = vmatpush1.msra.mxu0 0.0
  %946 = vmatprep.subr.mxu0 0.0
  %947 = vmatpush1.msra.mxu0 0.0
  %948 = vmatprep.subr.mxu0 0.0
  %949 = vmatpush1.msra.mxu0 0.0
  %950 = vmatprep.subr.mxu0 0.0
  %951 = vmatpush1.msra.mxu0 0.0
  %952 = vmatprep.subr.mxu0 0.0
  %953 = vmatpush1.msra.mxu0 0.0
  %954 = vmatprep.subr.mxu0 0.0
  %955 = vmatpush1.msra.mxu0 0.0
  %956 = vmatprep.subr.mxu0 0.0
  %957 = vmatpush1.msra.mxu0 0.0
  %958 = vmatprep.subr.mxu0 0.0
  %959 = vmatpush1.msra.mxu0 0.0
  %960 = vmatprep.subr.mxu0 0.0
  %961 = vmatpush1.msra.mxu0 0.0
  %962 = vmatprep.subr.mxu0 0.0
  %963 = vmatpush1.msra.mxu0 0.0
  %964 = vmatprep.subr.mxu0 0.0
  %965 = vmatpush1.msra.mxu0 0.0
  %966 = vmatprep.subr.mxu0 0.0
  %967 = vmatpush1.msra.mxu0 0.0
  %968 = vmatprep.mubr.f32.mxu0 0.0
  %969 = vmatmul.mubr.f32.gmra.mrb[0].mxu0 %v804
  %v970 = vpop.f32.mrb[0].mxu0
  %v971 = vadd.f32 %v882, %v970
  %v972 = vpop.f32.mrb[0].mxu0
  %v973 = vadd.f32 %v884, %v972
  %974 = vmatprep.mubr.f32.mxu0 0.0
  %975 = vmatmul.mubr.f32.gmra.mrb[0].mxu0 %v807
  %v976 = vpop.f32.mrb[0].mxu0
  %v977 = vadd.f32 %v888, %v976
  %v978 = vpop.f32.mrb[0].mxu0
  %v979 = vadd.f32 %v890, %v978
  %980 = vmatprep.mubr.f32.mxu0 0.0
  %981 = vmatmul.mubr.f32.gmra.mrb[0].mxu0 %v810
  %v982 = vpop.f32.mrb[0].mxu0
  %v983 = vadd.f32 %v894, %v982
  %v984 = vpop.f32.mrb[0].mxu0
  %v985 = vadd.f32 %v896, %v984
  %986 = vmatprep.mubr.f32.mxu0 0.0
  %987 = vmatmul.mubr.f32.gmra.mrb[0].mxu0 %v813
  %v988 = vpop.f32.mrb[0].mxu0
  %v989 = vadd.f32 %v900, %v988
  %v990 = vpop.f32.mrb[0].mxu0
  %v991 = vadd.f32 %v902, %v990
  %992 = vdwg.mxu0
  %v993 = vld [vmem:[%s3] sm:$0xff]
  %v994 = vld [vmem:[%s3 + $0x8] sm:$0xff]
  %v995 = vld [vmem:[%s3 + $0x10] sm:$0xff]
  %v996 = vld [vmem:[%s3 + $0x18] sm:$0xff]
  %v997 = vld [vmem:[%s3 + $0x20] sm:$0xff]
  %v998 = vld [vmem:[%s3 + $0x28] sm:$0xff]
  %v999 = vld [vmem:[%s3 + $0x30] sm:$0xff]
  %v1000 = vld [vmem:[%s3 + $0x38] sm:$0xff]
  %v1001 = vld [vmem:[%s3 + $0x40] sm:$0xff]
  %v1002 = vld [vmem:[%s3 + $0x48] sm:$0xff]
  %v1003 = vld [vmem:[%s3 + $0x50] sm:$0xff]
  %v1004 = vld [vmem:[%s3 + $0x58] sm:$0xff]
  %v1005 = vld [vmem:[%s4] sm:$0xff]
  %v1006 = vld [vmem:[%s4 + $0x8] sm:$0xff]
  %v1007 = vld [vmem:[%s4 + $0x10] sm:$0xff]
  %v1008 = vld [vmem:[%s4 + $0x18] sm:$0xff]
  %1010 = vset.pattern.permute.xlu0 0
  %1011 = vperm.xlu0 %1010, %v1005
  %v1012 = vpop.permute.xlu0 %1011
  %1015 = vset.pattern.permute.xlu0 0
  %1016 = vperm.xlu0 %1015, %v1006
  %v1017 = vpop.permute.xlu0 %1016
  %1020 = vset.pattern.permute.xlu0 0
  %1021 = vperm.xlu0 %1020, %v1007
  %v1022 = vpop.permute.xlu0 %1021
  %1025 = vset.pattern.permute.xlu0 0
  %1026 = vperm.xlu0 %1025, %v1008
  %v1027 = vpop.permute.xlu0 %1026
  %v1030 = vsel %vm137, %v995, 0
  %v1033 = vsel %vm137, %v998, 0
  %v1036 = vsel %vm137, %v1001, 0
  %v1039 = vsel %vm137, %v1004, 0
  %1041 = vmatprep.subr.mxu0 %v696
  %1042 = vmatpush1.msra.mxu0 %v695
  %1043 = vmatprep.subr.mxu0 %v698
  %1044 = vmatpush1.msra.mxu0 %v697
  %1045 = vmatprep.subr.mxu0 %v700
  %1046 = vmatpush1.msra.mxu0 %v699
  %1047 = vmatprep.subr.mxu0 %v702
  %1048 = vmatpush1.msra.mxu0 %v701
  %1049 = vmatprep.subr.mxu0 %v704
  %1050 = vmatpush1.msra.mxu0 %v703
  %1051 = vmatprep.subr.mxu0 %v706
  %1052 = vmatpush1.msra.mxu0 %v705
  %1053 = vmatprep.subr.mxu0 %v708
  %1054 = vmatpush1.msra.mxu0 %v707
  %1055 = vmatprep.subr.mxu0 %v710
  %1056 = vmatpush1.msra.mxu0 %v709
  %1057 = vmatprep.subr.mxu0 %v712
  %1058 = vmatpush1.msra.mxu0 %v711
  %1059 = vmatprep.subr.mxu0 %v714
  %1060 = vmatpush1.msra.mxu0 %v713
  %1061 = vmatprep.subr.mxu0 %v716
  %1062 = vmatpush1.msra.mxu0 %v715
  %1063 = vmatprep.subr.mxu0 %v718
  %1064 = vmatpush1.msra.mxu0 %v717
  %1065 = vmatprep.subr.mxu0 %v720
  %1066 = vmatpush1.msra.mxu0 %v719
  %1067 = vmatprep.subr.mxu0 %v722
  %1068 = vmatpush1.msra.mxu0 %v721
  %1069 = vmatprep.subr.mxu0 %v724
  %1070 = vmatpush1.msra.mxu0 %v723
  %1071 = vmatprep.subr.mxu0 %v726
  %1072 = vmatpush1.msra.mxu0 %v725
  %1073 = vmatprep.subr.mxu0 %v728
  %1074 = vmatpush1.msra.mxu0 %v727
  %1075 = vmatprep.subr.mxu0 %v730
  %1076 = vmatpush1.msra.mxu0 %v729
  %1077 = vmatprep.subr.mxu0 %v732
  %1078 = vmatpush1.msra.mxu0 %v731
  %1079 = vmatprep.subr.mxu0 %v734
  %1080 = vmatpush1.msra.mxu0 %v733
  %1081 = vmatprep.subr.mxu0 %v736
  %1082 = vmatpush1.msra.mxu0 %v735
  %1083 = vmatprep.subr.mxu0 %v738
  %1084 = vmatpush1.msra.mxu0 %v737
  %1085 = vmatprep.subr.mxu0 %v740
  %1086 = vmatpush1.msra.mxu0 %v739
  %1087 = vmatprep.subr.mxu0 %v742
  %1088 = vmatpush1.msra.mxu0 %v741
  %1089 = vmatprep.subr.mxu0 %v744
  %1090 = vmatpush1.msra.mxu0 %v743
  %1091 = vmatprep.subr.mxu0 %v746
  %1092 = vmatpush1.msra.mxu0 %v745
  %1093 = vmatprep.subr.mxu0 %v748
  %1094 = vmatpush1.msra.mxu0 %v747
  %1095 = vmatprep.subr.mxu0 %v750
  %1096 = vmatpush1.msra.mxu0 %v749
  %1097 = vmatprep.subr.mxu0 %v752
  %1098 = vmatpush1.msra.mxu0 %v751
  %1099 = vmatprep.subr.mxu0 %v754
  %1100 = vmatpush1.msra.mxu0 %v753
  %1101 = vmatprep.subr.mxu0 %v756
  %1102 = vmatpush1.msra.mxu0 %v755
  %1103 = vmatprep.subr.mxu0 %v758
  %1104 = vmatpush1.msra.mxu0 %v757
  %1105 = vmatprep.mubr.f32.mxu0 %v994
  %1106 = vmatmul.mubr.f32.gmra.mrb[0].mxu0 %v993
  %v1107 = vpop.f32.mrb[0].mxu0
  %v1108 = vadd.f32 %v1012, %v1107
  %v1109 = vpop.f32.mrb[0].mxu0
  %v1110 = vadd.f32 %v1012, %v1109
  %1111 = vmatprep.mubr.f32.mxu0 %v997
  %1112 = vmatmul.mubr.f32.gmra.mrb[0].mxu0 %v996
  %v1113 = vpop.f32.mrb[0].mxu0
  %v1114 = vadd.f32 %v1017, %v1113
  %v1115 = vpop.f32.mrb[0].mxu0
  %v1116 = vadd.f32 %v1017, %v1115
  %1117 = vmatprep.mubr.f32.mxu0 %v1000
  %1118 = vmatmul.mubr.f32.gmra.mrb[0].mxu0 %v999
  %v1119 = vpop.f32.mrb[0].mxu0
  %v1120 = vadd.f32 %v1022, %v1119
  %v1121 = vpop.f32.mrb[0].mxu0
  %v1122 = vadd.f32 %v1022, %v1121
  %1123 = vmatprep.mubr.f32.mxu0 %v1003
  %1124 = vmatmul.mubr.f32.gmra.mrb[0].mxu0 %v1002
  %v1125 = vpop.f32.mrb[0].mxu0
  %v1126 = vadd.f32 %v1027, %v1125
  %v1127 = vpop.f32.mrb[0].mxu0
  %v1128 = vadd.f32 %v1027, %v1127
  %1129 = vdwg.mxu0
  %1130 = vmatprep.subr.mxu0 %v760
  %1131 = vmatpush1.msra.mxu0 %v759
  %1132 = vmatprep.subr.mxu0 %v762
  %1133 = vmatpush1.msra.mxu0 %v761
  %1134 = vmatprep.subr.mxu0 %v764
  %1135 = vmatpush1.msra.mxu0 %v763
  %1136 = vmatprep.subr.mxu0 %v766
  %1137 = vmatpush1.msra.mxu0 %v765
  %1138 = vmatprep.subr.mxu0 0.0
  %1139 = vmatpush1.msra.mxu0 0.0
  %1140 = vmatprep.subr.mxu0 0.0
  %1141 = vmatpush1.msra.mxu0 0.0
  %1142 = vmatprep.subr.mxu0 0.0
  %1143 = vmatpush1.msra.mxu0 0.0
  %1144 = vmatprep.subr.mxu0 0.0
  %1145 = vmatpush1.msra.mxu0 0.0
  %1146 = vmatprep.subr.mxu0 0.0
  %1147 = vmatpush1.msra.mxu0 0.0
  %1148 = vmatprep.subr.mxu0 0.0
  %1149 = vmatpush1.msra.mxu0 0.0
  %1150 = vmatprep.subr.mxu0 0.0
  %1151 = vmatpush1.msra.mxu0 0.0
  %1152 = vmatprep.subr.mxu0 0.0
  %1153 = vmatpush1.msra.mxu0 0.0
  %1154 = vmatprep.subr.mxu0 0.0
  %1155 = vmatpush1.msra.mxu0 0.0
  %1156 = vmatprep.subr.mxu0 0.0
  %1157 = vmatpush1.msra.mxu0 0.0
  %1158 = vmatprep.subr.mxu0 0.0
  %1159 = vmatpush1.msra.mxu0 0.0
  %1160 = vmatprep.subr.mxu0 0.0
  %1161 = vmatpush1.msra.mxu0 0.0
  %1162 = vmatprep.subr.mxu0 0.0
  %1163 = vmatpush1.msra.mxu0 0.0
  %1164 = vmatprep.subr.mxu0 0.0
  %1165 = vmatpush1.msra.mxu0 0.0
  %1166 = vmatprep.subr.mxu0 0.0
  %1167 = vmatpush1.msra.mxu0 0.0
  %1168 = vmatprep.subr.mxu0 0.0
  %1169 = vmatpush1.msra.mxu0 0.0
  %1170 = vmatprep.subr.mxu0 0.0
  %1171 = vmatpush1.msra.mxu0 0.0
  %1172 = vmatprep.subr.mxu0 0.0
  %1173 = vmatpush1.msra.mxu0 0.0
  %1174 = vmatprep.subr.mxu0 0.0
  %1175 = vmatpush1.msra.mxu0 0.0
  %1176 = vmatprep.subr.mxu0 0.0
  %1177 = vmatpush1.msra.mxu0 0.0
  %1178 = vmatprep.subr.mxu0 0.0
  %1179 = vmatpush1.msra.mxu0 0.0
  %1180 = vmatprep.subr.mxu0 0.0
  %1181 = vmatpush1.msra.mxu0 0.0
  %1182 = vmatprep.subr.mxu0 0.0
  %1183 = vmatpush1.msra.mxu0 0.0
  %1184 = vmatprep.subr.mxu0 0.0
  %1185 = vmatpush1.msra.mxu0 0.0
  %1186 = vmatprep.subr.mxu0 0.0
  %1187 = vmatpush1.msra.mxu0 0.0
  %1188 = vmatprep.subr.mxu0 0.0
  %1189 = vmatpush1.msra.mxu0 0.0
  %1190 = vmatprep.subr.mxu0 0.0
  %1191 = vmatpush1.msra.mxu0 0.0
  %1192 = vmatprep.subr.mxu0 0.0
  %1193 = vmatpush1.msra.mxu0 0.0
  %1194 = vmatprep.mubr.f32.mxu0 0.0
  %1195 = vmatmul.mubr.f32.gmra.mrb[0].mxu0 %v1030
  %v1196 = vpop.f32.mrb[0].mxu0
  %v1197 = vadd.f32 %v1108, %v1196
  %v1198 = vpop.f32.mrb[0].mxu0
  %v1199 = vadd.f32 %v1110, %v1198
  %1200 = vmatprep.mubr.f32.mxu0 0.0
  %1201 = vmatmul.mubr.f32.gmra.mrb[0].mxu0 %v1033
  %v1202 = vpop.f32.mrb[0].mxu0
  %v1203 = vadd.f32 %v1114, %v1202
  %v1204 = vpop.f32.mrb[0].mxu0
  %v1205 = vadd.f32 %v1116, %v1204
  %1206 = vmatprep.mubr.f32.mxu0 0.0
  %1207 = vmatmul.mubr.f32.gmra.mrb[0].mxu0 %v1036
  %v1208 = vpop.f32.mrb[0].mxu0
  %v1209 = vadd.f32 %v1120, %v1208
  %v1210 = vpop.f32.mrb[0].mxu0
  %v1211 = vadd.f32 %v1122, %v1210
  %1212 = vmatprep.mubr.f32.mxu0 0.0
  %1213 = vmatmul.mubr.f32.gmra.mrb[0].mxu0 %v1039
  %v1214 = vpop.f32.mrb[0].mxu0
  %v1215 = vadd.f32 %v1126, %v1214
  %v1216 = vpop.f32.mrb[0].mxu0
  %v1217 = vadd.f32 %v1128, %v1216
  %1218 = vdwg.mxu0
  %v1219 = vmax.f32 %v971, 0.0
  %v1220 = vmax.f32 %v973, 0.0
  %v1221 = vmax.f32 %v977, 0.0
  %v1222 = vmax.f32 %v979, 0.0
  %v1223 = vmax.f32 %v983, 0.0
  %v1224 = vmax.f32 %v985, 0.0
  %v1225 = vmax.f32 %v989, 0.0
  %v1226 = vmax.f32 %v991, 0.0
  %v1227 = vmax.f32 %v1197, 0.0
  %v1228 = vmax.f32 %v1199, 0.0
  %v1229 = vmax.f32 %v1203, 0.0
  %v1230 = vmax.f32 %v1205, 0.0
  %v1231 = vmax.f32 %v1209, 0.0
  %v1232 = vmax.f32 %v1211, 0.0
  %v1233 = vmax.f32 %v1215, 0.0
  %v1234 = vmax.f32 %v1217, 0.0
  %v1235 = vadd.f32 %v1219, %v1227
  %v1236 = vadd.f32 %v1220, %v1228
  %v1237 = vadd.f32 %v1221, %v1229
  %v1238 = vadd.f32 %v1222, %v1230
  %v1239 = vadd.f32 %v1223, %v1231
  %v1240 = vadd.f32 %v1224, %v1232
  %v1241 = vadd.f32 %v1225, %v1233
  %v1242 = vadd.f32 %v1226, %v1234
  %v1243 = vadd.f32 %v1235, %v1236
  %1244 = vadd.xlane.f32.xlu0 %v1243
  %v1245 = vpop.xlane.xlu0 %1244
  %v1246 = vadd.f32 %v1237, %v1238
  %1247 = vadd.xlane.f32.xlu0 %v1246
  %v1248 = vpop.xlane.xlu0 %1247
  %v1249 = vadd.f32 %v1239, %v1240
  %1250 = vadd.xlane.f32.xlu0 %v1249
  %v1251 = vpop.xlane.xlu0 %1250
  %v1252 = vadd.f32 %v1241, %v1242
  %1253 = vadd.xlane.f32.xlu0 %v1252
  %v1254 = vpop.xlane.xlu0 %1253
  %v1255 = vmul.f32 %v1245, %v590
  %v1256 = vmul.f32 %v1248, %v590
  %v1257 = vmul.f32 %v1251, %v590
  %v1258 = vmul.f32 %v1254, %v590
  %v1259 = vld [vmem:[%s5] sm:$0xff]
  %v1260 = vld [vmem:[%s5 + $0x8] sm:$0xff]
  %v1261 = vld [vmem:[%s5 + $0x10] sm:$0xff]
  %v1262 = vld [vmem:[%s5 + $0x18] sm:$0xff]
  %v1263 = vmul.f32 %v1259, %v1255
  %v1264 = vmul.f32 %v1260, %v1256
  %v1265 = vmul.f32 %v1261, %v1257
  %v1266 = vmul.f32 %v1262, %v1258
  %v1267 = vsel %vm603, %v1263, 0.0
  %v1268 = vsel %vm603, %v1264, 0.0
  %v1269 = vadd.f32 %v1267, %v1268
  %v1270 = vsel %vm603, %v1265, 0.0
  %v1271 = vadd.f32 %v1269, %v1270
  %v1272 = vsel %vm603, %v1266, 0.0
  %v1273 = vadd.f32 %v1271, %v1272
  %v1274 = vrot.slane %v1273, 4
  %v1275 = vadd.f32 %v1273, %v1274
  %v1276 = vrot.slane %v1275, 2
  %v1277 = vadd.f32 %v1275, %v1276
  %v1278 = vrot.slane %v1277, 1
  %v1279 = vadd.f32 %v1277, %v1278
  %v1280 = vmax.f32 %v1279, 0.0
  %v1281 = vld [vmem:[%s6] sm:$0xff]
  %v1282 = vld [vmem:[%s6 + $0x8] sm:$0xff]
  %v1283 = vld [vmem:[%s6 + $0x10] sm:$0xff]
  %v1284 = vld [vmem:[%s6 + $0x18] sm:$0xff]
  %v1285 = vmul.f32 %v1281, %v1280
  %v1286 = vmul.f32 %v1282, %v1280
  %v1287 = vmul.f32 %v1283, %v1280
  %v1288 = vmul.f32 %v1284, %v1280
  %v1289 = vsel %vm603, %v1285, 0.0
  %1290 = vadd.xlane.f32.xlu0 %v1289
  %v1291 = vpop.xlane.xlu0 %1290
  %v1292 = vsel %vm603, %v1286, 0.0
  %1293 = vadd.xlane.f32.xlu0 %v1292
  %v1294 = vpop.xlane.xlu0 %1293
  %v1295 = vsel %vm603, %v1287, 0.0
  %1296 = vadd.xlane.f32.xlu0 %v1295
  %v1297 = vpop.xlane.xlu0 %1296
  %v1298 = vsel %vm603, %v1288, 0.0
  %1299 = vadd.xlane.f32.xlu0 %v1298
  %v1300 = vpop.xlane.xlu0 %1299
  %v1301 = vxor.u32 %v1291, 2147483648
  %v1302 = vxor.u32 %v1294, 2147483648
  %v1303 = vxor.u32 %v1297, 2147483648
  %v1304 = vxor.u32 %v1300, 2147483648
  %v1305 = vmul.f32 %v1301, 1.442695
  %v1306 = vpow.pop %v1305
  %v1307 = vmul.f32 %v1302, 1.442695
  %v1308 = vpow.pop %v1307
  %v1309 = vmul.f32 %v1303, 1.442695
  %v1310 = vpow.pop %v1309
  %v1311 = vmul.f32 %v1304, 1.442695
  %v1312 = vpow.pop %v1311
  %v1313 = vadd.f32 %v1306, 1.0
  %v1314 = vadd.f32 %v1308, 1.0
  %v1315 = vadd.f32 %v1310, 1.0
  %v1316 = vadd.f32 %v1312, 1.0
  %v1317 = vrcp.pop %v1313
  %v1318 = vmul.f32 1.0, %v1317
  %v1319 = vrcp.pop %v1314
  %v1320 = vmul.f32 1.0, %v1319
  %v1321 = vrcp.pop %v1315
  %v1322 = vmul.f32 1.0, %v1321
  %v1323 = vrcp.pop %v1316
  %v1324 = vmul.f32 1.0, %v1323
  %s1325 = scalar_lea.vmem %s7, 64
  %v1326 = vld [vmem:[%s1325] sm:$0xff]
  %v1327 = vld [vmem:[%s1325 + $0x8] sm:$0xff]
  %v1328 = vld [vmem:[%s1325 + $0x10] sm:$0xff]
  %v1329 = vld [vmem:[%s1325 + $0x18] sm:$0xff]
  %v1330 = vld [vmem:[%s1325 + $0x20] sm:$0xff]
  %v1331 = vld [vmem:[%s1325 + $0x28] sm:$0xff]
  %v1332 = vld [vmem:[%s1325 + $0x30] sm:$0xff]
  %v1333 = vld [vmem:[%s1325 + $0x38] sm:$0xff]
  %v1334 = vmul.f32 %v1235, %v1318
  %v1335 = vmul.f32 %v1236, %v1318
  %v1336 = vmul.f32 %v1237, %v1320
  %v1337 = vmul.f32 %v1238, %v1320
  %v1338 = vmul.f32 %v1239, %v1322
  %v1339 = vmul.f32 %v1240, %v1322
  %v1340 = vmul.f32 %v1241, %v1324
  %v1341 = vmul.f32 %v1242, %v1324
  %v1342 = vadd.f32 %v1326, %v1334
  %v1343 = vadd.f32 %v1327, %v1335
  %v1344 = vadd.f32 %v1328, %v1336
  %v1345 = vadd.f32 %v1329, %v1337
  %v1346 = vadd.f32 %v1330, %v1338
  %v1347 = vadd.f32 %v1331, %v1339
  %v1348 = vadd.f32 %v1332, %v1340
  %v1349 = vadd.f32 %v1333, %v1341
  %s1350 = scalar_lea.vmem %s8, 64
  %1351 = vst [vmem:[%s1350] sm:$0xff] %v1342
  %1352 = vst [vmem:[%s1350 + $0x8] sm:$0xff] %v1343
  %1353 = vst [vmem:[%s1350 + $0x10] sm:$0xff] %v1344
  %1354 = vst [vmem:[%s1350 + $0x18] sm:$0xff] %v1345
  %1355 = vst [vmem:[%s1350 + $0x20] sm:$0xff] %v1346
  %1356 = vst [vmem:[%s1350 + $0x28] sm:$0xff] %v1347
  %1357 = vst [vmem:[%s1350 + $0x30] sm:$0xff] %v1348
  %1358 = vst [vmem:[%s1350 + $0x38] sm:$0xff] %v1349
  // Predicated region
  $region34: #{dual_path_attention_block.5} parent=0 // pred_check
    _
  $region35: #{dual_path_attention_block.5} parent=0 // pred_check_branch
    %1360 = sbr.rel (0) target = $region37
  $region36: #{dual_path_attention_block.5} parent=0 // pred_region
    _
  $region37: #{dual_path_attention_block.5} parent=0 // pred_fallthru
    _
  // Predicated region
  $region38: #{dual_path_attention_block.5} parent=0 // pred_check
    _
  $region39: #{dual_path_attention_block.5} parent=0 // pred_check_branch
    %1362 = sbr.rel (0) target = $region41
  $region40: #{dual_path_attention_block.5} parent=0 // pred_region
    _
  $region41: #{dual_path_attention_block.5} parent=0 // pred_fallthru
    _

</llo_original>
